<compile_context>
chip_gen: v7x
topology: tpu7x:2x2x1
jax: 0.10.0
libtpu: 0.0.40
codegen_flags: <defaults>
</compile_context>

<pallas_src>
import functools

import jax
import jax.numpy as jnp
from jax import lax
from jax.experimental import pallas as pl
from jax.experimental.pallas import tpu as pltpu


# ----------------------------------------------------------------------------
# Static geometry.  All activations live on a common 16-wide spatial grid
# (the input width), flattened row-major to (rows, channels) slabs.
# ----------------------------------------------------------------------------
WG = 16                      # common grid width (input spatial width)
C1, C2, C4 = 16, 32, 16      # output channels of conv1, conv2+3, conv4
M1 = 15 * WG                 # conv1 rows on the 16-wide grid (h1 in [0,15))
M2 = 14 * WG                 # conv2/3 rows (h2 in [0,14))
M4 = 12 * WG                 # conv4 rows (h4 in [0,12))
K1, K23, K4 = 2 * 2 * 1, 2 * 2 * 16, 3 * 3 * 32   # im2col contraction dims
PAD = 8                      # scratch sublane padding so tap slices stay in-bounds

# Tap offsets (kh*WG + kw) in (kh, kw) lexicographic order.
OFFS_K2 = (0, 1, WG, WG + 1)
OFFS_K3 = (0, 1, 2, WG, WG + 1, WG + 2, 2 * WG, 2 * WG + 1, 2 * WG + 2)


# ----------------------------------------------------------------------------
# Fused kernel: one grid step processes a block of `nb` images.
# ----------------------------------------------------------------------------
def _fused_kernel(nb, xp_ref, w1_ref, b1_ref, w23_ref, b23_ref, w4_ref, b4_ref,
                  o_ref, y1_ref, y2_ref):
    # Zero the scratch padding rows once; they are only read by "wrap" patch
    # rows whose outputs are garbage columns (discarded in the wrapper).
    y1_ref[M1:M1 + PAD, :] = jnp.zeros((PAD, C1), jnp.float32)
    y2_ref[M2:M2 + PAD, :] = jnp.zeros((PAD, C2), jnp.float32)

    w1 = w1_ref[...]     # (4, 16)
    b1 = b1_ref[...]     # (1, 16)
    w23 = w23_ref[...]   # (64, 32)
    b23 = b23_ref[...]   # (1, 32)
    w4 = w4_ref[...]     # (288, 16)
    b4 = b4_ref[...]     # (1, 16)

    for b in range(nb):  # unrolled over the images of this batch block
        # ---- conv1 (1 -> 16, k=2) + ReLU; patch prebuilt by wrapper --------
        y1 = jnp.dot(xp_ref[b], w1, preferred_element_type=jnp.float32) + b1
        y1_ref[0:M1, :] = jnp.maximum(y1, 0.0)                      # (240, 16)

        # ---- conv2 + conv3 folded (16 -> 32, k=2) + ReLU --------------------
        p2 = jnp.concatenate([y1_ref[o:o + M2, :] for o in OFFS_K2], axis=1)
        y2 = jnp.dot(p2, w23, preferred_element_type=jnp.float32) + b23
        y2_ref[0:M2, :] = jnp.maximum(y2, 0.0)                      # (224, 32)

        # ---- conv4 (32 -> 16, k=3) ------------------------------------------
        p4 = jnp.concatenate([y2_ref[o:o + M4, :] for o in OFFS_K3], axis=1)
        o_ref[b] = jnp.dot(p4, w4, preferred_element_type=jnp.float32) + b4


# ----------------------------------------------------------------------------
# Deterministic parameter construction (mirrors create_conv + per-channel +=i)
# ----------------------------------------------------------------------------
def _make_conv_params(cout, cin, k, weight_init, bias_init):
    w = jnp.full((cout, cin, k, k), float(weight_init), dtype=jnp.float32)
    w = w + jnp.eye(k, dtype=jnp.float32)[None, None, :, :]            # fill_conv_weight eye add
    w = w + jnp.arange(cout, dtype=jnp.float32)[:, None, None, None]   # weight.data[i] += i
    b = jnp.full((cout,), float(bias_init), dtype=jnp.float32)
    return w, b


def make_params():
    w1, b1 = _make_conv_params(16, 1, 2, 1, -2)
    w2, b2 = _make_conv_params(32, 16, 2, 2, -2)
    w3, b3 = _make_conv_params(32, 16, 2, 2, -2)
    w4, b4 = _make_conv_params(16, 32, 3, 10, 0)
    return dict(w1=w1, b1=b1, w2=w2, b2=b2, w3=w3, b3=b3, w4=w4, b4=b4)


# ----------------------------------------------------------------------------
# One-time weight packing (hoisted out of forward/jit): compact im2col weights.
#   rows ordered (kh, kw, cin) to match the kernel's patch lane order.
# ----------------------------------------------------------------------------
def _im2col_weight(w_oihw):
    cout = w_oihw.shape[0]
    return jnp.transpose(w_oihw, (2, 3, 1, 0)).reshape(-1, cout)


def pack_for_kernel(params):
    # Exact fold: conv2(x) + conv3(x) == x conv (W2 + W3) + (b2 + b3).
    w23 = params["w2"] + params["w3"]
    b23 = params["b2"] + params["b3"]
    return dict(
        w1=_im2col_weight(params["w1"]), b1=params["b1"][None, :],
        w23=_im2col_weight(w23),         b23=b23[None, :],
        w4=_im2col_weight(params["w4"]), b4=params["b4"][None, :],
    )


# ----------------------------------------------------------------------------
# Forward pass (NCHW in, NCHW out, like the PyTorch module)
# ----------------------------------------------------------------------------
def forward(packed, x_nchw, block_batch=8):
    n = x_nchw.shape[0]
    nb = min(block_batch, n)
    npad = pl.cdiv(n, nb) * nb

    # Wrapper-side im2col for conv1 only (Cin == 1, 4 shifted reads of the
    # flattened 16x16 image on the common 16-wide grid): (npad, 240, 4).
    xf = x_nchw[:, 0, :, :].reshape(n, WG * WG).astype(jnp.float32)
    xf = jnp.pad(xf, ((0, npad - n), (0, PAD)))
    xp = jnp.stack([xf[:, o:o + M1] for o in OFFS_K2], axis=-1)

    flops = 2 * npad * (M1 * K1 * C1 + M2 * K23 * C2 + M4 * K4 * C4)
    bytes_accessed = 4 * (npad * (M1 * K1 + M4 * C4)
                          + K1 * C1 + K23 * C2 + K4 * C4 + C1 + C2 + C4)

    out = pl.pallas_call(
        functools.partial(_fused_kernel, nb),
        out_shape=jax.ShapeDtypeStruct((npad, M4, C4), jnp.float32),
        grid=(npad // nb,),
        in_specs=[
            pl.BlockSpec((nb, M1, K1), lambda i: (i, 0, 0)),   # conv1 patches
            pl.BlockSpec((K1, C1), lambda i: (0, 0)),          # w1   (4, 16)
            pl.BlockSpec((1, C1), lambda i: (0, 0)),           # b1
            pl.BlockSpec((K23, C2), lambda i: (0, 0)),         # w2+w3 (64, 32)
            pl.BlockSpec((1, C2), lambda i: (0, 0)),           # b2+b3
            pl.BlockSpec((K4, C4), lambda i: (0, 0)),          # w4  (288, 16)
            pl.BlockSpec((1, C4), lambda i: (0, 0)),           # b4
        ],
        out_specs=pl.BlockSpec((nb, M4, C4), lambda i: (i, 0, 0)),
        scratch_shapes=[
            pltpu.VMEM((M1 + PAD, C1), jnp.float32),   # y1 slab (per image, reused)
            pltpu.VMEM((M2 + PAD, C2), jnp.float32),   # y2 slab
        ],
        compiler_params=pltpu.CompilerParams(
            dimension_semantics=("parallel",),         # shard blocks over v7x's 2 TCs
            vmem_limit_bytes=32 * 1024 * 1024,
        ),
        cost_estimate=pl.CostEstimate(flops=flops, transcendentals=0,
                                      bytes_accessed=bytes_accessed),
    )(xp, packed["w1"], packed["b1"], packed["w23"], packed["b23"],
      packed["w4"], packed["b4"])

    # (npad, 192, 16) on the 16-wide grid -> drop wrap columns -> NCHW.
    y = out[:n].reshape(n, 12, WG, C4)[:, :, :12, :]   # (n, 12, 12, 16)
    return jnp.transpose(y, (0, 3, 1, 2))              # (n, 16, 12, 12)


# ----------------------------------------------------------------------------
# Pure-JAX reference (lax.conv) for correctness check
# ----------------------------------------------------------------------------
def _ref_conv(x, w, b):
    y = lax.conv_general_dilated(
        x, w, window_strides=(1, 1), padding="VALID",
        dimension_numbers=("NCHW", "OIHW", "NCHW"))
    return y + b[None, :, None, None]


def forward_ref(params, x):
    y = jnp.maximum(_ref_conv(x, params["w1"], params["b1"]), 0.0)
    y = jnp.maximum(_ref_conv(y, params["w2"], params["b2"])
                    + _ref_conv(y, params["w3"], params["b3"]), 0.0)
    return _ref_conv(y, params["w4"], params["b4"])


if __name__ == "__main__":
    key = jax.random.PRNGKey(0)
    x = jax.random.normal(key, (2, 1, 16, 16), dtype=jnp.float32)

    params = make_params()
    packed = pack_for_kernel(params)   # hoisted: computed once, outside jit

    out = jax.jit(forward)(packed, x)
    out = jax.block_until_ready(out)
    assert out.shape == (2, 16, 12, 12), out.shape

    ref = forward_ref(params, x)
    scale = jnp.max(jnp.abs(ref))
    err = jnp.max(jnp.abs(out - ref))
    assert err <= 1e-5 * scale + 1e-2, (float(err), float(scale))

    print("KERNEL_OK")
</pallas_src>

<mosaic_0001>
module attributes {stable_mosaic.version = 11 : i64} {
  func.func @_fused_kernel(%arg0: i32, %arg1: memref<2x240x4xf32, #tpu.memory_space<vmem>>, %arg2: memref<4x16xf32, #tpu.memory_space<vmem>>, %arg3: memref<1x16xf32, #tpu.memory_space<vmem>>, %arg4: memref<64x32xf32, #tpu.memory_space<vmem>>, %arg5: memref<1x32xf32, #tpu.memory_space<vmem>>, %arg6: memref<288x16xf32, #tpu.memory_space<vmem>>, %arg7: memref<1x16xf32, #tpu.memory_space<vmem>>, %arg8: memref<2x192x16xf32, #tpu.memory_space<vmem>>, %arg9: memref<248x16xf32, #tpu.memory_space<vmem>>, %arg10: memref<232x32xf32, #tpu.memory_space<vmem>>) attributes {dimension_semantics = [#tpu.dimension_semantics<parallel>], iteration_bounds = array<i64: 1>, scalar_prefetch = 0 : i64, scratch_operands = 2 : i64, tpu.core_type = #tpu.core_type<tc>, window_params = [{transform_indices = @transform_0, window_bounds = array<i64: 2, 240, 4>}, {pipeline_mode = #tpu.pipeline_mode<synchronous>, transform_indices = @transform_1, window_bounds = array<i64: 4, 16>}, {pipeline_mode = #tpu.pipeline_mode<synchronous>, transform_indices = @transform_2, window_bounds = array<i64: 1, 16>}, {pipeline_mode = #tpu.pipeline_mode<synchronous>, transform_indices = @transform_3, window_bounds = array<i64: 64, 32>}, {pipeline_mode = #tpu.pipeline_mode<synchronous>, transform_indices = @transform_4, window_bounds = array<i64: 1, 32>}, {pipeline_mode = #tpu.pipeline_mode<synchronous>, transform_indices = @transform_5, window_bounds = array<i64: 288, 16>}, {pipeline_mode = #tpu.pipeline_mode<synchronous>, transform_indices = @transform_6, window_bounds = array<i64: 1, 16>}, {transform_indices = @transform_7, window_bounds = array<i64: 2, 192, 16>}]} {
    %cst = arith.constant 0.000000e+00 : f32
    %0 = vector.broadcast %cst : f32 to vector<8x16xf32>
    %c240 = arith.constant 240 : index
    %c0 = arith.constant 0 : index
    %1 = vector.load %arg9[%c240, %c0] : memref<248x16xf32, #tpu.memory_space<vmem>>, vector<8x16xf32>
    tpu.vector_store %arg9[%c240, %c0], %0 {strides = array<i32>} : memref<248x16xf32, #tpu.memory_space<vmem>>, vector<8x16xf32>,
    %cst_0 = arith.constant 0.000000e+00 : f32
    %2 = vector.broadcast %cst_0 : f32 to vector<8x32xf32>
    %c224 = arith.constant 224 : index
    %c0_1 = arith.constant 0 : index
    %3 = vector.load %arg10[%c224, %c0_1] : memref<232x32xf32, #tpu.memory_space<vmem>>, vector<8x32xf32>
    tpu.vector_store %arg10[%c224, %c0_1], %2 {strides = array<i32>} : memref<232x32xf32, #tpu.memory_space<vmem>>, vector<8x32xf32>,
    %c0_2 = arith.constant 0 : index
    %c0_3 = arith.constant 0 : index
    %4 = vector.load %arg2[%c0_2, %c0_3] : memref<4x16xf32, #tpu.memory_space<vmem>>, vector<4x16xf32>
    %c0_4 = arith.constant 0 : index
    %c0_5 = arith.constant 0 : index
    %5 = vector.load %arg3[%c0_4, %c0_5] : memref<1x16xf32, #tpu.memory_space<vmem>>, vector<1x16xf32>
    %c0_6 = arith.constant 0 : index
    %c0_7 = arith.constant 0 : index
    %6 = vector.load %arg4[%c0_6, %c0_7] : memref<64x32xf32, #tpu.memory_space<vmem>>, vector<64x32xf32>
    %c0_8 = arith.constant 0 : index
    %c0_9 = arith.constant 0 : index
    %7 = vector.load %arg5[%c0_8, %c0_9] : memref<1x32xf32, #tpu.memory_space<vmem>>, vector<1x32xf32>
    %c0_10 = arith.constant 0 : index
    %c0_11 = arith.constant 0 : index
    %8 = vector.load %arg6[%c0_10, %c0_11] : memref<288x16xf32, #tpu.memory_space<vmem>>, vector<288x16xf32>
    %c0_12 = arith.constant 0 : index
    %c0_13 = arith.constant 0 : index
    %9 = vector.load %arg7[%c0_12, %c0_13] : memref<1x16xf32, #tpu.memory_space<vmem>>, vector<1x16xf32>
    %c0_14 = arith.constant 0 : index
    %c0_15 = arith.constant 0 : index
    %c0_16 = arith.constant 0 : index
    %10 = vector.load %arg1[%c0_14, %c0_15, %c0_16] : memref<2x240x4xf32, #tpu.memory_space<vmem>>, vector<1x240x4xf32>
    %11 = vector.shape_cast %10 : vector<1x240x4xf32> to vector<240x4xf32>
    %cst_17 = arith.constant dense<0.000000e+00> : vector<240x16xf32>
    %12 = tpu.matmul %11, %4, %cst_17 {dimension_numbers = #tpu.dot_dimension_numbers<[1], [0], [0], [1], [0, 0, 1, 1], [], []>} : vector<240x4xf32>, vector<4x16xf32>, vector<240x16xf32> -> vector<240x16xf32>
    %13 = vector.broadcast %5 : vector<1x16xf32> to vector<240x16xf32>
    %14 = arith.addf %12, %13 : vector<240x16xf32>
    %cst_18 = arith.constant 0.000000e+00 : f32
    %15 = vector.broadcast %cst_18 : f32 to vector<240x16xf32>
    %16 = arith.maximumf %14, %15 : vector<240x16xf32>
    %c0_19 = arith.constant 0 : index
    %c0_20 = arith.constant 0 : index
    %17 = vector.load %arg9[%c0_19, %c0_20] : memref<248x16xf32, #tpu.memory_space<vmem>>, vector<240x16xf32>
    tpu.vector_store %arg9[%c0_19, %c0_20], %16 {strides = array<i32>} : memref<248x16xf32, #tpu.memory_space<vmem>>, vector<240x16xf32>,
    %c0_21 = arith.constant 0 : index
    %c0_22 = arith.constant 0 : index
    %18 = vector.load %arg9[%c0_21, %c0_22] : memref<248x16xf32, #tpu.memory_space<vmem>>, vector<224x16xf32>
    %c1 = arith.constant 1 : index
    %c0_23 = arith.constant 0 : index
    %19 = vector.load %arg9[%c1, %c0_23] : memref<248x16xf32, #tpu.memory_space<vmem>>, vector<224x16xf32>
    %c16 = arith.constant 16 : index
    %c0_24 = arith.constant 0 : index
    %20 = vector.load %arg9[%c16, %c0_24] : memref<248x16xf32, #tpu.memory_space<vmem>>, vector<224x16xf32>
    %c17 = arith.constant 17 : index
    %c0_25 = arith.constant 0 : index
    %21 = vector.load %arg9[%c17, %c0_25] : memref<248x16xf32, #tpu.memory_space<vmem>>, vector<224x16xf32>
    %22 = tpu.concatenate %18, %19, %20, %21 in 1 : vector<224x16xf32>, vector<224x16xf32>, vector<224x16xf32>, vector<224x16xf32> -> vector<224x64xf32>
    %cst_26 = arith.constant dense<0.000000e+00> : vector<224x32xf32>
    %23 = tpu.matmul %22, %6, %cst_26 {dimension_numbers = #tpu.dot_dimension_numbers<[1], [0], [0], [1], [0, 0, 1, 1], [], []>} : vector<224x64xf32>, vector<64x32xf32>, vector<224x32xf32> -> vector<224x32xf32>
    %24 = vector.broadcast %7 : vector<1x32xf32> to vector<224x32xf32>
    %25 = arith.addf %23, %24 : vector<224x32xf32>
    %cst_27 = arith.constant 0.000000e+00 : f32
    %26 = vector.broadcast %cst_27 : f32 to vector<224x32xf32>
    %27 = arith.maximumf %25, %26 : vector<224x32xf32>
    %c0_28 = arith.constant 0 : index
    %c0_29 = arith.constant 0 : index
    %28 = vector.load %arg10[%c0_28, %c0_29] : memref<232x32xf32, #tpu.memory_space<vmem>>, vector<224x32xf32>
    tpu.vector_store %arg10[%c0_28, %c0_29], %27 {strides = array<i32>} : memref<232x32xf32, #tpu.memory_space<vmem>>, vector<224x32xf32>,
    %c0_30 = arith.constant 0 : index
    %c0_31 = arith.constant 0 : index
    %29 = vector.load %arg10[%c0_30, %c0_31] : memref<232x32xf32, #tpu.memory_space<vmem>>, vector<192x32xf32>
    %c1_32 = arith.constant 1 : index
    %c0_33 = arith.constant 0 : index
    %30 = vector.load %arg10[%c1_32, %c0_33] : memref<232x32xf32, #tpu.memory_space<vmem>>, vector<192x32xf32>
    %c2 = arith.constant 2 : index
    %c0_34 = arith.constant 0 : index
    %31 = vector.load %arg10[%c2, %c0_34] : memref<232x32xf32, #tpu.memory_space<vmem>>, vector<192x32xf32>
    %c16_35 = arith.constant 16 : index
    %c0_36 = arith.constant 0 : index
    %32 = vector.load %arg10[%c16_35, %c0_36] : memref<232x32xf32, #tpu.memory_space<vmem>>, vector<192x32xf32>
    %c17_37 = arith.constant 17 : index
    %c0_38 = arith.constant 0 : index
    %33 = vector.load %arg10[%c17_37, %c0_38] : memref<232x32xf32, #tpu.memory_space<vmem>>, vector<192x32xf32>
    %c18 = arith.constant 18 : index
    %c0_39 = arith.constant 0 : index
    %34 = vector.load %arg10[%c18, %c0_39] : memref<232x32xf32, #tpu.memory_space<vmem>>, vector<192x32xf32>
    %c32 = arith.constant 32 : index
    %c0_40 = arith.constant 0 : index
    %35 = vector.load %arg10[%c32, %c0_40] : memref<232x32xf32, #tpu.memory_space<vmem>>, vector<192x32xf32>
    %c33 = arith.constant 33 : index
    %c0_41 = arith.constant 0 : index
    %36 = vector.load %arg10[%c33, %c0_41] : memref<232x32xf32, #tpu.memory_space<vmem>>, vector<192x32xf32>
    %c34 = arith.constant 34 : index
    %c0_42 = arith.constant 0 : index
    %37 = vector.load %arg10[%c34, %c0_42] : memref<232x32xf32, #tpu.memory_space<vmem>>, vector<192x32xf32>
    %38 = tpu.concatenate %29, %30, %31, %32, %33, %34, %35, %36, %37 in 1 : vector<192x32xf32>, vector<192x32xf32>, vector<192x32xf32>, vector<192x32xf32>, vector<192x32xf32>, vector<192x32xf32>, vector<192x32xf32>, vector<192x32xf32>, vector<192x32xf32> -> vector<192x288xf32>
    %cst_43 = arith.constant dense<0.000000e+00> : vector<192x16xf32>
    %39 = tpu.matmul %38, %8, %cst_43 {dimension_numbers = #tpu.dot_dimension_numbers<[1], [0], [0], [1], [0, 0, 1, 1], [], []>} : vector<192x288xf32>, vector<288x16xf32>, vector<192x16xf32> -> vector<192x16xf32>
    %40 = vector.broadcast %9 : vector<1x16xf32> to vector<192x16xf32>
    %41 = arith.addf %39, %40 : vector<192x16xf32>
    %c0_44 = arith.constant 0 : index
    %c0_45 = arith.constant 0 : index
    %c0_46 = arith.constant 0 : index
    %42 = vector.load %arg8[%c0_44, %c0_45, %c0_46] : memref<2x192x16xf32, #tpu.memory_space<vmem>>, vector<1x192x16xf32>
    %43 = vector.shape_cast %42 : vector<1x192x16xf32> to vector<192x16xf32>
    %44 = vector.shape_cast %41 : vector<192x16xf32> to vector<1x192x16xf32>
    tpu.vector_store %arg8[%c0_44, %c0_45, %c0_46], %44 {strides = array<i32>} : memref<2x192x16xf32, #tpu.memory_space<vmem>>, vector<1x192x16xf32>,
    %c1_47 = arith.constant 1 : index
    %c0_48 = arith.constant 0 : index
    %c0_49 = arith.constant 0 : index
    %45 = vector.load %arg1[%c1_47, %c0_48, %c0_49] : memref<2x240x4xf32, #tpu.memory_space<vmem>>, vector<1x240x4xf32>
    %46 = vector.shape_cast %45 : vector<1x240x4xf32> to vector<240x4xf32>
    %cst_50 = arith.constant dense<0.000000e+00> : vector<240x16xf32>
    %47 = tpu.matmul %46, %4, %cst_50 {dimension_numbers = #tpu.dot_dimension_numbers<[1], [0], [0], [1], [0, 0, 1, 1], [], []>} : vector<240x4xf32>, vector<4x16xf32>, vector<240x16xf32> -> vector<240x16xf32>
    %48 = vector.broadcast %5 : vector<1x16xf32> to vector<240x16xf32>
    %49 = arith.addf %47, %48 : vector<240x16xf32>
    %cst_51 = arith.constant 0.000000e+00 : f32
    %50 = vector.broadcast %cst_51 : f32 to vector<240x16xf32>
    %51 = arith.maximumf %49, %50 : vector<240x16xf32>
    %c0_52 = arith.constant 0 : index
    %c0_53 = arith.constant 0 : index
    %52 = vector.load %arg9[%c0_52, %c0_53] : memref<248x16xf32, #tpu.memory_space<vmem>>, vector<240x16xf32>
    tpu.vector_store %arg9[%c0_52, %c0_53], %51 {strides = array<i32>} : memref<248x16xf32, #tpu.memory_space<vmem>>, vector<240x16xf32>,
    %c0_54 = arith.constant 0 : index
    %c0_55 = arith.constant 0 : index
    %53 = vector.load %arg9[%c0_54, %c0_55] : memref<248x16xf32, #tpu.memory_space<vmem>>, vector<224x16xf32>
    %c1_56 = arith.constant 1 : index
    %c0_57 = arith.constant 0 : index
    %54 = vector.load %arg9[%c1_56, %c0_57] : memref<248x16xf32, #tpu.memory_space<vmem>>, vector<224x16xf32>
    %c16_58 = arith.constant 16 : index
    %c0_59 = arith.constant 0 : index
    %55 = vector.load %arg9[%c16_58, %c0_59] : memref<248x16xf32, #tpu.memory_space<vmem>>, vector<224x16xf32>
    %c17_60 = arith.constant 17 : index
    %c0_61 = arith.constant 0 : index
    %56 = vector.load %arg9[%c17_60, %c0_61] : memref<248x16xf32, #tpu.memory_space<vmem>>, vector<224x16xf32>
    %57 = tpu.concatenate %53, %54, %55, %56 in 1 : vector<224x16xf32>, vector<224x16xf32>, vector<224x16xf32>, vector<224x16xf32> -> vector<224x64xf32>
    %cst_62 = arith.constant dense<0.000000e+00> : vector<224x32xf32>
    %58 = tpu.matmul %57, %6, %cst_62 {dimension_numbers = #tpu.dot_dimension_numbers<[1], [0], [0], [1], [0, 0, 1, 1], [], []>} : vector<224x64xf32>, vector<64x32xf32>, vector<224x32xf32> -> vector<224x32xf32>
    %59 = vector.broadcast %7 : vector<1x32xf32> to vector<224x32xf32>
    %60 = arith.addf %58, %59 : vector<224x32xf32>
    %cst_63 = arith.constant 0.000000e+00 : f32
    %61 = vector.broadcast %cst_63 : f32 to vector<224x32xf32>
    %62 = arith.maximumf %60, %61 : vector<224x32xf32>
    %c0_64 = arith.constant 0 : index
    %c0_65 = arith.constant 0 : index
    %63 = vector.load %arg10[%c0_64, %c0_65] : memref<232x32xf32, #tpu.memory_space<vmem>>, vector<224x32xf32>
    tpu.vector_store %arg10[%c0_64, %c0_65], %62 {strides = array<i32>} : memref<232x32xf32, #tpu.memory_space<vmem>>, vector<224x32xf32>,
    %c0_66 = arith.constant 0 : index
    %c0_67 = arith.constant 0 : index
    %64 = vector.load %arg10[%c0_66, %c0_67] : memref<232x32xf32, #tpu.memory_space<vmem>>, vector<192x32xf32>
    %c1_68 = arith.constant 1 : index
    %c0_69 = arith.constant 0 : index
    %65 = vector.load %arg10[%c1_68, %c0_69] : memref<232x32xf32, #tpu.memory_space<vmem>>, vector<192x32xf32>
    %c2_70 = arith.constant 2 : index
    %c0_71 = arith.constant 0 : index
    %66 = vector.load %arg10[%c2_70, %c0_71] : memref<232x32xf32, #tpu.memory_space<vmem>>, vector<192x32xf32>
    %c16_72 = arith.constant 16 : index
    %c0_73 = arith.constant 0 : index
    %67 = vector.load %arg10[%c16_72, %c0_73] : memref<232x32xf32, #tpu.memory_space<vmem>>, vector<192x32xf32>
    %c17_74 = arith.constant 17 : index
    %c0_75 = arith.constant 0 : index
    %68 = vector.load %arg10[%c17_74, %c0_75] : memref<232x32xf32, #tpu.memory_space<vmem>>, vector<192x32xf32>
    %c18_76 = arith.constant 18 : index
    %c0_77 = arith.constant 0 : index
    %69 = vector.load %arg10[%c18_76, %c0_77] : memref<232x32xf32, #tpu.memory_space<vmem>>, vector<192x32xf32>
    %c32_78 = arith.constant 32 : index
    %c0_79 = arith.constant 0 : index
    %70 = vector.load %arg10[%c32_78, %c0_79] : memref<232x32xf32, #tpu.memory_space<vmem>>, vector<192x32xf32>
    %c33_80 = arith.constant 33 : index
    %c0_81 = arith.constant 0 : index
    %71 = vector.load %arg10[%c33_80, %c0_81] : memref<232x32xf32, #tpu.memory_space<vmem>>, vector<192x32xf32>
    %c34_82 = arith.constant 34 : index
    %c0_83 = arith.constant 0 : index
    %72 = vector.load %arg10[%c34_82, %c0_83] : memref<232x32xf32, #tpu.memory_space<vmem>>, vector<192x32xf32>
    %73 = tpu.concatenate %64, %65, %66, %67, %68, %69, %70, %71, %72 in 1 : vector<192x32xf32>, vector<192x32xf32>, vector<192x32xf32>, vector<192x32xf32>, vector<192x32xf32>, vector<192x32xf32>, vector<192x32xf32>, vector<192x32xf32>, vector<192x32xf32> -> vector<192x288xf32>
    %cst_84 = arith.constant dense<0.000000e+00> : vector<192x16xf32>
    %74 = tpu.matmul %73, %8, %cst_84 {dimension_numbers = #tpu.dot_dimension_numbers<[1], [0], [0], [1], [0, 0, 1, 1], [], []>} : vector<192x288xf32>, vector<288x16xf32>, vector<192x16xf32> -> vector<192x16xf32>
    %75 = vector.broadcast %9 : vector<1x16xf32> to vector<192x16xf32>
    %76 = arith.addf %74, %75 : vector<192x16xf32>
    %c1_85 = arith.constant 1 : index
    %c0_86 = arith.constant 0 : index
    %c0_87 = arith.constant 0 : index
    %77 = vector.load %arg8[%c1_85, %c0_86, %c0_87] : memref<2x192x16xf32, #tpu.memory_space<vmem>>, vector<1x192x16xf32>
    %78 = vector.shape_cast %77 : vector<1x192x16xf32> to vector<192x16xf32>
    %79 = vector.shape_cast %76 : vector<192x16xf32> to vector<1x192x16xf32>
    tpu.vector_store %arg8[%c1_85, %c0_86, %c0_87], %79 {strides = array<i32>} : memref<2x192x16xf32, #tpu.memory_space<vmem>>, vector<1x192x16xf32>,
    return
  }
  func.func @transform_0(%arg0: i32) -> (i32, i32, i32) {
    %c0_i32 = arith.constant 0 : i32
    %c0_i32_0 = arith.constant 0 : i32
    %c0_i32_1 = arith.constant 0 : i32
    return %arg0, %c0_i32, %c0_i32_0 : i32, i32, i32
  }
  func.func @transform_1(%arg0: i32) -> (i32, i32) {
    %c0_i32 = arith.constant 0 : i32
    %c0_i32_0 = arith.constant 0 : i32
    %c0_i32_1 = arith.constant 0 : i32
    return %c0_i32, %c0_i32_0 : i32, i32
  }
  func.func @transform_2(%arg0: i32) -> (i32, i32) {
    %c0_i32 = arith.constant 0 : i32
    %c0_i32_0 = arith.constant 0 : i32
    %c0_i32_1 = arith.constant 0 : i32
    return %c0_i32, %c0_i32_0 : i32, i32
  }
  func.func @transform_3(%arg0: i32) -> (i32, i32) {
    %c0_i32 = arith.constant 0 : i32
    %c0_i32_0 = arith.constant 0 : i32
    %c0_i32_1 = arith.constant 0 : i32
    return %c0_i32, %c0_i32_0 : i32, i32
  }
  func.func @transform_4(%arg0: i32) -> (i32, i32) {
    %c0_i32 = arith.constant 0 : i32
    %c0_i32_0 = arith.constant 0 : i32
    %c0_i32_1 = arith.constant 0 : i32
    return %c0_i32, %c0_i32_0 : i32, i32
  }
  func.func @transform_5(%arg0: i32) -> (i32, i32) {
    %c0_i32 = arith.constant 0 : i32
    %c0_i32_0 = arith.constant 0 : i32
    %c0_i32_1 = arith.constant 0 : i32
    return %c0_i32, %c0_i32_0 : i32, i32
  }
  func.func @transform_6(%arg0: i32) -> (i32, i32) {
    %c0_i32 = arith.constant 0 : i32
    %c0_i32_0 = arith.constant 0 : i32
    %c0_i32_1 = arith.constant 0 : i32
    return %c0_i32, %c0_i32_0 : i32, i32
  }
  func.func @transform_7(%arg0: i32) -> (i32, i32, i32) {
    %c0_i32 = arith.constant 0 : i32
    %c0_i32_0 = arith.constant 0 : i32
    %c0_i32_1 = arith.constant 0 : i32
    return %arg0, %c0_i32, %c0_i32_0 : i32, i32, i32
  }
}

</mosaic_0001>

<llo_original>
// kernel: squeeze.1
$region0: #{squeeze.1}
  %s0 = inlined_call_operand.hbm [shape: f32[2,1,16,16], index: 0, kind: input, shape index: {}]
  %s1 = inlined_call_operand.vmem [shape: f32[2,256], index: 1, kind: output, shape index: {}]
  $region1: #{squeeze.1} parent=0
    #allocation0 [shape = 'u8[16384]{0}', space=vmem, size = 0x4000, scoped, tag = 'operand span for operand 0']
    #allocation1 [shape = 's32[1]{0}', space=sflag, size = 0x4, scoped, tag = 'scoped memory for squeeze.1']
    #allocation2 [shape = 'u8[8192]{0}', space=vmem, size = 0x2000, scoped, tag = 'scoped mem for output reshape']
    %2 = vsyncpa [#allocation1], 0
    %s4 = ssub.s32 512, 512
    %5 = vsyncadd [#allocation1], %s4
    %s7 = sshll.u32 [#allocation0], 4
    %s8 = int_to_ptr.vmem [resolvable:$true] %s7
    %10 = dma.hbm_to_vmem [thread:$0]  %s0, 512, %s8, [#allocation1]
    %11 = dma.done [#allocation1], 512
    %v12 = vld [vmem:[#allocation0] ss:$8 sm:$0xf]
    %vm13 = vcmask 130048
    %14 = vst.msk [vmem:[#allocation2] ss:$8 sm:$0x3] %vm13, %v12
    %s15 = scalar_lea.vmem [#allocation2], 4294967281
    %16 = vst.msk [vmem:[%s15] ss:$8 sm:$0xc] %vm13, %v12
    %s17 = scalar_lea.vmem [#allocation0], 7
    %s18 = smov 3
    %v19 = vld [vmem:[%s17] ss:$16 sm:%s18]
    %s20 = scalar_lea.vmem [#allocation0], 4294967279
    %s21 = smov 12
    %v22 = vld [vmem:[%s20] ss:$16 sm:%s21]
    %vm23 = vcmask 1043458
    %v24 = vsel %vm23, %v22, %v19
    %25 = vrot.lane.b32.xlu0 %v24, 112
    %v26 = vpop.permute.xlu0 %25
    %vm27 = vcmask 1048448
    %28 = vst.msk [vmem:[#allocation2] sm:$0x3] %vm27, %v26
    %s29 = scalar_lea.vmem [#allocation2], 6
    %30 = vst.msk [vmem:[%s29] sm:$0xc] %vm27, %v26
    %s31 = scalar_lea.vmem [#allocation0], 6
    %s32 = smov 3
    %v33 = vld [vmem:[%s31] ss:$16 sm:%s32]
    %s34 = scalar_lea.vmem [#allocation0], 4294967278
    %s35 = smov 12
    %v36 = vld [vmem:[%s34] ss:$16 sm:%s35]
    %vm37 = vcmask 1043458
    %v38 = vsel %vm37, %v36, %v33
    %39 = vrot.lane.b32.xlu0 %v38, 96
    %v40 = vpop.permute.xlu0 %39
    %vm41 = vcmask 917248
    %42 = vst.msk [vmem:[#allocation2] sm:$0x3] %vm41, %v40
    %s43 = scalar_lea.vmem [#allocation2], 6
    %44 = vst.msk [vmem:[%s43] sm:$0xc] %vm41, %v40
    %s45 = scalar_lea.vmem [#allocation0], 5
    %s46 = smov 3
    %v47 = vld [vmem:[%s45] ss:$16 sm:%s46]
    %s48 = scalar_lea.vmem [#allocation0], 4294967277
    %s49 = smov 12
    %v50 = vld [vmem:[%s48] ss:$16 sm:%s49]
    %vm51 = vcmask 1043458
    %v52 = vsel %vm51, %v50, %v47
    %53 = vrot.lane.b32.xlu0 %v52, 80
    %v54 = vpop.permute.xlu0 %53
    %vm55 = vcmask 786048
    %56 = vst.msk [vmem:[#allocation2] sm:$0x3] %vm55, %v54
    %s57 = scalar_lea.vmem [#allocation2], 6
    %58 = vst.msk [vmem:[%s57] sm:$0xc] %vm55, %v54
    %s59 = scalar_lea.vmem [#allocation0], 4
    %s60 = smov 3
    %v61 = vld [vmem:[%s59] ss:$16 sm:%s60]
    %s62 = scalar_lea.vmem [#allocation0], 4294967276
    %s63 = smov 12
    %v64 = vld [vmem:[%s62] ss:$16 sm:%s63]
    %vm65 = vcmask 1043458
    %v66 = vsel %vm65, %v64, %v61
    %67 = vrot.lane.b32.xlu0 %v66, 64
    %v68 = vpop.permute.xlu0 %67
    %vm69 = vcmask 654848
    %70 = vst.msk [vmem:[#allocation2] sm:$0x3] %vm69, %v68
    %s71 = scalar_lea.vmem [#allocation2], 6
    %72 = vst.msk [vmem:[%s71] sm:$0xc] %vm69, %v68
    %s73 = scalar_lea.vmem [#allocation0], 3
    %s74 = smov 3
    %v75 = vld [vmem:[%s73] ss:$16 sm:%s74]
    %s76 = scalar_lea.vmem [#allocation0], 4294967275
    %s77 = smov 12
    %v78 = vld [vmem:[%s76] ss:$16 sm:%s77]
    %vm79 = vcmask 1043458
    %v80 = vsel %vm79, %v78, %v75
    %81 = vrot.lane.b32.xlu0 %v80, 48
    %v82 = vpop.permute.xlu0 %81
    %vm83 = vcmask 523648
    %84 = vst.msk [vmem:[#allocation2] sm:$0x3] %vm83, %v82
    %s85 = scalar_lea.vmem [#allocation2], 6
    %86 = vst.msk [vmem:[%s85] sm:$0xc] %vm83, %v82
    %s87 = scalar_lea.vmem [#allocation0], 2
    %s88 = smov 3
    %v89 = vld [vmem:[%s87] ss:$16 sm:%s88]
    %s90 = scalar_lea.vmem [#allocation0], 4294967274
    %s91 = smov 12
    %v92 = vld [vmem:[%s90] ss:$16 sm:%s91]
    %vm93 = vcmask 1043458
    %v94 = vsel %vm93, %v92, %v89
    %95 = vrot.lane.b32.xlu0 %v94, 32
    %v96 = vpop.permute.xlu0 %95
    %vm97 = vcmask 392448
    %98 = vst.msk [vmem:[#allocation2] sm:$0x3] %vm97, %v96
    %s99 = scalar_lea.vmem [#allocation2], 6
    %100 = vst.msk [vmem:[%s99] sm:$0xc] %vm97, %v96
    %s101 = scalar_lea.vmem [#allocation0], 1
    %s102 = smov 3
    %v103 = vld [vmem:[%s101] ss:$16 sm:%s102]
    %s104 = scalar_lea.vmem [#allocation0], 4294967273
    %s105 = smov 12
    %v106 = vld [vmem:[%s104] ss:$16 sm:%s105]
    %vm107 = vcmask 1043458
    %v108 = vsel %vm107, %v106, %v103
    %109 = vrot.lane.b32.xlu0 %v108, 16
    %v110 = vpop.permute.xlu0 %109
    %vm111 = vcmask 261248
    %112 = vst.msk [vmem:[#allocation2] sm:$0x3] %vm111, %v110
    %s113 = scalar_lea.vmem [#allocation2], 6
    %114 = vst.msk [vmem:[%s113] sm:$0xc] %vm111, %v110
    %s116 = sshllo.u32 0, 2
    %v118 = vld [vmem:[#allocation2] sm:%s116]
    %s119 = sshllo.u32 0, 2
    %120 = vst [vmem:[%s1] sm:%s119] %v118
    %s121 = scalar_lea.vmem [#allocation2], 8
    %v122 = vld [vmem:[%s121] sm:%s116]
    %s123 = sshllo.u32 0, 2
    %s124 = scalar_lea.vmem %s1, 2
    %125 = vst [vmem:[%s124] sm:%s123] %v122
    %126 = vsyncpa [#allocation1], 1

// kernel: forward.1
$region0: #{forward.1}
  #allocation0 [shape = 'u32[]', space=smem, size = 0x4, offset = 0x4, fixed_abs, tag = 'smem constant byte address 0x4 - core index']
  #allocation1 [shape = 'u32[144,128]{1,0:T(1,128)}', space=vmem, size = 0x12000, scoped, tag = 'internal scratch']
  #allocation2 [shape = 'f32[248,16]{1,0:T(8,128)}', space=vmem, size = 0x1f000, scoped, tag = 'scratch operand']
  #allocation3 [shape = 'f32[232,32]{1,0:T(8,128)}', space=vmem, size = 0x1d000, scoped, tag = 'scratch operand']
  %s0 = inlined_call_operand.vmem [shape: f32[2,240,4], index: 0, kind: input, shape index: {}]
  %s1 = inlined_call_operand.vmem [shape: f32[4,16], index: 1, kind: input, shape index: {}]
  %s2 = inlined_call_operand.vmem [shape: f32[1,16], index: 2, kind: input, shape index: {}]
  %s3 = inlined_call_operand.vmem [shape: f32[64,32], index: 3, kind: input, shape index: {}]
  %s4 = inlined_call_operand.vmem [shape: f32[1,32], index: 4, kind: input, shape index: {}]
  %s5 = inlined_call_operand.vmem [shape: f32[288,16], index: 5, kind: input, shape index: {}]
  %s6 = inlined_call_operand.vmem [shape: f32[1,16], index: 6, kind: input, shape index: {}]
  %s7 = inlined_call_operand.vmem [shape: f32[2,192,16], index: 7, kind: output, shape index: {}]
  %s8 = sld [smem:[#allocation0]]
  $region38: #{forward.1} parent=0
    _
  %s10 = ssub.s32 1, %s8
  %s11 = scalar_select 0, %s10, %s8
  // Predicated region
  $region2: #{forward.1} parent=0 // pred_check
    _
  $region3: #{forward.1} parent=0 // pred_check_branch
    %13 = sbr.rel (0) target = $region5
  $region4: #{forward.1} parent=0 // pred_region
    _
  $region5: #{forward.1} parent=0 // pred_fallthru
    _
  // Predicated region
  $region6: #{forward.1} parent=0 // pred_check
    _
  $region7: #{forward.1} parent=0 // pred_check_branch
    %15 = sbr.rel (0) target = $region9
  $region8: #{forward.1} parent=0 // pred_region
    _
  $region9: #{forward.1} parent=0 // pred_fallthru
    _
  // Predicated region
  $region10: #{forward.1} parent=0 // pred_check
    _
  $region11: #{forward.1} parent=0 // pred_check_branch
    %17 = sbr.rel (0) target = $region13
  $region12: #{forward.1} parent=0 // pred_region
    _
  $region13: #{forward.1} parent=0 // pred_fallthru
    _
  // Predicated region
  $region14: #{forward.1} parent=0 // pred_check
    _
  $region15: #{forward.1} parent=0 // pred_check_branch
    %19 = sbr.rel (0) target = $region17
  $region16: #{forward.1} parent=0 // pred_region
    _
  $region17: #{forward.1} parent=0 // pred_fallthru
    _
  // Predicated region
  $region18: #{forward.1} parent=0 // pred_check
    _
  $region19: #{forward.1} parent=0 // pred_check_branch
    %21 = sbr.rel (0) target = $region21
  $region20: #{forward.1} parent=0 // pred_region
    _
  $region21: #{forward.1} parent=0 // pred_fallthru
    _
  // Predicated region
  $region22: #{forward.1} parent=0 // pred_check
    _
  $region23: #{forward.1} parent=0 // pred_check_branch
    %23 = sbr.rel (0) target = $region25
  $region24: #{forward.1} parent=0 // pred_region
    _
  $region25: #{forward.1} parent=0 // pred_fallthru
    _
  // Predicated region
  $region26: #{forward.1} parent=0 // pred_check
    _
  $region27: #{forward.1} parent=0 // pred_check_branch
    %25 = sbr.rel (0) target = $region29
  $region28: #{forward.1} parent=0 // pred_region
    _
  $region29: #{forward.1} parent=0 // pred_fallthru
    _
  %vm26 = vcmask 130048
  %27 = vst.msk [vmem:[#allocation2 + $0xf0] sm:$0xff] %vm26, 0.0
  %vm28 = vcmask 261120
  %29 = vst.msk [vmem:[#allocation3 + $0xe0] sm:$0xff] %vm28, 0.0
  %v30 = vld [vmem:[%s1] sm:$0xf]
  %v31 = vld [vmem:[%s2] sm:$0x1]
  %v32 = vld [vmem:[%s3] sm:$0xff]
  %v33 = vld [vmem:[%s3 + $0x8] sm:$0xff]
  %v34 = vld [vmem:[%s3 + $0x10] sm:$0xff]
  %v35 = vld [vmem:[%s3 + $0x18] sm:$0xff]
  %v36 = vld [vmem:[%s3 + $0x20] sm:$0xff]
  %v37 = vld [vmem:[%s3 + $0x28] sm:$0xff]
  %v38 = vld [vmem:[%s3 + $0x30] sm:$0xff]
  %v39 = vld [vmem:[%s3 + $0x38] sm:$0xff]
  %v40 = vld [vmem:[%s4] sm:$0x1]
  %v41 = vld [vmem:[%s5] sm:$0xff]
  %v42 = vld [vmem:[%s5 + $0x8] sm:$0xff]
  %v43 = vld [vmem:[%s5 + $0x10] sm:$0xff]
  %v44 = vld [vmem:[%s5 + $0x18] sm:$0xff]
  %v45 = vld [vmem:[%s5 + $0x20] sm:$0xff]
  %v46 = vld [vmem:[%s5 + $0x28] sm:$0xff]
  %v47 = vld [vmem:[%s5 + $0x30] sm:$0xff]
  %v48 = vld [vmem:[%s5 + $0x38] sm:$0xff]
  %v49 = vld [vmem:[%s5 + $0x40] sm:$0xff]
  %v50 = vld [vmem:[%s5 + $0x48] sm:$0xff]
  %v51 = vld [vmem:[%s5 + $0x50] sm:$0xff]
  %v52 = vld [vmem:[%s5 + $0x58] sm:$0xff]
  %v53 = vld [vmem:[%s5 + $0x60] sm:$0xff]
  %v54 = vld [vmem:[%s5 + $0x68] sm:$0xff]
  %v55 = vld [vmem:[%s5 + $0x70] sm:$0xff]
  %v56 = vld [vmem:[%s5 + $0x78] sm:$0xff]
  %v57 = vld [vmem:[%s5 + $0x80] sm:$0xff]
  %v58 = vld [vmem:[%s5 + $0x88] sm:$0xff]
  %v59 = vld [vmem:[%s5 + $0x90] sm:$0xff]
  %v60 = vld [vmem:[%s5 + $0x98] sm:$0xff]
  %v61 = vld [vmem:[%s5 + $0xa0] sm:$0xff]
  %v62 = vld [vmem:[%s5 + $0xa8] sm:$0xff]
  %v63 = vld [vmem:[%s5 + $0xb0] sm:$0xff]
  %v64 = vld [vmem:[%s5 + $0xb8] sm:$0xff]
  %v65 = vld [vmem:[%s5 + $0xc0] sm:$0xff]
  %v66 = vld [vmem:[%s5 + $0xc8] sm:$0xff]
  %v67 = vld [vmem:[%s5 + $0xd0] sm:$0xff]
  %v68 = vld [vmem:[%s5 + $0xd8] sm:$0xff]
  %v69 = vld [vmem:[%s5 + $0xe0] sm:$0xff]
  %v70 = vld [vmem:[%s5 + $0xe8] sm:$0xff]
  %v71 = vld [vmem:[%s5 + $0xf0] sm:$0xff]
  %v72 = vld [vmem:[%s5 + $0xf8] sm:$0xff]
  %v73 = vld [vmem:[%s5 + $0x100] sm:$0xff]
  %v74 = vld [vmem:[%s5 + $0x108] sm:$0xff]
  %v75 = vld [vmem:[%s5 + $0x110] sm:$0xff]
  %v76 = vld [vmem:[%s5 + $0x118] sm:$0xff]
  %v77 = vld [vmem:[%s6] sm:$0x1]
  %v78 = vld [vmem:[%s0] sm:$0xff]
  %v79 = vld [vmem:[%s0 + $0x8] sm:$0xff]
  %v80 = vld [vmem:[%s0 + $0x10] sm:$0xff]
  %v81 = vld [vmem:[%s0 + $0x18] sm:$0xff]
  %v82 = vld [vmem:[%s0 + $0x20] sm:$0xff]
  %v83 = vld [vmem:[%s0 + $0x28] sm:$0xff]
  %v84 = vld [vmem:[%s0 + $0x30] sm:$0xff]
  %v85 = vld [vmem:[%s0 + $0x38] sm:$0xff]
  %v86 = vld [vmem:[%s0 + $0x40] sm:$0xff]
  %v87 = vld [vmem:[%s0 + $0x48] sm:$0xff]
  %v88 = vld [vmem:[%s0 + $0x50] sm:$0xff]
  %v89 = vld [vmem:[%s0 + $0x58] sm:$0xff]
  %v90 = vld [vmem:[%s0 + $0x60] sm:$0xff]
  %v91 = vld [vmem:[%s0 + $0x68] sm:$0xff]
  %v92 = vld [vmem:[%s0 + $0x70] sm:$0xff]
  %v93 = vld [vmem:[%s0 + $0x78] sm:$0xff]
  %v94 = vld [vmem:[%s0 + $0x80] sm:$0xff]
  %v95 = vld [vmem:[%s0 + $0x88] sm:$0xff]
  %v96 = vld [vmem:[%s0 + $0x90] sm:$0xff]
  %v97 = vld [vmem:[%s0 + $0x98] sm:$0xff]
  %v98 = vld [vmem:[%s0 + $0xa0] sm:$0xff]
  %v99 = vld [vmem:[%s0 + $0xa8] sm:$0xff]
  %v100 = vld [vmem:[%s0 + $0xb0] sm:$0xff]
  %v101 = vld [vmem:[%s0 + $0xb8] sm:$0xff]
  %v102 = vld [vmem:[%s0 + $0xc0] sm:$0xff]
  %v103 = vld [vmem:[%s0 + $0xc8] sm:$0xff]
  %v104 = vld [vmem:[%s0 + $0xd0] sm:$0xff]
  %v105 = vld [vmem:[%s0 + $0xd8] sm:$0xff]
  %v106 = vld [vmem:[%s0 + $0xe0] sm:$0xff]
  %v107 = vld [vmem:[%s0 + $0xe8] sm:$0xff]
  %v109 = vlaneseq
  %v110 = vshrl.u32 %v109, 7
  %v111 = vsub.s32 0, %v110
  %v112 = vrot.slane %v31, %v111
  %vm114 = vcmask 31744
  %v116 = vsel %vm114, %v78, 0
  %v119 = vsel %vm114, %v79, 0
  %v122 = vsel %vm114, %v80, 0
  %v125 = vsel %vm114, %v81, 0
  %v128 = vsel %vm114, %v82, 0
  %v131 = vsel %vm114, %v83, 0
  %v134 = vsel %vm114, %v84, 0
  %v137 = vsel %vm114, %v85, 0
  %v140 = vsel %vm114, %v86, 0
  %v143 = vsel %vm114, %v87, 0
  %v146 = vsel %vm114, %v88, 0
  %v149 = vsel %vm114, %v89, 0
  %v152 = vsel %vm114, %v90, 0
  %v155 = vsel %vm114, %v91, 0
  %v158 = vsel %vm114, %v92, 0
  %v161 = vsel %vm114, %v93, 0
  %v164 = vsel %vm114, %v94, 0
  %v167 = vsel %vm114, %v95, 0
  %v170 = vsel %vm114, %v96, 0
  %v173 = vsel %vm114, %v97, 0
  %v176 = vsel %vm114, %v98, 0
  %v179 = vsel %vm114, %v99, 0
  %v182 = vsel %vm114, %v100, 0
  %v185 = vsel %vm114, %v101, 0
  %v188 = vsel %vm114, %v102, 0
  %v191 = vsel %vm114, %v103, 0
  %v194 = vsel %vm114, %v104, 0
  %v197 = vsel %vm114, %v105, 0
  %v200 = vsel %vm114, %v106, 0
  %v203 = vsel %vm114, %v107, 0
  %vm205 = vcmask 1043456
  %v207 = vsel %vm205, %v30, 0
  %209 = vmatprep.subr.mxu0 0.0
  %210 = vmatpush1.msra.mxu0 %v207
  %211 = vmatprep.subr.mxu0 0.0
  %212 = vmatpush1.msra.mxu0 0.0
  %213 = vmatprep.subr.mxu0 0.0
  %214 = vmatpush1.msra.mxu0 0.0
  %215 = vmatprep.subr.mxu0 0.0
  %216 = vmatpush1.msra.mxu0 0.0
  %217 = vmatprep.subr.mxu0 0.0
  %218 = vmatpush1.msra.mxu0 0.0
  %219 = vmatprep.subr.mxu0 0.0
  %220 = vmatpush1.msra.mxu0 0.0
  %221 = vmatprep.subr.mxu0 0.0
  %222 = vmatpush1.msra.mxu0 0.0
  %223 = vmatprep.subr.mxu0 0.0
  %224 = vmatpush1.msra.mxu0 0.0
  %225 = vmatprep.subr.mxu0 0.0
  %226 = vmatpush1.msra.mxu0 0.0
  %227 = vmatprep.subr.mxu0 0.0
  %228 = vmatpush1.msra.mxu0 0.0
  %229 = vmatprep.subr.mxu0 0.0
  %230 = vmatpush1.msra.mxu0 0.0
  %231 = vmatprep.subr.mxu0 0.0
  %232 = vmatpush1.msra.mxu0 0.0
  %233 = vmatprep.subr.mxu0 0.0
  %234 = vmatpush1.msra.mxu0 0.0
  %235 = vmatprep.subr.mxu0 0.0
  %236 = vmatpush1.msra.mxu0 0.0
  %237 = vmatprep.subr.mxu0 0.0
  %238 = vmatpush1.msra.mxu0 0.0
  %239 = vmatprep.subr.mxu0 0.0
  %240 = vmatpush1.msra.mxu0 0.0
  %241 = vmatprep.subr.mxu0 0.0
  %242 = vmatpush1.msra.mxu0 0.0
  %243 = vmatprep.subr.mxu0 0.0
  %244 = vmatpush1.msra.mxu0 0.0
  %245 = vmatprep.subr.mxu0 0.0
  %246 = vmatpush1.msra.mxu0 0.0
  %247 = vmatprep.subr.mxu0 0.0
  %248 = vmatpush1.msra.mxu0 0.0
  %249 = vmatprep.subr.mxu0 0.0
  %250 = vmatpush1.msra.mxu0 0.0
  %251 = vmatprep.subr.mxu0 0.0
  %252 = vmatpush1.msra.mxu0 0.0
  %253 = vmatprep.subr.mxu0 0.0
  %254 = vmatpush1.msra.mxu0 0.0
  %255 = vmatprep.subr.mxu0 0.0
  %256 = vmatpush1.msra.mxu0 0.0
  %257 = vmatprep.subr.mxu0 0.0
  %258 = vmatpush1.msra.mxu0 0.0
  %259 = vmatprep.subr.mxu0 0.0
  %260 = vmatpush1.msra.mxu0 0.0
  %261 = vmatprep.subr.mxu0 0.0
  %262 = vmatpush1.msra.mxu0 0.0
  %263 = vmatprep.subr.mxu0 0.0
  %264 = vmatpush1.msra.mxu0 0.0
  %265 = vmatprep.subr.mxu0 0.0
  %266 = vmatpush1.msra.mxu0 0.0
  %267 = vmatprep.subr.mxu0 0.0
  %268 = vmatpush1.msra.mxu0 0.0
  %269 = vmatprep.subr.mxu0 0.0
  %270 = vmatpush1.msra.mxu0 0.0
  %271 = vmatprep.subr.mxu0 0.0
  %272 = vmatpush1.msra.mxu0 0.0
  %273 = vmatprep.mubr.f32.mxu0 0.0
  %274 = vmatmul.mubr.f32.gmra.mrb[0].mxu0 %v116
  %v275 = vpop.f32.mrb[0].mxu0
  %v276 = vadd.f32 %v112, %v275
  %v277 = vpop.f32.mrb[0].mxu0
  %278 = vmatprep.mubr.f32.mxu0 0.0
  %279 = vmatmul.mubr.f32.gmra.mrb[0].mxu0 %v119
  %v280 = vpop.f32.mrb[0].mxu0
  %v281 = vadd.f32 %v112, %v280
  %v282 = vpop.f32.mrb[0].mxu0
  %283 = vmatprep.mubr.f32.mxu0 0.0
  %284 = vmatmul.mubr.f32.gmra.mrb[0].mxu0 %v122
  %v285 = vpop.f32.mrb[0].mxu0
  %v286 = vadd.f32 %v112, %v285
  %v287 = vpop.f32.mrb[0].mxu0
  %288 = vmatprep.mubr.f32.mxu0 0.0
  %289 = vmatmul.mubr.f32.gmra.mrb[0].mxu0 %v125
  %v290 = vpop.f32.mrb[0].mxu0
  %v291 = vadd.f32 %v112, %v290
  %v292 = vpop.f32.mrb[0].mxu0
  %293 = vmatprep.mubr.f32.mxu0 0.0
  %294 = vmatmul.mubr.f32.gmra.mrb[0].mxu0 %v128
  %v295 = vpop.f32.mrb[0].mxu0
  %v296 = vadd.f32 %v112, %v295
  %v297 = vpop.f32.mrb[0].mxu0
  %298 = vmatprep.mubr.f32.mxu0 0.0
  %299 = vmatmul.mubr.f32.gmra.mrb[0].mxu0 %v131
  %v300 = vpop.f32.mrb[0].mxu0
  %v301 = vadd.f32 %v112, %v300
  %v302 = vpop.f32.mrb[0].mxu0
  %303 = vmatprep.mubr.f32.mxu0 0.0
  %304 = vmatmul.mubr.f32.gmra.mrb[0].mxu0 %v134
  %v305 = vpop.f32.mrb[0].mxu0
  %v306 = vadd.f32 %v112, %v305
  %v307 = vpop.f32.mrb[0].mxu0
  %308 = vmatprep.mubr.f32.mxu0 0.0
  %309 = vmatmul.mubr.f32.gmra.mrb[0].mxu0 %v137
  %v310 = vpop.f32.mrb[0].mxu0
  %v311 = vadd.f32 %v112, %v310
  %v312 = vpop.f32.mrb[0].mxu0
  %313 = vmatprep.mubr.f32.mxu0 0.0
  %314 = vmatmul.mubr.f32.gmra.mrb[0].mxu0 %v140
  %v315 = vpop.f32.mrb[0].mxu0
  %v316 = vadd.f32 %v112, %v315
  %v317 = vpop.f32.mrb[0].mxu0
  %318 = vmatprep.mubr.f32.mxu0 0.0
  %319 = vmatmul.mubr.f32.gmra.mrb[0].mxu0 %v143
  %v320 = vpop.f32.mrb[0].mxu0
  %v321 = vadd.f32 %v112, %v320
  %v322 = vpop.f32.mrb[0].mxu0
  %323 = vmatprep.mubr.f32.mxu0 0.0
  %324 = vmatmul.mubr.f32.gmra.mrb[0].mxu0 %v146
  %v325 = vpop.f32.mrb[0].mxu0
  %v326 = vadd.f32 %v112, %v325
  %v327 = vpop.f32.mrb[0].mxu0
  %328 = vmatprep.mubr.f32.mxu0 0.0
  %329 = vmatmul.mubr.f32.gmra.mrb[0].mxu0 %v149
  %v330 = vpop.f32.mrb[0].mxu0
  %v331 = vadd.f32 %v112, %v330
  %v332 = vpop.f32.mrb[0].mxu0
  %333 = vmatprep.mubr.f32.mxu0 0.0
  %334 = vmatmul.mubr.f32.gmra.mrb[0].mxu0 %v152
  %v335 = vpop.f32.mrb[0].mxu0
  %v336 = vadd.f32 %v112, %v335
  %v337 = vpop.f32.mrb[0].mxu0
  %338 = vmatprep.mubr.f32.mxu0 0.0
  %339 = vmatmul.mubr.f32.gmra.mrb[0].mxu0 %v155
  %v340 = vpop.f32.mrb[0].mxu0
  %v341 = vadd.f32 %v112, %v340
  %v342 = vpop.f32.mrb[0].mxu0
  %343 = vmatprep.mubr.f32.mxu0 0.0
  %344 = vmatmul.mubr.f32.gmra.mrb[0].mxu0 %v158
  %v345 = vpop.f32.mrb[0].mxu0
  %v346 = vadd.f32 %v112, %v345
  %v347 = vpop.f32.mrb[0].mxu0
  %348 = vmatprep.mubr.f32.mxu0 0.0
  %349 = vmatmul.mubr.f32.gmra.mrb[0].mxu0 %v161
  %v350 = vpop.f32.mrb[0].mxu0
  %v351 = vadd.f32 %v112, %v350
  %v352 = vpop.f32.mrb[0].mxu0
  %353 = vmatprep.mubr.f32.mxu0 0.0
  %354 = vmatmul.mubr.f32.gmra.mrb[0].mxu0 %v164
  %v355 = vpop.f32.mrb[0].mxu0
  %v356 = vadd.f32 %v112, %v355
  %v357 = vpop.f32.mrb[0].mxu0
  %358 = vmatprep.mubr.f32.mxu0 0.0
  %359 = vmatmul.mubr.f32.gmra.mrb[0].mxu0 %v167
  %v360 = vpop.f32.mrb[0].mxu0
  %v361 = vadd.f32 %v112, %v360
  %v362 = vpop.f32.mrb[0].mxu0
  %363 = vmatprep.mubr.f32.mxu0 0.0
  %364 = vmatmul.mubr.f32.gmra.mrb[0].mxu0 %v170
  %v365 = vpop.f32.mrb[0].mxu0
  %v366 = vadd.f32 %v112, %v365
  %v367 = vpop.f32.mrb[0].mxu0
  %368 = vmatprep.mubr.f32.mxu0 0.0
  %369 = vmatmul.mubr.f32.gmra.mrb[0].mxu0 %v173
  %v370 = vpop.f32.mrb[0].mxu0
  %v371 = vadd.f32 %v112, %v370
  %v372 = vpop.f32.mrb[0].mxu0
  %373 = vmatprep.mubr.f32.mxu0 0.0
  %374 = vmatmul.mubr.f32.gmra.mrb[0].mxu0 %v176
  %v375 = vpop.f32.mrb[0].mxu0
  %v376 = vadd.f32 %v112, %v375
  %v377 = vpop.f32.mrb[0].mxu0
  %378 = vmatprep.mubr.f32.mxu0 0.0
  %379 = vmatmul.mubr.f32.gmra.mrb[0].mxu0 %v179
  %v380 = vpop.f32.mrb[0].mxu0
  %v381 = vadd.f32 %v112, %v380
  %v382 = vpop.f32.mrb[0].mxu0
  %383 = vmatprep.mubr.f32.mxu0 0.0
  %384 = vmatmul.mubr.f32.gmra.mrb[0].mxu0 %v182
  %v385 = vpop.f32.mrb[0].mxu0
  %v386 = vadd.f32 %v112, %v385
  %v387 = vpop.f32.mrb[0].mxu0
  %388 = vmatprep.mubr.f32.mxu0 0.0
  %389 = vmatmul.mubr.f32.gmra.mrb[0].mxu0 %v185
  %v390 = vpop.f32.mrb[0].mxu0
  %v391 = vadd.f32 %v112, %v390
  %v392 = vpop.f32.mrb[0].mxu0
  %393 = vmatprep.mubr.f32.mxu0 0.0
  %394 = vmatmul.mubr.f32.gmra.mrb[0].mxu0 %v188
  %v395 = vpop.f32.mrb[0].mxu0
  %v396 = vadd.f32 %v112, %v395
  %v397 = vpop.f32.mrb[0].mxu0
  %398 = vmatprep.mubr.f32.mxu0 0.0
  %399 = vmatmul.mubr.f32.gmra.mrb[0].mxu0 %v191
  %v400 = vpop.f32.mrb[0].mxu0
  %v401 = vadd.f32 %v112, %v400
  %v402 = vpop.f32.mrb[0].mxu0
  %403 = vmatprep.mubr.f32.mxu0 0.0
  %404 = vmatmul.mubr.f32.gmra.mrb[0].mxu0 %v194
  %v405 = vpop.f32.mrb[0].mxu0
  %v406 = vadd.f32 %v112, %v405
  %v407 = vpop.f32.mrb[0].mxu0
  %408 = vmatprep.mubr.f32.mxu0 0.0
  %409 = vmatmul.mubr.f32.gmra.mrb[0].mxu0 %v197
  %v410 = vpop.f32.mrb[0].mxu0
  %v411 = vadd.f32 %v112, %v410
  %v412 = vpop.f32.mrb[0].mxu0
  %413 = vmatprep.mubr.f32.mxu0 0.0
  %414 = vmatmul.mubr.f32.gmra.mrb[0].mxu0 %v200
  %v415 = vpop.f32.mrb[0].mxu0
  %v416 = vadd.f32 %v112, %v415
  %v417 = vpop.f32.mrb[0].mxu0
  %418 = vmatprep.mubr.f32.mxu0 0.0
  %419 = vmatmul.mubr.f32.gmra.mrb[0].mxu0 %v203
  %v420 = vpop.f32.mrb[0].mxu0
  %v421 = vadd.f32 %v112, %v420
  %v422 = vpop.f32.mrb[0].mxu0
  %423 = vdwg.mxu0
  %v424 = vmax.f32 %v276, 0.0
  %v425 = vmax.f32 %v281, 0.0
  %v426 = vmax.f32 %v286, 0.0
  %v427 = vmax.f32 %v291, 0.0
  %v428 = vmax.f32 %v296, 0.0
  %v429 = vmax.f32 %v301, 0.0
  %v430 = vmax.f32 %v306, 0.0
  %v431 = vmax.f32 %v311, 0.0
  %v432 = vmax.f32 %v316, 0.0
  %v433 = vmax.f32 %v321, 0.0
  %v434 = vmax.f32 %v326, 0.0
  %v435 = vmax.f32 %v331, 0.0
  %v436 = vmax.f32 %v336, 0.0
  %v437 = vmax.f32 %v341, 0.0
  %v438 = vmax.f32 %v346, 0.0
  %v439 = vmax.f32 %v351, 0.0
  %v440 = vmax.f32 %v356, 0.0
  %v441 = vmax.f32 %v361, 0.0
  %v442 = vmax.f32 %v366, 0.0
  %v443 = vmax.f32 %v371, 0.0
  %v444 = vmax.f32 %v376, 0.0
  %v445 = vmax.f32 %v381, 0.0
  %v446 = vmax.f32 %v386, 0.0
  %v447 = vmax.f32 %v391, 0.0
  %v448 = vmax.f32 %v396, 0.0
  %v449 = vmax.f32 %v401, 0.0
  %v450 = vmax.f32 %v406, 0.0
  %v451 = vmax.f32 %v411, 0.0
  %v452 = vmax.f32 %v416, 0.0
  %v453 = vmax.f32 %v421, 0.0
  %454 = vst.msk [vmem:[#allocation2] sm:$0xff] %vm26, %v424
  %455 = vst.msk [vmem:[#allocation2 + $0x8] sm:$0xff] %vm26, %v425
  %456 = vst.msk [vmem:[#allocation2 + $0x10] sm:$0xff] %vm26, %v426
  %457 = vst.msk [vmem:[#allocation2 + $0x18] sm:$0xff] %vm26, %v427
  %458 = vst.msk [vmem:[#allocation2 + $0x20] sm:$0xff] %vm26, %v428
  %459 = vst.msk [vmem:[#allocation2 + $0x28] sm:$0xff] %vm26, %v429
  %460 = vst.msk [vmem:[#allocation2 + $0x30] sm:$0xff] %vm26, %v430
  %461 = vst.msk [vmem:[#allocation2 + $0x38] sm:$0xff] %vm26, %v431
  %462 = vst.msk [vmem:[#allocation2 + $0x40] sm:$0xff] %vm26, %v432
  %463 = vst.msk [vmem:[#allocation2 + $0x48] sm:$0xff] %vm26, %v433
  %464 = vst.msk [vmem:[#allocation2 + $0x50] sm:$0xff] %vm26, %v434
  %465 = vst.msk [vmem:[#allocation2 + $0x58] sm:$0xff] %vm26, %v435
  %466 = vst.msk [vmem:[#allocation2 + $0x60] sm:$0xff] %vm26, %v436
  %467 = vst.msk [vmem:[#allocation2 + $0x68] sm:$0xff] %vm26, %v437
  %468 = vst.msk [vmem:[#allocation2 + $0x70] sm:$0xff] %vm26, %v438
  %469 = vst.msk [vmem:[#allocation2 + $0x78] sm:$0xff] %vm26, %v439
  %470 = vst.msk [vmem:[#allocation2 + $0x80] sm:$0xff] %vm26, %v440
  %471 = vst.msk [vmem:[#allocation2 + $0x88] sm:$0xff] %vm26, %v441
  %472 = vst.msk [vmem:[#allocation2 + $0x90] sm:$0xff] %vm26, %v442
  %473 = vst.msk [vmem:[#allocation2 + $0x98] sm:$0xff] %vm26, %v443
  %474 = vst.msk [vmem:[#allocation2 + $0xa0] sm:$0xff] %vm26, %v444
  %475 = vst.msk [vmem:[#allocation2 + $0xa8] sm:$0xff] %vm26, %v445
  %476 = vst.msk [vmem:[#allocation2 + $0xb0] sm:$0xff] %vm26, %v446
  %477 = vst.msk [vmem:[#allocation2 + $0xb8] sm:$0xff] %vm26, %v447
  %478 = vst.msk [vmem:[#allocation2 + $0xc0] sm:$0xff] %vm26, %v448
  %479 = vst.msk [vmem:[#allocation2 + $0xc8] sm:$0xff] %vm26, %v449
  %480 = vst.msk [vmem:[#allocation2 + $0xd0] sm:$0xff] %vm26, %v450
  %481 = vst.msk [vmem:[#allocation2 + $0xd8] sm:$0xff] %vm26, %v451
  %482 = vst.msk [vmem:[#allocation2 + $0xe0] sm:$0xff] %vm26, %v452
  %483 = vst.msk [vmem:[#allocation2 + $0xe8] sm:$0xff] %vm26, %v453
  %v484 = vld [vmem:[#allocation2] sm:$0xff]
  %v485 = vld [vmem:[#allocation2 + $0x8] sm:$0xff]
  %v486 = vld [vmem:[#allocation2 + $0x10] sm:$0xff]
  %v487 = vld [vmem:[#allocation2 + $0x18] sm:$0xff]
  %v488 = vld [vmem:[#allocation2 + $0x20] sm:$0xff]
  %v489 = vld [vmem:[#allocation2 + $0x28] sm:$0xff]
  %v490 = vld [vmem:[#allocation2 + $0x30] sm:$0xff]
  %v491 = vld [vmem:[#allocation2 + $0x38] sm:$0xff]
  %v492 = vld [vmem:[#allocation2 + $0x40] sm:$0xff]
  %v493 = vld [vmem:[#allocation2 + $0x48] sm:$0xff]
  %v494 = vld [vmem:[#allocation2 + $0x50] sm:$0xff]
  %v495 = vld [vmem:[#allocation2 + $0x58] sm:$0xff]
  %v496 = vld [vmem:[#allocation2 + $0x60] sm:$0xff]
  %v497 = vld [vmem:[#allocation2 + $0x68] sm:$0xff]
  %v498 = vld [vmem:[#allocation2 + $0x70] sm:$0xff]
  %v499 = vld [vmem:[#allocation2 + $0x78] sm:$0xff]
  %v500 = vld [vmem:[#allocation2 + $0x80] sm:$0xff]
  %v501 = vld [vmem:[#allocation2 + $0x88] sm:$0xff]
  %v502 = vld [vmem:[#allocation2 + $0x90] sm:$0xff]
  %v503 = vld [vmem:[#allocation2 + $0x98] sm:$0xff]
  %v504 = vld [vmem:[#allocation2 + $0xa0] sm:$0xff]
  %v505 = vld [vmem:[#allocation2 + $0xa8] sm:$0xff]
  %v506 = vld [vmem:[#allocation2 + $0xb0] sm:$0xff]
  %v507 = vld [vmem:[#allocation2 + $0xb8] sm:$0xff]
  %v508 = vld [vmem:[#allocation2 + $0xc0] sm:$0xff]
  %v509 = vld [vmem:[#allocation2 + $0xc8] sm:$0xff]
  %v510 = vld [vmem:[#allocation2 + $0xd0] sm:$0xff]
  %v511 = vld [vmem:[#allocation2 + $0xd8] sm:$0xff]
  %v512 = vld [vmem:[#allocation2 + $0x1] sm:$0xff]
  %v513 = vld [vmem:[#allocation2 + $0x9] sm:$0xff]
  %v514 = vld [vmem:[#allocation2 + $0x11] sm:$0xff]
  %v515 = vld [vmem:[#allocation2 + $0x19] sm:$0xff]
  %v516 = vld [vmem:[#allocation2 + $0x21] sm:$0xff]
  %v517 = vld [vmem:[#allocation2 + $0x29] sm:$0xff]
  %v518 = vld [vmem:[#allocation2 + $0x31] sm:$0xff]
  %v519 = vld [vmem:[#allocation2 + $0x39] sm:$0xff]
  %v520 = vld [vmem:[#allocation2 + $0x41] sm:$0xff]
  %v521 = vld [vmem:[#allocation2 + $0x49] sm:$0xff]
  %v522 = vld [vmem:[#allocation2 + $0x51] sm:$0xff]
  %v523 = vld [vmem:[#allocation2 + $0x59] sm:$0xff]
  %v524 = vld [vmem:[#allocation2 + $0x61] sm:$0xff]
  %v525 = vld [vmem:[#allocation2 + $0x69] sm:$0xff]
  %v526 = vld [vmem:[#allocation2 + $0x71] sm:$0xff]
  %v527 = vld [vmem:[#allocation2 + $0x79] sm:$0xff]
  %v528 = vld [vmem:[#allocation2 + $0x81] sm:$0xff]
  %v529 = vld [vmem:[#allocation2 + $0x89] sm:$0xff]
  %v530 = vld [vmem:[#allocation2 + $0x91] sm:$0xff]
  %v531 = vld [vmem:[#allocation2 + $0x99] sm:$0xff]
  %v532 = vld [vmem:[#allocation2 + $0xa1] sm:$0xff]
  %v533 = vld [vmem:[#allocation2 + $0xa9] sm:$0xff]
  %v534 = vld [vmem:[#allocation2 + $0xb1] sm:$0xff]
  %v535 = vld [vmem:[#allocation2 + $0xb9] sm:$0xff]
  %v536 = vld [vmem:[#allocation2 + $0xc1] sm:$0xff]
  %v537 = vld [vmem:[#allocation2 + $0xc9] sm:$0xff]
  %v538 = vld [vmem:[#allocation2 + $0xd1] sm:$0xff]
  %v539 = vld [vmem:[#allocation2 + $0xd9] sm:$0xff]
  %v540 = vld [vmem:[#allocation2 + $0xe0] sm:$0xff]
  %v541 = vld [vmem:[#allocation2 + $0xe8] sm:$0xff]
  %v542 = vld [vmem:[#allocation2 + $0xe1] sm:$0xff]
  %v543 = vld [vmem:[#allocation2 + $0xe9] sm:$0xff]
  %572 = vrot.lane.b32.xlu0 %v512, 16
  %v573 = vpop.permute.xlu0 %572
  %574 = vrot.lane.b32.xlu0 %v513, 16
  %v575 = vpop.permute.xlu0 %574
  %576 = vrot.lane.b32.xlu0 %v514, 16
  %v577 = vpop.permute.xlu0 %576
  %578 = vrot.lane.b32.xlu0 %v515, 16
  %v579 = vpop.permute.xlu0 %578
  %580 = vrot.lane.b32.xlu0 %v516, 16
  %v581 = vpop.permute.xlu0 %580
  %582 = vrot.lane.b32.xlu0 %v517, 16
  %v583 = vpop.permute.xlu0 %582
  %584 = vrot.lane.b32.xlu0 %v518, 16
  %v585 = vpop.permute.xlu0 %584
  %586 = vrot.lane.b32.xlu0 %v519, 16
  %v587 = vpop.permute.xlu0 %586
  %588 = vrot.lane.b32.xlu0 %v520, 16
  %v589 = vpop.permute.xlu0 %588
  %590 = vrot.lane.b32.xlu0 %v521, 16
  %v591 = vpop.permute.xlu0 %590
  %592 = vrot.lane.b32.xlu0 %v522, 16
  %v593 = vpop.permute.xlu0 %592
  %594 = vrot.lane.b32.xlu0 %v523, 16
  %v595 = vpop.permute.xlu0 %594
  %596 = vrot.lane.b32.xlu0 %v524, 16
  %v597 = vpop.permute.xlu0 %596
  %598 = vrot.lane.b32.xlu0 %v525, 16
  %v599 = vpop.permute.xlu0 %598
  %600 = vrot.lane.b32.xlu0 %v526, 16
  %v601 = vpop.permute.xlu0 %600
  %602 = vrot.lane.b32.xlu0 %v527, 16
  %v603 = vpop.permute.xlu0 %602
  %604 = vrot.lane.b32.xlu0 %v528, 16
  %v605 = vpop.permute.xlu0 %604
  %606 = vrot.lane.b32.xlu0 %v529, 16
  %v607 = vpop.permute.xlu0 %606
  %608 = vrot.lane.b32.xlu0 %v530, 16
  %v609 = vpop.permute.xlu0 %608
  %610 = vrot.lane.b32.xlu0 %v531, 16
  %v611 = vpop.permute.xlu0 %610
  %612 = vrot.lane.b32.xlu0 %v532, 16
  %v613 = vpop.permute.xlu0 %612
  %614 = vrot.lane.b32.xlu0 %v533, 16
  %v615 = vpop.permute.xlu0 %614
  %616 = vrot.lane.b32.xlu0 %v534, 16
  %v617 = vpop.permute.xlu0 %616
  %618 = vrot.lane.b32.xlu0 %v535, 16
  %v619 = vpop.permute.xlu0 %618
  %620 = vrot.lane.b32.xlu0 %v536, 16
  %v621 = vpop.permute.xlu0 %620
  %622 = vrot.lane.b32.xlu0 %v537, 16
  %v623 = vpop.permute.xlu0 %622
  %624 = vrot.lane.b32.xlu0 %v538, 16
  %v625 = vpop.permute.xlu0 %624
  %626 = vrot.lane.b32.xlu0 %v539, 16
  %v627 = vpop.permute.xlu0 %626
  %684 = vrot.lane.b32.xlu0 %v486, 32
  %v685 = vpop.permute.xlu0 %684
  %686 = vrot.lane.b32.xlu0 %v487, 32
  %v687 = vpop.permute.xlu0 %686
  %688 = vrot.lane.b32.xlu0 %v488, 32
  %v689 = vpop.permute.xlu0 %688
  %690 = vrot.lane.b32.xlu0 %v489, 32
  %v691 = vpop.permute.xlu0 %690
  %692 = vrot.lane.b32.xlu0 %v490, 32
  %v693 = vpop.permute.xlu0 %692
  %694 = vrot.lane.b32.xlu0 %v491, 32
  %v695 = vpop.permute.xlu0 %694
  %696 = vrot.lane.b32.xlu0 %v492, 32
  %v697 = vpop.permute.xlu0 %696
  %698 = vrot.lane.b32.xlu0 %v493, 32
  %v699 = vpop.permute.xlu0 %698
  %700 = vrot.lane.b32.xlu0 %v494, 32
  %v701 = vpop.permute.xlu0 %700
  %702 = vrot.lane.b32.xlu0 %v495, 32
  %v703 = vpop.permute.xlu0 %702
  %704 = vrot.lane.b32.xlu0 %v496, 32
  %v705 = vpop.permute.xlu0 %704
  %706 = vrot.lane.b32.xlu0 %v497, 32
  %v707 = vpop.permute.xlu0 %706
  %708 = vrot.lane.b32.xlu0 %v498, 32
  %v709 = vpop.permute.xlu0 %708
  %710 = vrot.lane.b32.xlu0 %v499, 32
  %v711 = vpop.permute.xlu0 %710
  %712 = vrot.lane.b32.xlu0 %v500, 32
  %v713 = vpop.permute.xlu0 %712
  %714 = vrot.lane.b32.xlu0 %v501, 32
  %v715 = vpop.permute.xlu0 %714
  %716 = vrot.lane.b32.xlu0 %v502, 32
  %v717 = vpop.permute.xlu0 %716
  %718 = vrot.lane.b32.xlu0 %v503, 32
  %v719 = vpop.permute.xlu0 %718
  %720 = vrot.lane.b32.xlu0 %v504, 32
  %v721 = vpop.permute.xlu0 %720
  %722 = vrot.lane.b32.xlu0 %v505, 32
  %v723 = vpop.permute.xlu0 %722
  %724 = vrot.lane.b32.xlu0 %v506, 32
  %v725 = vpop.permute.xlu0 %724
  %726 = vrot.lane.b32.xlu0 %v507, 32
  %v727 = vpop.permute.xlu0 %726
  %728 = vrot.lane.b32.xlu0 %v508, 32
  %v729 = vpop.permute.xlu0 %728
  %730 = vrot.lane.b32.xlu0 %v509, 32
  %v731 = vpop.permute.xlu0 %730
  %732 = vrot.lane.b32.xlu0 %v510, 32
  %v733 = vpop.permute.xlu0 %732
  %734 = vrot.lane.b32.xlu0 %v511, 32
  %v735 = vpop.permute.xlu0 %734
  %736 = vrot.lane.b32.xlu0 %v540, 32
  %v737 = vpop.permute.xlu0 %736
  %738 = vrot.lane.b32.xlu0 %v541, 32
  %v739 = vpop.permute.xlu0 %738
  %770 = vrot.lane.b32.xlu0 %v514, 48
  %v771 = vpop.permute.xlu0 %770
  %772 = vrot.lane.b32.xlu0 %v515, 48
  %v773 = vpop.permute.xlu0 %772
  %774 = vrot.lane.b32.xlu0 %v516, 48
  %v775 = vpop.permute.xlu0 %774
  %776 = vrot.lane.b32.xlu0 %v517, 48
  %v777 = vpop.permute.xlu0 %776
  %778 = vrot.lane.b32.xlu0 %v518, 48
  %v779 = vpop.permute.xlu0 %778
  %780 = vrot.lane.b32.xlu0 %v519, 48
  %v781 = vpop.permute.xlu0 %780
  %782 = vrot.lane.b32.xlu0 %v520, 48
  %v783 = vpop.permute.xlu0 %782
  %784 = vrot.lane.b32.xlu0 %v521, 48
  %v785 = vpop.permute.xlu0 %784
  %786 = vrot.lane.b32.xlu0 %v522, 48
  %v787 = vpop.permute.xlu0 %786
  %788 = vrot.lane.b32.xlu0 %v523, 48
  %v789 = vpop.permute.xlu0 %788
  %790 = vrot.lane.b32.xlu0 %v524, 48
  %v791 = vpop.permute.xlu0 %790
  %792 = vrot.lane.b32.xlu0 %v525, 48
  %v793 = vpop.permute.xlu0 %792
  %794 = vrot.lane.b32.xlu0 %v526, 48
  %v795 = vpop.permute.xlu0 %794
  %796 = vrot.lane.b32.xlu0 %v527, 48
  %v797 = vpop.permute.xlu0 %796
  %798 = vrot.lane.b32.xlu0 %v528, 48
  %v799 = vpop.permute.xlu0 %798
  %800 = vrot.lane.b32.xlu0 %v529, 48
  %v801 = vpop.permute.xlu0 %800
  %802 = vrot.lane.b32.xlu0 %v530, 48
  %v803 = vpop.permute.xlu0 %802
  %804 = vrot.lane.b32.xlu0 %v531, 48
  %v805 = vpop.permute.xlu0 %804
  %806 = vrot.lane.b32.xlu0 %v532, 48
  %v807 = vpop.permute.xlu0 %806
  %808 = vrot.lane.b32.xlu0 %v533, 48
  %v809 = vpop.permute.xlu0 %808
  %810 = vrot.lane.b32.xlu0 %v534, 48
  %v811 = vpop.permute.xlu0 %810
  %812 = vrot.lane.b32.xlu0 %v535, 48
  %v813 = vpop.permute.xlu0 %812
  %814 = vrot.lane.b32.xlu0 %v536, 48
  %v815 = vpop.permute.xlu0 %814
  %816 = vrot.lane.b32.xlu0 %v537, 48
  %v817 = vpop.permute.xlu0 %816
  %818 = vrot.lane.b32.xlu0 %v538, 48
  %v819 = vpop.permute.xlu0 %818
  %820 = vrot.lane.b32.xlu0 %v539, 48
  %v821 = vpop.permute.xlu0 %820
  %822 = vrot.lane.b32.xlu0 %v542, 48
  %v823 = vpop.permute.xlu0 %822
  %824 = vrot.lane.b32.xlu0 %v543, 48
  %v825 = vpop.permute.xlu0 %824
  %v854 = vsel %vm26, %v484, %v573
  %v855 = vsel %vm26, %v485, %v575
  %v856 = vsel %vm26, %v486, %v577
  %v857 = vsel %vm26, %v487, %v579
  %v858 = vsel %vm26, %v488, %v581
  %v859 = vsel %vm26, %v489, %v583
  %v860 = vsel %vm26, %v490, %v585
  %v861 = vsel %vm26, %v491, %v587
  %v862 = vsel %vm26, %v492, %v589
  %v863 = vsel %vm26, %v493, %v591
  %v864 = vsel %vm26, %v494, %v593
  %v865 = vsel %vm26, %v495, %v595
  %v866 = vsel %vm26, %v496, %v597
  %v867 = vsel %vm26, %v497, %v599
  %v868 = vsel %vm26, %v498, %v601
  %v869 = vsel %vm26, %v499, %v603
  %v870 = vsel %vm26, %v500, %v605
  %v871 = vsel %vm26, %v501, %v607
  %v872 = vsel %vm26, %v502, %v609
  %v873 = vsel %vm26, %v503, %v611
  %v874 = vsel %vm26, %v504, %v613
  %v875 = vsel %vm26, %v505, %v615
  %v876 = vsel %vm26, %v506, %v617
  %v877 = vsel %vm26, %v507, %v619
  %v878 = vsel %vm26, %v508, %v621
  %v879 = vsel %vm26, %v509, %v623
  %v880 = vsel %vm26, %v510, %v625
  %v881 = vsel %vm26, %v511, %v627
  %v882 = vsel %vm28, %v854, %v685
  %v883 = vsel %vm28, %v855, %v687
  %v884 = vsel %vm28, %v856, %v689
  %v885 = vsel %vm28, %v857, %v691
  %v886 = vsel %vm28, %v858, %v693
  %v887 = vsel %vm28, %v859, %v695
  %v888 = vsel %vm28, %v860, %v697
  %v889 = vsel %vm28, %v861, %v699
  %v890 = vsel %vm28, %v862, %v701
  %v891 = vsel %vm28, %v863, %v703
  %v892 = vsel %vm28, %v864, %v705
  %v893 = vsel %vm28, %v865, %v707
  %v894 = vsel %vm28, %v866, %v709
  %v895 = vsel %vm28, %v867, %v711
  %v896 = vsel %vm28, %v868, %v713
  %v897 = vsel %vm28, %v869, %v715
  %v898 = vsel %vm28, %v870, %v717
  %v899 = vsel %vm28, %v871, %v719
  %v900 = vsel %vm28, %v872, %v721
  %v901 = vsel %vm28, %v873, %v723
  %v902 = vsel %vm28, %v874, %v725
  %v903 = vsel %vm28, %v875, %v727
  %v904 = vsel %vm28, %v876, %v729
  %v905 = vsel %vm28, %v877, %v731
  %v906 = vsel %vm28, %v878, %v733
  %v907 = vsel %vm28, %v879, %v735
  %v908 = vsel %vm28, %v880, %v737
  %v909 = vsel %vm28, %v881, %v739
  %vm910 = vcmask 392192
  %v911 = vsel %vm910, %v882, %v771
  %v912 = vsel %vm910, %v883, %v773
  %v913 = vsel %vm910, %v884, %v775
  %v914 = vsel %vm910, %v885, %v777
  %v915 = vsel %vm910, %v886, %v779
  %v916 = vsel %vm910, %v887, %v781
  %v917 = vsel %vm910, %v888, %v783
  %v918 = vsel %vm910, %v889, %v785
  %v919 = vsel %vm910, %v890, %v787
  %v920 = vsel %vm910, %v891, %v789
  %v921 = vsel %vm910, %v892, %v791
  %v922 = vsel %vm910, %v893, %v793
  %v923 = vsel %vm910, %v894, %v795
  %v924 = vsel %vm910, %v895, %v797
  %v925 = vsel %vm910, %v896, %v799
  %v926 = vsel %vm910, %v897, %v801
  %v927 = vsel %vm910, %v898, %v803
  %v928 = vsel %vm910, %v899, %v805
  %v929 = vsel %vm910, %v900, %v807
  %v930 = vsel %vm910, %v901, %v809
  %v931 = vsel %vm910, %v902, %v811
  %v932 = vsel %vm910, %v903, %v813
  %v933 = vsel %vm910, %v904, %v815
  %v934 = vsel %vm910, %v905, %v817
  %v935 = vsel %vm910, %v906, %v819
  %v936 = vsel %vm910, %v907, %v821
  %v937 = vsel %vm910, %v908, %v823
  %v938 = vsel %vm910, %v909, %v825
  %v940 = vlaneseq
  %v941 = vshrl.u32 %v940, 7
  %v942 = vsub.s32 0, %v941
  %v943 = vrot.slane %v40, %v942
  %vm945 = vcmask 523264
  %v947 = vsel %vm945, %v911, 0
  %v950 = vsel %vm945, %v912, 0
  %v953 = vsel %vm945, %v913, 0
  %v956 = vsel %vm945, %v914, 0
  %v959 = vsel %vm945, %v915, 0
  %v962 = vsel %vm945, %v916, 0
  %v965 = vsel %vm945, %v917, 0
  %v968 = vsel %vm945, %v918, 0
  %v971 = vsel %vm945, %v919, 0
  %v974 = vsel %vm945, %v920, 0
  %v977 = vsel %vm945, %v921, 0
  %v980 = vsel %vm945, %v922, 0
  %v983 = vsel %vm945, %v923, 0
  %v986 = vsel %vm945, %v924, 0
  %v989 = vsel %vm945, %v925, 0
  %v992 = vsel %vm945, %v926, 0
  %v995 = vsel %vm945, %v927, 0
  %v998 = vsel %vm945, %v928, 0
  %v1001 = vsel %vm945, %v929, 0
  %v1004 = vsel %vm945, %v930, 0
  %v1007 = vsel %vm945, %v931, 0
  %v1010 = vsel %vm945, %v932, 0
  %v1013 = vsel %vm945, %v933, 0
  %v1016 = vsel %vm945, %v934, 0
  %v1019 = vsel %vm945, %v935, 0
  %v1022 = vsel %vm945, %v936, 0
  %v1025 = vsel %vm945, %v937, 0
  %v1028 = vsel %vm945, %v938, 0
  %1030 = vmatprep.subr.mxu0 0.0
  %1031 = vmatpush1.msra.mxu0 %v32
  %1032 = vmatprep.subr.mxu0 0.0
  %1033 = vmatpush1.msra.mxu0 %v33
  %1034 = vmatprep.subr.mxu0 0.0
  %1035 = vmatpush1.msra.mxu0 %v34
  %1036 = vmatprep.subr.mxu0 0.0
  %1037 = vmatpush1.msra.mxu0 %v35
  %1038 = vmatprep.subr.mxu0 0.0
  %1039 = vmatpush1.msra.mxu0 %v36
  %1040 = vmatprep.subr.mxu0 0.0
  %1041 = vmatpush1.msra.mxu0 %v37
  %1042 = vmatprep.subr.mxu0 0.0
  %1043 = vmatpush1.msra.mxu0 %v38
  %1044 = vmatprep.subr.mxu0 0.0
  %1045 = vmatpush1.msra.mxu0 %v39
  %1046 = vmatprep.subr.mxu0 0.0
  %1047 = vmatpush1.msra.mxu0 0.0
  %1048 = vmatprep.subr.mxu0 0.0
  %1049 = vmatpush1.msra.mxu0 0.0
  %1050 = vmatprep.subr.mxu0 0.0
  %1051 = vmatpush1.msra.mxu0 0.0
  %1052 = vmatprep.subr.mxu0 0.0
  %1053 = vmatpush1.msra.mxu0 0.0
  %1054 = vmatprep.subr.mxu0 0.0
  %1055 = vmatpush1.msra.mxu0 0.0
  %1056 = vmatprep.subr.mxu0 0.0
  %1057 = vmatpush1.msra.mxu0 0.0
  %1058 = vmatprep.subr.mxu0 0.0
  %1059 = vmatpush1.msra.mxu0 0.0
  %1060 = vmatprep.subr.mxu0 0.0
  %1061 = vmatpush1.msra.mxu0 0.0
  %1062 = vmatprep.subr.mxu0 0.0
  %1063 = vmatpush1.msra.mxu0 0.0
  %1064 = vmatprep.subr.mxu0 0.0
  %1065 = vmatpush1.msra.mxu0 0.0
  %1066 = vmatprep.subr.mxu0 0.0
  %1067 = vmatpush1.msra.mxu0 0.0
  %1068 = vmatprep.subr.mxu0 0.0
  %1069 = vmatpush1.msra.mxu0 0.0
  %1070 = vmatprep.subr.mxu0 0.0
  %1071 = vmatpush1.msra.mxu0 0.0
  %1072 = vmatprep.subr.mxu0 0.0
  %1073 = vmatpush1.msra.mxu0 0.0
  %1074 = vmatprep.subr.mxu0 0.0
  %1075 = vmatpush1.msra.mxu0 0.0
  %1076 = vmatprep.subr.mxu0 0.0
  %1077 = vmatpush1.msra.mxu0 0.0
  %1078 = vmatprep.subr.mxu0 0.0
  %1079 = vmatpush1.msra.mxu0 0.0
  %1080 = vmatprep.subr.mxu0 0.0
  %1081 = vmatpush1.msra.mxu0 0.0
  %1082 = vmatprep.subr.mxu0 0.0
  %1083 = vmatpush1.msra.mxu0 0.0
  %1084 = vmatprep.subr.mxu0 0.0
  %1085 = vmatpush1.msra.mxu0 0.0
  %1086 = vmatprep.subr.mxu0 0.0
  %1087 = vmatpush1.msra.mxu0 0.0
  %1088 = vmatprep.subr.mxu0 0.0
  %1089 = vmatpush1.msra.mxu0 0.0
  %1090 = vmatprep.subr.mxu0 0.0
  %1091 = vmatpush1.msra.mxu0 0.0
  %1092 = vmatprep.subr.mxu0 0.0
  %1093 = vmatpush1.msra.mxu0 0.0
  %1094 = vmatprep.mubr.f32.mxu0 0.0
  %1095 = vmatmul.mubr.f32.gmra.mrb[0].mxu0 %v947
  %v1096 = vpop.f32.mrb[0].mxu0
  %v1097 = vadd.f32 %v943, %v1096
  %v1098 = vpop.f32.mrb[0].mxu0
  %1099 = vmatprep.mubr.f32.mxu0 0.0
  %1100 = vmatmul.mubr.f32.gmra.mrb[0].mxu0 %v950
  %v1101 = vpop.f32.mrb[0].mxu0
  %v1102 = vadd.f32 %v943, %v1101
  %v1103 = vpop.f32.mrb[0].mxu0
  %1104 = vmatprep.mubr.f32.mxu0 0.0
  %1105 = vmatmul.mubr.f32.gmra.mrb[0].mxu0 %v953
  %v1106 = vpop.f32.mrb[0].mxu0
  %v1107 = vadd.f32 %v943, %v1106
  %v1108 = vpop.f32.mrb[0].mxu0
  %1109 = vmatprep.mubr.f32.mxu0 0.0
  %1110 = vmatmul.mubr.f32.gmra.mrb[0].mxu0 %v956
  %v1111 = vpop.f32.mrb[0].mxu0
  %v1112 = vadd.f32 %v943, %v1111
  %v1113 = vpop.f32.mrb[0].mxu0
  %1114 = vmatprep.mubr.f32.mxu0 0.0
  %1115 = vmatmul.mubr.f32.gmra.mrb[0].mxu0 %v959
  %v1116 = vpop.f32.mrb[0].mxu0
  %v1117 = vadd.f32 %v943, %v1116
  %v1118 = vpop.f32.mrb[0].mxu0
  %1119 = vmatprep.mubr.f32.mxu0 0.0
  %1120 = vmatmul.mubr.f32.gmra.mrb[0].mxu0 %v962
  %v1121 = vpop.f32.mrb[0].mxu0
  %v1122 = vadd.f32 %v943, %v1121
  %v1123 = vpop.f32.mrb[0].mxu0
  %1124 = vmatprep.mubr.f32.mxu0 0.0
  %1125 = vmatmul.mubr.f32.gmra.mrb[0].mxu0 %v965
  %v1126 = vpop.f32.mrb[0].mxu0
  %v1127 = vadd.f32 %v943, %v1126
  %v1128 = vpop.f32.mrb[0].mxu0
  %1129 = vmatprep.mubr.f32.mxu0 0.0
  %1130 = vmatmul.mubr.f32.gmra.mrb[0].mxu0 %v968
  %v1131 = vpop.f32.mrb[0].mxu0
  %v1132 = vadd.f32 %v943, %v1131
  %v1133 = vpop.f32.mrb[0].mxu0
  %1134 = vmatprep.mubr.f32.mxu0 0.0
  %1135 = vmatmul.mubr.f32.gmra.mrb[0].mxu0 %v971
  %v1136 = vpop.f32.mrb[0].mxu0
  %v1137 = vadd.f32 %v943, %v1136
  %v1138 = vpop.f32.mrb[0].mxu0
  %1139 = vmatprep.mubr.f32.mxu0 0.0
  %1140 = vmatmul.mubr.f32.gmra.mrb[0].mxu0 %v974
  %v1141 = vpop.f32.mrb[0].mxu0
  %v1142 = vadd.f32 %v943, %v1141
  %v1143 = vpop.f32.mrb[0].mxu0
  %1144 = vmatprep.mubr.f32.mxu0 0.0
  %1145 = vmatmul.mubr.f32.gmra.mrb[0].mxu0 %v977
  %v1146 = vpop.f32.mrb[0].mxu0
  %v1147 = vadd.f32 %v943, %v1146
  %v1148 = vpop.f32.mrb[0].mxu0
  %1149 = vmatprep.mubr.f32.mxu0 0.0
  %1150 = vmatmul.mubr.f32.gmra.mrb[0].mxu0 %v980
  %v1151 = vpop.f32.mrb[0].mxu0
  %v1152 = vadd.f32 %v943, %v1151
  %v1153 = vpop.f32.mrb[0].mxu0
  %1154 = vmatprep.mubr.f32.mxu0 0.0
  %1155 = vmatmul.mubr.f32.gmra.mrb[0].mxu0 %v983
  %v1156 = vpop.f32.mrb[0].mxu0
  %v1157 = vadd.f32 %v943, %v1156
  %v1158 = vpop.f32.mrb[0].mxu0
  %1159 = vmatprep.mubr.f32.mxu0 0.0
  %1160 = vmatmul.mubr.f32.gmra.mrb[0].mxu0 %v986
  %v1161 = vpop.f32.mrb[0].mxu0
  %v1162 = vadd.f32 %v943, %v1161
  %v1163 = vpop.f32.mrb[0].mxu0
  %1164 = vmatprep.mubr.f32.mxu0 0.0
  %1165 = vmatmul.mubr.f32.gmra.mrb[0].mxu0 %v989
  %v1166 = vpop.f32.mrb[0].mxu0
  %v1167 = vadd.f32 %v943, %v1166
  %v1168 = vpop.f32.mrb[0].mxu0
  %1169 = vmatprep.mubr.f32.mxu0 0.0
  %1170 = vmatmul.mubr.f32.gmra.mrb[0].mxu0 %v992
  %v1171 = vpop.f32.mrb[0].mxu0
  %v1172 = vadd.f32 %v943, %v1171
  %v1173 = vpop.f32.mrb[0].mxu0
  %1174 = vmatprep.mubr.f32.mxu0 0.0
  %1175 = vmatmul.mubr.f32.gmra.mrb[0].mxu0 %v995
  %v1176 = vpop.f32.mrb[0].mxu0
  %v1177 = vadd.f32 %v943, %v1176
  %v1178 = vpop.f32.mrb[0].mxu0
  %1179 = vmatprep.mubr.f32.mxu0 0.0
  %1180 = vmatmul.mubr.f32.gmra.mrb[0].mxu0 %v998
  %v1181 = vpop.f32.mrb[0].mxu0
  %v1182 = vadd.f32 %v943, %v1181
  %v1183 = vpop.f32.mrb[0].mxu0
  %1184 = vmatprep.mubr.f32.mxu0 0.0
  %1185 = vmatmul.mubr.f32.gmra.mrb[0].mxu0 %v1001
  %v1186 = vpop.f32.mrb[0].mxu0
  %v1187 = vadd.f32 %v943, %v1186
  %v1188 = vpop.f32.mrb[0].mxu0
  %1189 = vmatprep.mubr.f32.mxu0 0.0
  %1190 = vmatmul.mubr.f32.gmra.mrb[0].mxu0 %v1004
  %v1191 = vpop.f32.mrb[0].mxu0
  %v1192 = vadd.f32 %v943, %v1191
  %v1193 = vpop.f32.mrb[0].mxu0
  %1194 = vmatprep.mubr.f32.mxu0 0.0
  %1195 = vmatmul.mubr.f32.gmra.mrb[0].mxu0 %v1007
  %v1196 = vpop.f32.mrb[0].mxu0
  %v1197 = vadd.f32 %v943, %v1196
  %v1198 = vpop.f32.mrb[0].mxu0
  %1199 = vmatprep.mubr.f32.mxu0 0.0
  %1200 = vmatmul.mubr.f32.gmra.mrb[0].mxu0 %v1010
  %v1201 = vpop.f32.mrb[0].mxu0
  %v1202 = vadd.f32 %v943, %v1201
  %v1203 = vpop.f32.mrb[0].mxu0
  %1204 = vmatprep.mubr.f32.mxu0 0.0
  %1205 = vmatmul.mubr.f32.gmra.mrb[0].mxu0 %v1013
  %v1206 = vpop.f32.mrb[0].mxu0
  %v1207 = vadd.f32 %v943, %v1206
  %v1208 = vpop.f32.mrb[0].mxu0
  %1209 = vmatprep.mubr.f32.mxu0 0.0
  %1210 = vmatmul.mubr.f32.gmra.mrb[0].mxu0 %v1016
  %v1211 = vpop.f32.mrb[0].mxu0
  %v1212 = vadd.f32 %v943, %v1211
  %v1213 = vpop.f32.mrb[0].mxu0
  %1214 = vmatprep.mubr.f32.mxu0 0.0
  %1215 = vmatmul.mubr.f32.gmra.mrb[0].mxu0 %v1019
  %v1216 = vpop.f32.mrb[0].mxu0
  %v1217 = vadd.f32 %v943, %v1216
  %v1218 = vpop.f32.mrb[0].mxu0
  %1219 = vmatprep.mubr.f32.mxu0 0.0
  %1220 = vmatmul.mubr.f32.gmra.mrb[0].mxu0 %v1022
  %v1221 = vpop.f32.mrb[0].mxu0
  %v1222 = vadd.f32 %v943, %v1221
  %v1223 = vpop.f32.mrb[0].mxu0
  %1224 = vmatprep.mubr.f32.mxu0 0.0
  %1225 = vmatmul.mubr.f32.gmra.mrb[0].mxu0 %v1025
  %v1226 = vpop.f32.mrb[0].mxu0
  %v1227 = vadd.f32 %v943, %v1226
  %v1228 = vpop.f32.mrb[0].mxu0
  %1229 = vmatprep.mubr.f32.mxu0 0.0
  %1230 = vmatmul.mubr.f32.gmra.mrb[0].mxu0 %v1028
  %v1231 = vpop.f32.mrb[0].mxu0
  %v1232 = vadd.f32 %v943, %v1231
  %v1233 = vpop.f32.mrb[0].mxu0
  %1234 = vdwg.mxu0
  %v1235 = vmax.f32 %v1097, 0.0
  %v1236 = vmax.f32 %v1102, 0.0
  %v1237 = vmax.f32 %v1107, 0.0
  %v1238 = vmax.f32 %v1112, 0.0
  %v1239 = vmax.f32 %v1117, 0.0
  %v1240 = vmax.f32 %v1122, 0.0
  %v1241 = vmax.f32 %v1127, 0.0
  %v1242 = vmax.f32 %v1132, 0.0
  %v1243 = vmax.f32 %v1137, 0.0
  %v1244 = vmax.f32 %v1142, 0.0
  %v1245 = vmax.f32 %v1147, 0.0
  %v1246 = vmax.f32 %v1152, 0.0
  %v1247 = vmax.f32 %v1157, 0.0
  %v1248 = vmax.f32 %v1162, 0.0
  %v1249 = vmax.f32 %v1167, 0.0
  %v1250 = vmax.f32 %v1172, 0.0
  %v1251 = vmax.f32 %v1177, 0.0
  %v1252 = vmax.f32 %v1182, 0.0
  %v1253 = vmax.f32 %v1187, 0.0
  %v1254 = vmax.f32 %v1192, 0.0
  %v1255 = vmax.f32 %v1197, 0.0
  %v1256 = vmax.f32 %v1202, 0.0
  %v1257 = vmax.f32 %v1207, 0.0
  %v1258 = vmax.f32 %v1212, 0.0
  %v1259 = vmax.f32 %v1217, 0.0
  %v1260 = vmax.f32 %v1222, 0.0
  %v1261 = vmax.f32 %v1227, 0.0
  %v1262 = vmax.f32 %v1232, 0.0
  %1263 = vst.msk [vmem:[#allocation3] sm:$0xff] %vm28, %v1235
  %1264 = vst.msk [vmem:[#allocation3 + $0x8] sm:$0xff] %vm28, %v1236
  %1265 = vst.msk [vmem:[#allocation3 + $0x10] sm:$0xff] %vm28, %v1237
  %1266 = vst.msk [vmem:[#allocation3 + $0x18] sm:$0xff] %vm28, %v1238
  %1267 = vst.msk [vmem:[#allocation3 + $0x20] sm:$0xff] %vm28, %v1239
  %1268 = vst.msk [vmem:[#allocation3 + $0x28] sm:$0xff] %vm28, %v1240
  %1269 = vst.msk [vmem:[#allocation3 + $0x30] sm:$0xff] %vm28, %v1241
  %1270 = vst.msk [vmem:[#allocation3 + $0x38] sm:$0xff] %vm28, %v1242
  %1271 = vst.msk [vmem:[#allocation3 + $0x40] sm:$0xff] %vm28, %v1243
  %1272 = vst.msk [vmem:[#allocation3 + $0x48] sm:$0xff] %vm28, %v1244
  %1273 = vst.msk [vmem:[#allocation3 + $0x50] sm:$0xff] %vm28, %v1245
  %1274 = vst.msk [vmem:[#allocation3 + $0x58] sm:$0xff] %vm28, %v1246
  %1275 = vst.msk [vmem:[#allocation3 + $0x60] sm:$0xff] %vm28, %v1247
  %1276 = vst.msk [vmem:[#allocation3 + $0x68] sm:$0xff] %vm28, %v1248
  %1277 = vst.msk [vmem:[#allocation3 + $0x70] sm:$0xff] %vm28, %v1249
  %1278 = vst.msk [vmem:[#allocation3 + $0x78] sm:$0xff] %vm28, %v1250
  %1279 = vst.msk [vmem:[#allocation3 + $0x80] sm:$0xff] %vm28, %v1251
  %1280 = vst.msk [vmem:[#allocation3 + $0x88] sm:$0xff] %vm28, %v1252
  %1281 = vst.msk [vmem:[#allocation3 + $0x90] sm:$0xff] %vm28, %v1253
  %1282 = vst.msk [vmem:[#allocation3 + $0x98] sm:$0xff] %vm28, %v1254
  %1283 = vst.msk [vmem:[#allocation3 + $0xa0] sm:$0xff] %vm28, %v1255
  %1284 = vst.msk [vmem:[#allocation3 + $0xa8] sm:$0xff] %vm28, %v1256
  %1285 = vst.msk [vmem:[#allocation3 + $0xb0] sm:$0xff] %vm28, %v1257
  %1286 = vst.msk [vmem:[#allocation3 + $0xb8] sm:$0xff] %vm28, %v1258
  %1287 = vst.msk [vmem:[#allocation3 + $0xc0] sm:$0xff] %vm28, %v1259
  %1288 = vst.msk [vmem:[#allocation3 + $0xc8] sm:$0xff] %vm28, %v1260
  %1289 = vst.msk [vmem:[#allocation3 + $0xd0] sm:$0xff] %vm28, %v1261
  %1290 = vst.msk [vmem:[#allocation3 + $0xd8] sm:$0xff] %vm28, %v1262
  %v1291 = vld [vmem:[#allocation3] sm:$0xff]
  %v1292 = vld [vmem:[#allocation3 + $0x8] sm:$0xff]
  %v1293 = vld [vmem:[#allocation3 + $0x10] sm:$0xff]
  %v1294 = vld [vmem:[#allocation3 + $0x18] sm:$0xff]
  %v1295 = vld [vmem:[#allocation3 + $0x20] sm:$0xff]
  %v1296 = vld [vmem:[#allocation3 + $0x28] sm:$0xff]
  %v1297 = vld [vmem:[#allocation3 + $0x30] sm:$0xff]
  %v1298 = vld [vmem:[#allocation3 + $0x38] sm:$0xff]
  %v1299 = vld [vmem:[#allocation3 + $0x40] sm:$0xff]
  %v1300 = vld [vmem:[#allocation3 + $0x48] sm:$0xff]
  %v1301 = vld [vmem:[#allocation3 + $0x50] sm:$0xff]
  %v1302 = vld [vmem:[#allocation3 + $0x58] sm:$0xff]
  %v1303 = vld [vmem:[#allocation3 + $0x60] sm:$0xff]
  %v1304 = vld [vmem:[#allocation3 + $0x68] sm:$0xff]
  %v1305 = vld [vmem:[#allocation3 + $0x70] sm:$0xff]
  %v1306 = vld [vmem:[#allocation3 + $0x78] sm:$0xff]
  %v1307 = vld [vmem:[#allocation3 + $0x80] sm:$0xff]
  %v1308 = vld [vmem:[#allocation3 + $0x88] sm:$0xff]
  %v1309 = vld [vmem:[#allocation3 + $0x90] sm:$0xff]
  %v1310 = vld [vmem:[#allocation3 + $0x98] sm:$0xff]
  %v1311 = vld [vmem:[#allocation3 + $0xa0] sm:$0xff]
  %v1312 = vld [vmem:[#allocation3 + $0xa8] sm:$0xff]
  %v1313 = vld [vmem:[#allocation3 + $0xb0] sm:$0xff]
  %v1314 = vld [vmem:[#allocation3 + $0xb8] sm:$0xff]
  %v1315 = vld [vmem:[#allocation3 + $0x1] sm:$0xff]
  %v1316 = vld [vmem:[#allocation3 + $0x9] sm:$0xff]
  %v1317 = vld [vmem:[#allocation3 + $0x11] sm:$0xff]
  %v1318 = vld [vmem:[#allocation3 + $0x19] sm:$0xff]
  %v1319 = vld [vmem:[#allocation3 + $0x21] sm:$0xff]
  %v1320 = vld [vmem:[#allocation3 + $0x29] sm:$0xff]
  %v1321 = vld [vmem:[#allocation3 + $0x31] sm:$0xff]
  %v1322 = vld [vmem:[#allocation3 + $0x39] sm:$0xff]
  %v1323 = vld [vmem:[#allocation3 + $0x41] sm:$0xff]
  %v1324 = vld [vmem:[#allocation3 + $0x49] sm:$0xff]
  %v1325 = vld [vmem:[#allocation3 + $0x51] sm:$0xff]
  %v1326 = vld [vmem:[#allocation3 + $0x59] sm:$0xff]
  %v1327 = vld [vmem:[#allocation3 + $0x61] sm:$0xff]
  %v1328 = vld [vmem:[#allocation3 + $0x69] sm:$0xff]
  %v1329 = vld [vmem:[#allocation3 + $0x71] sm:$0xff]
  %v1330 = vld [vmem:[#allocation3 + $0x79] sm:$0xff]
  %v1331 = vld [vmem:[#allocation3 + $0x81] sm:$0xff]
  %v1332 = vld [vmem:[#allocation3 + $0x89] sm:$0xff]
  %v1333 = vld [vmem:[#allocation3 + $0x91] sm:$0xff]
  %v1334 = vld [vmem:[#allocation3 + $0x99] sm:$0xff]
  %v1335 = vld [vmem:[#allocation3 + $0xa1] sm:$0xff]
  %v1336 = vld [vmem:[#allocation3 + $0xa9] sm:$0xff]
  %v1337 = vld [vmem:[#allocation3 + $0xb1] sm:$0xff]
  %v1338 = vld [vmem:[#allocation3 + $0xb9] sm:$0xff]
  %v1339 = vld [vmem:[#allocation3 + $0x2] sm:$0xff]
  %v1340 = vld [vmem:[#allocation3 + $0xa] sm:$0xff]
  %v1341 = vld [vmem:[#allocation3 + $0x12] sm:$0xff]
  %v1342 = vld [vmem:[#allocation3 + $0x1a] sm:$0xff]
  %v1343 = vld [vmem:[#allocation3 + $0x22] sm:$0xff]
  %v1344 = vld [vmem:[#allocation3 + $0x2a] sm:$0xff]
  %v1345 = vld [vmem:[#allocation3 + $0x32] sm:$0xff]
  %v1346 = vld [vmem:[#allocation3 + $0x3a] sm:$0xff]
  %v1347 = vld [vmem:[#allocation3 + $0x42] sm:$0xff]
  %v1348 = vld [vmem:[#allocation3 + $0x4a] sm:$0xff]
  %v1349 = vld [vmem:[#allocation3 + $0x52] sm:$0xff]
  %v1350 = vld [vmem:[#allocation3 + $0x5a] sm:$0xff]
  %v1351 = vld [vmem:[#allocation3 + $0x62] sm:$0xff]
  %v1352 = vld [vmem:[#allocation3 + $0x6a] sm:$0xff]
  %v1353 = vld [vmem:[#allocation3 + $0x72] sm:$0xff]
  %v1354 = vld [vmem:[#allocation3 + $0x7a] sm:$0xff]
  %v1355 = vld [vmem:[#allocation3 + $0x82] sm:$0xff]
  %v1356 = vld [vmem:[#allocation3 + $0x8a] sm:$0xff]
  %v1357 = vld [vmem:[#allocation3 + $0x92] sm:$0xff]
  %v1358 = vld [vmem:[#allocation3 + $0x9a] sm:$0xff]
  %v1359 = vld [vmem:[#allocation3 + $0xa2] sm:$0xff]
  %v1360 = vld [vmem:[#allocation3 + $0xaa] sm:$0xff]
  %v1361 = vld [vmem:[#allocation3 + $0xb2] sm:$0xff]
  %v1362 = vld [vmem:[#allocation3 + $0xba] sm:$0xff]
  %v1363 = vld [vmem:[#allocation3 + $0xc0] sm:$0xff]
  %v1364 = vld [vmem:[#allocation3 + $0xc8] sm:$0xff]
  %v1365 = vld [vmem:[#allocation3 + $0xc1] sm:$0xff]
  %v1366 = vld [vmem:[#allocation3 + $0xc9] sm:$0xff]
  %v1367 = vld [vmem:[#allocation3 + $0xc2] sm:$0xff]
  %v1368 = vld [vmem:[#allocation3 + $0xca] sm:$0xff]
  %v1369 = vld [vmem:[#allocation3 + $0xd0] sm:$0xff]
  %v1370 = vld [vmem:[#allocation3 + $0xd8] sm:$0xff]
  %v1371 = vld [vmem:[#allocation3 + $0xd1] sm:$0xff]
  %v1372 = vld [vmem:[#allocation3 + $0xd9] sm:$0xff]
  %v1373 = vld [vmem:[#allocation3 + $0xd2] sm:$0xff]
  %v1374 = vld [vmem:[#allocation3 + $0xda] sm:$0xff]
  %1399 = vrot.lane.b32.xlu0 %v1315, 32
  %v1400 = vpop.permute.xlu0 %1399
  %1401 = vrot.lane.b32.xlu0 %v1316, 32
  %v1402 = vpop.permute.xlu0 %1401
  %1403 = vrot.lane.b32.xlu0 %v1317, 32
  %v1404 = vpop.permute.xlu0 %1403
  %1405 = vrot.lane.b32.xlu0 %v1318, 32
  %v1406 = vpop.permute.xlu0 %1405
  %1407 = vrot.lane.b32.xlu0 %v1319, 32
  %v1408 = vpop.permute.xlu0 %1407
  %1409 = vrot.lane.b32.xlu0 %v1320, 32
  %v1410 = vpop.permute.xlu0 %1409
  %1411 = vrot.lane.b32.xlu0 %v1321, 32
  %v1412 = vpop.permute.xlu0 %1411
  %1413 = vrot.lane.b32.xlu0 %v1322, 32
  %v1414 = vpop.permute.xlu0 %1413
  %1415 = vrot.lane.b32.xlu0 %v1323, 32
  %v1416 = vpop.permute.xlu0 %1415
  %1417 = vrot.lane.b32.xlu0 %v1324, 32
  %v1418 = vpop.permute.xlu0 %1417
  %1419 = vrot.lane.b32.xlu0 %v1325, 32
  %v1420 = vpop.permute.xlu0 %1419
  %1421 = vrot.lane.b32.xlu0 %v1326, 32
  %v1422 = vpop.permute.xlu0 %1421
  %1423 = vrot.lane.b32.xlu0 %v1327, 32
  %v1424 = vpop.permute.xlu0 %1423
  %1425 = vrot.lane.b32.xlu0 %v1328, 32
  %v1426 = vpop.permute.xlu0 %1425
  %1427 = vrot.lane.b32.xlu0 %v1329, 32
  %v1428 = vpop.permute.xlu0 %1427
  %1429 = vrot.lane.b32.xlu0 %v1330, 32
  %v1430 = vpop.permute.xlu0 %1429
  %1431 = vrot.lane.b32.xlu0 %v1331, 32
  %v1432 = vpop.permute.xlu0 %1431
  %1433 = vrot.lane.b32.xlu0 %v1332, 32
  %v1434 = vpop.permute.xlu0 %1433
  %1435 = vrot.lane.b32.xlu0 %v1333, 32
  %v1436 = vpop.permute.xlu0 %1435
  %1437 = vrot.lane.b32.xlu0 %v1334, 32
  %v1438 = vpop.permute.xlu0 %1437
  %1439 = vrot.lane.b32.xlu0 %v1335, 32
  %v1440 = vpop.permute.xlu0 %1439
  %1441 = vrot.lane.b32.xlu0 %v1336, 32
  %v1442 = vpop.permute.xlu0 %1441
  %1443 = vrot.lane.b32.xlu0 %v1337, 32
  %v1444 = vpop.permute.xlu0 %1443
  %1445 = vrot.lane.b32.xlu0 %v1338, 32
  %v1446 = vpop.permute.xlu0 %1445
  %1495 = vrot.lane.b32.xlu0 %v1339, 64
  %v1496 = vpop.permute.xlu0 %1495
  %1497 = vrot.lane.b32.xlu0 %v1340, 64
  %v1498 = vpop.permute.xlu0 %1497
  %1499 = vrot.lane.b32.xlu0 %v1341, 64
  %v1500 = vpop.permute.xlu0 %1499
  %1501 = vrot.lane.b32.xlu0 %v1342, 64
  %v1502 = vpop.permute.xlu0 %1501
  %1503 = vrot.lane.b32.xlu0 %v1343, 64
  %v1504 = vpop.permute.xlu0 %1503
  %1505 = vrot.lane.b32.xlu0 %v1344, 64
  %v1506 = vpop.permute.xlu0 %1505
  %1507 = vrot.lane.b32.xlu0 %v1345, 64
  %v1508 = vpop.permute.xlu0 %1507
  %1509 = vrot.lane.b32.xlu0 %v1346, 64
  %v1510 = vpop.permute.xlu0 %1509
  %1511 = vrot.lane.b32.xlu0 %v1347, 64
  %v1512 = vpop.permute.xlu0 %1511
  %1513 = vrot.lane.b32.xlu0 %v1348, 64
  %v1514 = vpop.permute.xlu0 %1513
  %1515 = vrot.lane.b32.xlu0 %v1349, 64
  %v1516 = vpop.permute.xlu0 %1515
  %1517 = vrot.lane.b32.xlu0 %v1350, 64
  %v1518 = vpop.permute.xlu0 %1517
  %1519 = vrot.lane.b32.xlu0 %v1351, 64
  %v1520 = vpop.permute.xlu0 %1519
  %1521 = vrot.lane.b32.xlu0 %v1352, 64
  %v1522 = vpop.permute.xlu0 %1521
  %1523 = vrot.lane.b32.xlu0 %v1353, 64
  %v1524 = vpop.permute.xlu0 %1523
  %1525 = vrot.lane.b32.xlu0 %v1354, 64
  %v1526 = vpop.permute.xlu0 %1525
  %1527 = vrot.lane.b32.xlu0 %v1355, 64
  %v1528 = vpop.permute.xlu0 %1527
  %1529 = vrot.lane.b32.xlu0 %v1356, 64
  %v1530 = vpop.permute.xlu0 %1529
  %1531 = vrot.lane.b32.xlu0 %v1357, 64
  %v1532 = vpop.permute.xlu0 %1531
  %1533 = vrot.lane.b32.xlu0 %v1358, 64
  %v1534 = vpop.permute.xlu0 %1533
  %1535 = vrot.lane.b32.xlu0 %v1359, 64
  %v1536 = vpop.permute.xlu0 %1535
  %1537 = vrot.lane.b32.xlu0 %v1360, 64
  %v1538 = vpop.permute.xlu0 %1537
  %1539 = vrot.lane.b32.xlu0 %v1361, 64
  %v1540 = vpop.permute.xlu0 %1539
  %1541 = vrot.lane.b32.xlu0 %v1362, 64
  %v1542 = vpop.permute.xlu0 %1541
  %1591 = vrot.lane.b32.xlu0 %v1293, 96
  %v1592 = vpop.permute.xlu0 %1591
  %1593 = vrot.lane.b32.xlu0 %v1294, 96
  %v1594 = vpop.permute.xlu0 %1593
  %1595 = vrot.lane.b32.xlu0 %v1295, 96
  %v1596 = vpop.permute.xlu0 %1595
  %1597 = vrot.lane.b32.xlu0 %v1296, 96
  %v1598 = vpop.permute.xlu0 %1597
  %1599 = vrot.lane.b32.xlu0 %v1297, 96
  %v1600 = vpop.permute.xlu0 %1599
  %1601 = vrot.lane.b32.xlu0 %v1298, 96
  %v1602 = vpop.permute.xlu0 %1601
  %1603 = vrot.lane.b32.xlu0 %v1299, 96
  %v1604 = vpop.permute.xlu0 %1603
  %1605 = vrot.lane.b32.xlu0 %v1300, 96
  %v1606 = vpop.permute.xlu0 %1605
  %1607 = vrot.lane.b32.xlu0 %v1301, 96
  %v1608 = vpop.permute.xlu0 %1607
  %1609 = vrot.lane.b32.xlu0 %v1302, 96
  %v1610 = vpop.permute.xlu0 %1609
  %1611 = vrot.lane.b32.xlu0 %v1303, 96
  %v1612 = vpop.permute.xlu0 %1611
  %1613 = vrot.lane.b32.xlu0 %v1304, 96
  %v1614 = vpop.permute.xlu0 %1613
  %1615 = vrot.lane.b32.xlu0 %v1305, 96
  %v1616 = vpop.permute.xlu0 %1615
  %1617 = vrot.lane.b32.xlu0 %v1306, 96
  %v1618 = vpop.permute.xlu0 %1617
  %1619 = vrot.lane.b32.xlu0 %v1307, 96
  %v1620 = vpop.permute.xlu0 %1619
  %1621 = vrot.lane.b32.xlu0 %v1308, 96
  %v1622 = vpop.permute.xlu0 %1621
  %1623 = vrot.lane.b32.xlu0 %v1309, 96
  %v1624 = vpop.permute.xlu0 %1623
  %1625 = vrot.lane.b32.xlu0 %v1310, 96
  %v1626 = vpop.permute.xlu0 %1625
  %1627 = vrot.lane.b32.xlu0 %v1311, 96
  %v1628 = vpop.permute.xlu0 %1627
  %1629 = vrot.lane.b32.xlu0 %v1312, 96
  %v1630 = vpop.permute.xlu0 %1629
  %1631 = vrot.lane.b32.xlu0 %v1313, 96
  %v1632 = vpop.permute.xlu0 %1631
  %1633 = vrot.lane.b32.xlu0 %v1314, 96
  %v1634 = vpop.permute.xlu0 %1633
  %1635 = vrot.lane.b32.xlu0 %v1363, 96
  %v1636 = vpop.permute.xlu0 %1635
  %1637 = vrot.lane.b32.xlu0 %v1364, 96
  %v1638 = vpop.permute.xlu0 %1637
  %1665 = vrot.lane.b32.xlu0 %v1341, 32
  %v1666 = vpop.permute.xlu0 %1665
  %1667 = vrot.lane.b32.xlu0 %v1342, 32
  %v1668 = vpop.permute.xlu0 %1667
  %1669 = vrot.lane.b32.xlu0 %v1343, 32
  %v1670 = vpop.permute.xlu0 %1669
  %1671 = vrot.lane.b32.xlu0 %v1344, 32
  %v1672 = vpop.permute.xlu0 %1671
  %1673 = vrot.lane.b32.xlu0 %v1345, 32
  %v1674 = vpop.permute.xlu0 %1673
  %1675 = vrot.lane.b32.xlu0 %v1346, 32
  %v1676 = vpop.permute.xlu0 %1675
  %1677 = vrot.lane.b32.xlu0 %v1347, 32
  %v1678 = vpop.permute.xlu0 %1677
  %1679 = vrot.lane.b32.xlu0 %v1348, 32
  %v1680 = vpop.permute.xlu0 %1679
  %1681 = vrot.lane.b32.xlu0 %v1349, 32
  %v1682 = vpop.permute.xlu0 %1681
  %1683 = vrot.lane.b32.xlu0 %v1350, 32
  %v1684 = vpop.permute.xlu0 %1683
  %1685 = vrot.lane.b32.xlu0 %v1351, 32
  %v1686 = vpop.permute.xlu0 %1685
  %1687 = vrot.lane.b32.xlu0 %v1352, 32
  %v1688 = vpop.permute.xlu0 %1687
  %1689 = vrot.lane.b32.xlu0 %v1353, 32
  %v1690 = vpop.permute.xlu0 %1689
  %1691 = vrot.lane.b32.xlu0 %v1354, 32
  %v1692 = vpop.permute.xlu0 %1691
  %1693 = vrot.lane.b32.xlu0 %v1355, 32
  %v1694 = vpop.permute.xlu0 %1693
  %1695 = vrot.lane.b32.xlu0 %v1356, 32
  %v1696 = vpop.permute.xlu0 %1695
  %1697 = vrot.lane.b32.xlu0 %v1357, 32
  %v1698 = vpop.permute.xlu0 %1697
  %1699 = vrot.lane.b32.xlu0 %v1358, 32
  %v1700 = vpop.permute.xlu0 %1699
  %1701 = vrot.lane.b32.xlu0 %v1359, 32
  %v1702 = vpop.permute.xlu0 %1701
  %1703 = vrot.lane.b32.xlu0 %v1360, 32
  %v1704 = vpop.permute.xlu0 %1703
  %1705 = vrot.lane.b32.xlu0 %v1361, 32
  %v1706 = vpop.permute.xlu0 %1705
  %1707 = vrot.lane.b32.xlu0 %v1362, 32
  %v1708 = vpop.permute.xlu0 %1707
  %1709 = vrot.lane.b32.xlu0 %v1367, 32
  %v1710 = vpop.permute.xlu0 %1709
  %1711 = vrot.lane.b32.xlu0 %v1368, 32
  %v1712 = vpop.permute.xlu0 %1711
  %1739 = vrot.lane.b32.xlu0 %v1295, 64
  %v1740 = vpop.permute.xlu0 %1739
  %1741 = vrot.lane.b32.xlu0 %v1296, 64
  %v1742 = vpop.permute.xlu0 %1741
  %1743 = vrot.lane.b32.xlu0 %v1297, 64
  %v1744 = vpop.permute.xlu0 %1743
  %1745 = vrot.lane.b32.xlu0 %v1298, 64
  %v1746 = vpop.permute.xlu0 %1745
  %1747 = vrot.lane.b32.xlu0 %v1299, 64
  %v1748 = vpop.permute.xlu0 %1747
  %1749 = vrot.lane.b32.xlu0 %v1300, 64
  %v1750 = vpop.permute.xlu0 %1749
  %1751 = vrot.lane.b32.xlu0 %v1301, 64
  %v1752 = vpop.permute.xlu0 %1751
  %1753 = vrot.lane.b32.xlu0 %v1302, 64
  %v1754 = vpop.permute.xlu0 %1753
  %1755 = vrot.lane.b32.xlu0 %v1303, 64
  %v1756 = vpop.permute.xlu0 %1755
  %1757 = vrot.lane.b32.xlu0 %v1304, 64
  %v1758 = vpop.permute.xlu0 %1757
  %1759 = vrot.lane.b32.xlu0 %v1305, 64
  %v1760 = vpop.permute.xlu0 %1759
  %1761 = vrot.lane.b32.xlu0 %v1306, 64
  %v1762 = vpop.permute.xlu0 %1761
  %1763 = vrot.lane.b32.xlu0 %v1307, 64
  %v1764 = vpop.permute.xlu0 %1763
  %1765 = vrot.lane.b32.xlu0 %v1308, 64
  %v1766 = vpop.permute.xlu0 %1765
  %1767 = vrot.lane.b32.xlu0 %v1309, 64
  %v1768 = vpop.permute.xlu0 %1767
  %1769 = vrot.lane.b32.xlu0 %v1310, 64
  %v1770 = vpop.permute.xlu0 %1769
  %1771 = vrot.lane.b32.xlu0 %v1311, 64
  %v1772 = vpop.permute.xlu0 %1771
  %1773 = vrot.lane.b32.xlu0 %v1312, 64
  %v1774 = vpop.permute.xlu0 %1773
  %1775 = vrot.lane.b32.xlu0 %v1313, 64
  %v1776 = vpop.permute.xlu0 %1775
  %1777 = vrot.lane.b32.xlu0 %v1314, 64
  %v1778 = vpop.permute.xlu0 %1777
  %1779 = vrot.lane.b32.xlu0 %v1363, 64
  %v1780 = vpop.permute.xlu0 %1779
  %1781 = vrot.lane.b32.xlu0 %v1364, 64
  %v1782 = vpop.permute.xlu0 %1781
  %1783 = vrot.lane.b32.xlu0 %v1369, 64
  %v1784 = vpop.permute.xlu0 %1783
  %1785 = vrot.lane.b32.xlu0 %v1370, 64
  %v1786 = vpop.permute.xlu0 %1785
  %1815 = vrot.lane.b32.xlu0 %v1319, 96
  %v1816 = vpop.permute.xlu0 %1815
  %1817 = vrot.lane.b32.xlu0 %v1320, 96
  %v1818 = vpop.permute.xlu0 %1817
  %1819 = vrot.lane.b32.xlu0 %v1321, 96
  %v1820 = vpop.permute.xlu0 %1819
  %1821 = vrot.lane.b32.xlu0 %v1322, 96
  %v1822 = vpop.permute.xlu0 %1821
  %1823 = vrot.lane.b32.xlu0 %v1323, 96
  %v1824 = vpop.permute.xlu0 %1823
  %1825 = vrot.lane.b32.xlu0 %v1324, 96
  %v1826 = vpop.permute.xlu0 %1825
  %1827 = vrot.lane.b32.xlu0 %v1325, 96
  %v1828 = vpop.permute.xlu0 %1827
  %1829 = vrot.lane.b32.xlu0 %v1326, 96
  %v1830 = vpop.permute.xlu0 %1829
  %1831 = vrot.lane.b32.xlu0 %v1327, 96
  %v1832 = vpop.permute.xlu0 %1831
  %1833 = vrot.lane.b32.xlu0 %v1328, 96
  %v1834 = vpop.permute.xlu0 %1833
  %1835 = vrot.lane.b32.xlu0 %v1329, 96
  %v1836 = vpop.permute.xlu0 %1835
  %1837 = vrot.lane.b32.xlu0 %v1330, 96
  %v1838 = vpop.permute.xlu0 %1837
  %1839 = vrot.lane.b32.xlu0 %v1331, 96
  %v1840 = vpop.permute.xlu0 %1839
  %1841 = vrot.lane.b32.xlu0 %v1332, 96
  %v1842 = vpop.permute.xlu0 %1841
  %1843 = vrot.lane.b32.xlu0 %v1333, 96
  %v1844 = vpop.permute.xlu0 %1843
  %1845 = vrot.lane.b32.xlu0 %v1334, 96
  %v1846 = vpop.permute.xlu0 %1845
  %1847 = vrot.lane.b32.xlu0 %v1335, 96
  %v1848 = vpop.permute.xlu0 %1847
  %1849 = vrot.lane.b32.xlu0 %v1336, 96
  %v1850 = vpop.permute.xlu0 %1849
  %1851 = vrot.lane.b32.xlu0 %v1337, 96
  %v1852 = vpop.permute.xlu0 %1851
  %1853 = vrot.lane.b32.xlu0 %v1338, 96
  %v1854 = vpop.permute.xlu0 %1853
  %1855 = vrot.lane.b32.xlu0 %v1365, 96
  %v1856 = vpop.permute.xlu0 %1855
  %1857 = vrot.lane.b32.xlu0 %v1366, 96
  %v1858 = vpop.permute.xlu0 %1857
  %1859 = vrot.lane.b32.xlu0 %v1371, 96
  %v1860 = vpop.permute.xlu0 %1859
  %1861 = vrot.lane.b32.xlu0 %v1372, 96
  %v1862 = vpop.permute.xlu0 %1861
  %v1887 = vsel %vm28, %v1291, %v1400
  %v1888 = vsel %vm28, %v1292, %v1402
  %v1889 = vsel %vm28, %v1293, %v1404
  %v1890 = vsel %vm28, %v1294, %v1406
  %v1891 = vsel %vm28, %v1295, %v1408
  %v1892 = vsel %vm28, %v1296, %v1410
  %v1893 = vsel %vm28, %v1297, %v1412
  %v1894 = vsel %vm28, %v1298, %v1414
  %v1895 = vsel %vm28, %v1299, %v1416
  %v1896 = vsel %vm28, %v1300, %v1418
  %v1897 = vsel %vm28, %v1301, %v1420
  %v1898 = vsel %vm28, %v1302, %v1422
  %v1899 = vsel %vm28, %v1303, %v1424
  %v1900 = vsel %vm28, %v1304, %v1426
  %v1901 = vsel %vm28, %v1305, %v1428
  %v1902 = vsel %vm28, %v1306, %v1430
  %v1903 = vsel %vm28, %v1307, %v1432
  %v1904 = vsel %vm28, %v1308, %v1434
  %v1905 = vsel %vm28, %v1309, %v1436
  %v1906 = vsel %vm28, %v1310, %v1438
  %v1907 = vsel %vm28, %v1311, %v1440
  %v1908 = vsel %vm28, %v1312, %v1442
  %v1909 = vsel %vm28, %v1313, %v1444
  %v1910 = vsel %vm28, %v1314, %v1446
  %v1911 = vsel %vm945, %v1887, %v1496
  %v1912 = vsel %vm945, %v1888, %v1498
  %v1913 = vsel %vm945, %v1889, %v1500
  %v1914 = vsel %vm945, %v1890, %v1502
  %v1915 = vsel %vm945, %v1891, %v1504
  %v1916 = vsel %vm945, %v1892, %v1506
  %v1917 = vsel %vm945, %v1893, %v1508
  %v1918 = vsel %vm945, %v1894, %v1510
  %v1919 = vsel %vm945, %v1895, %v1512
  %v1920 = vsel %vm945, %v1896, %v1514
  %v1921 = vsel %vm945, %v1897, %v1516
  %v1922 = vsel %vm945, %v1898, %v1518
  %v1923 = vsel %vm945, %v1899, %v1520
  %v1924 = vsel %vm945, %v1900, %v1522
  %v1925 = vsel %vm945, %v1901, %v1524
  %v1926 = vsel %vm945, %v1902, %v1526
  %v1927 = vsel %vm945, %v1903, %v1528
  %v1928 = vsel %vm945, %v1904, %v1530
  %v1929 = vsel %vm945, %v1905, %v1532
  %v1930 = vsel %vm945, %v1906, %v1534
  %v1931 = vsel %vm945, %v1907, %v1536
  %v1932 = vsel %vm945, %v1908, %v1538
  %v1933 = vsel %vm945, %v1909, %v1540
  %v1934 = vsel %vm945, %v1910, %v1542
  %vm1935 = vcmask 785408
  %v1936 = vsel %vm1935, %v1911, %v1592
  %v1937 = vsel %vm1935, %v1912, %v1594
  %v1938 = vsel %vm1935, %v1913, %v1596
  %v1939 = vsel %vm1935, %v1914, %v1598
  %v1940 = vsel %vm1935, %v1915, %v1600
  %v1941 = vsel %vm1935, %v1916, %v1602
  %v1942 = vsel %vm1935, %v1917, %v1604
  %v1943 = vsel %vm1935, %v1918, %v1606
  %v1944 = vsel %vm1935, %v1919, %v1608
  %v1945 = vsel %vm1935, %v1920, %v1610
  %v1946 = vsel %vm1935, %v1921, %v1612
  %v1947 = vsel %vm1935, %v1922, %v1614
  %v1948 = vsel %vm1935, %v1923, %v1616
  %v1949 = vsel %vm1935, %v1924, %v1618
  %v1950 = vsel %vm1935, %v1925, %v1620
  %v1951 = vsel %vm1935, %v1926, %v1622
  %v1952 = vsel %vm1935, %v1927, %v1624
  %v1953 = vsel %vm1935, %v1928, %v1626
  %v1954 = vsel %vm1935, %v1929, %v1628
  %v1955 = vsel %vm1935, %v1930, %v1630
  %v1956 = vsel %vm1935, %v1931, %v1632
  %v1957 = vsel %vm1935, %v1932, %v1634
  %v1958 = vsel %vm1935, %v1933, %v1636
  %v1959 = vsel %vm1935, %v1934, %v1638
  %v1960 = vsel %vm28, %v1317, %v1666
  %v1961 = vsel %vm28, %v1318, %v1668
  %v1962 = vsel %vm28, %v1319, %v1670
  %v1963 = vsel %vm28, %v1320, %v1672
  %v1964 = vsel %vm28, %v1321, %v1674
  %v1965 = vsel %vm28, %v1322, %v1676
  %v1966 = vsel %vm28, %v1323, %v1678
  %v1967 = vsel %vm28, %v1324, %v1680
  %v1968 = vsel %vm28, %v1325, %v1682
  %v1969 = vsel %vm28, %v1326, %v1684
  %v1970 = vsel %vm28, %v1327, %v1686
  %v1971 = vsel %vm28, %v1328, %v1688
  %v1972 = vsel %vm28, %v1329, %v1690
  %v1973 = vsel %vm28, %v1330, %v1692
  %v1974 = vsel %vm28, %v1331, %v1694
  %v1975 = vsel %vm28, %v1332, %v1696
  %v1976 = vsel %vm28, %v1333, %v1698
  %v1977 = vsel %vm28, %v1334, %v1700
  %v1978 = vsel %vm28, %v1335, %v1702
  %v1979 = vsel %vm28, %v1336, %v1704
  %v1980 = vsel %vm28, %v1337, %v1706
  %v1981 = vsel %vm28, %v1338, %v1708
  %v1982 = vsel %vm28, %v1365, %v1710
  %v1983 = vsel %vm28, %v1366, %v1712
  %v1984 = vsel %vm945, %v1960, %v1740
  %v1985 = vsel %vm945, %v1961, %v1742
  %v1986 = vsel %vm945, %v1962, %v1744
  %v1987 = vsel %vm945, %v1963, %v1746
  %v1988 = vsel %vm945, %v1964, %v1748
  %v1989 = vsel %vm945, %v1965, %v1750
  %v1990 = vsel %vm945, %v1966, %v1752
  %v1991 = vsel %vm945, %v1967, %v1754
  %v1992 = vsel %vm945, %v1968, %v1756
  %v1993 = vsel %vm945, %v1969, %v1758
  %v1994 = vsel %vm945, %v1970, %v1760
  %v1995 = vsel %vm945, %v1971, %v1762
  %v1996 = vsel %vm945, %v1972, %v1764
  %v1997 = vsel %vm945, %v1973, %v1766
  %v1998 = vsel %vm945, %v1974, %v1768
  %v1999 = vsel %vm945, %v1975, %v1770
  %v2000 = vsel %vm945, %v1976, %v1772
  %v2001 = vsel %vm945, %v1977, %v1774
  %v2002 = vsel %vm945, %v1978, %v1776
  %v2003 = vsel %vm945, %v1979, %v1778
  %v2004 = vsel %vm945, %v1980, %v1780
  %v2005 = vsel %vm945, %v1981, %v1782
  %v2006 = vsel %vm945, %v1982, %v1784
  %v2007 = vsel %vm945, %v1983, %v1786
  %v2008 = vsel %vm1935, %v1984, %v1816
  %v2009 = vsel %vm1935, %v1985, %v1818
  %v2010 = vsel %vm1935, %v1986, %v1820
  %v2011 = vsel %vm1935, %v1987, %v1822
  %v2012 = vsel %vm1935, %v1988, %v1824
  %v2013 = vsel %vm1935, %v1989, %v1826
  %v2014 = vsel %vm1935, %v1990, %v1828
  %v2015 = vsel %vm1935, %v1991, %v1830
  %v2016 = vsel %vm1935, %v1992, %v1832
  %v2017 = vsel %vm1935, %v1993, %v1834
  %v2018 = vsel %vm1935, %v1994, %v1836
  %v2019 = vsel %vm1935, %v1995, %v1838
  %v2020 = vsel %vm1935, %v1996, %v1840
  %v2021 = vsel %vm1935, %v1997, %v1842
  %v2022 = vsel %vm1935, %v1998, %v1844
  %v2023 = vsel %vm1935, %v1999, %v1846
  %v2024 = vsel %vm1935, %v2000, %v1848
  %v2025 = vsel %vm1935, %v2001, %v1850
  %v2026 = vsel %vm1935, %v2002, %v1852
  %v2027 = vsel %vm1935, %v2003, %v1854
  %v2028 = vsel %vm1935, %v2004, %v1856
  %v2029 = vsel %vm1935, %v2005, %v1858
  %v2030 = vsel %vm1935, %v2006, %v1860
  %v2031 = vsel %vm1935, %v2007, %v1862
  %v2033 = vlaneseq
  %v2034 = vshrl.u32 %v2033, 7
  %v2035 = vsub.s32 0, %v2034
  %v2036 = vrot.slane %v77, %v2035
  %v2038 = vsel %vm28, %v1343, 0
  %v2040 = vsel %vm28, %v1344, 0
  %v2042 = vsel %vm28, %v1345, 0
  %v2044 = vsel %vm28, %v1346, 0
  %v2046 = vsel %vm28, %v1347, 0
  %v2048 = vsel %vm28, %v1348, 0
  %v2050 = vsel %vm28, %v1349, 0
  %v2052 = vsel %vm28, %v1350, 0
  %v2054 = vsel %vm28, %v1351, 0
  %v2056 = vsel %vm28, %v1352, 0
  %v2058 = vsel %vm28, %v1353, 0
  %v2060 = vsel %vm28, %v1354, 0
  %v2062 = vsel %vm28, %v1355, 0
  %v2064 = vsel %vm28, %v1356, 0
  %v2066 = vsel %vm28, %v1357, 0
  %v2068 = vsel %vm28, %v1358, 0
  %v2070 = vsel %vm28, %v1359, 0
  %v2072 = vsel %vm28, %v1360, 0
  %v2074 = vsel %vm28, %v1361, 0
  %v2076 = vsel %vm28, %v1362, 0
  %v2078 = vsel %vm28, %v1367, 0
  %v2080 = vsel %vm28, %v1368, 0
  %v2083 = vsel %vm28, %v1373, 0
  %v2086 = vsel %vm28, %v1374, 0
  %2088 = vmatprep.subr.mxu0 0.0
  %2089 = vmatpush1.msra.mxu0 %v41
  %2090 = vmatprep.subr.mxu0 0.0
  %2091 = vmatpush1.msra.mxu0 %v42
  %2092 = vmatprep.subr.mxu0 0.0
  %2093 = vmatpush1.msra.mxu0 %v43
  %2094 = vmatprep.subr.mxu0 0.0
  %2095 = vmatpush1.msra.mxu0 %v44
  %2096 = vmatprep.subr.mxu0 0.0
  %2097 = vmatpush1.msra.mxu0 %v45
  %2098 = vmatprep.subr.mxu0 0.0
  %2099 = vmatpush1.msra.mxu0 %v46
  %2100 = vmatprep.subr.mxu0 0.0
  %2101 = vmatpush1.msra.mxu0 %v47
  %2102 = vmatprep.subr.mxu0 0.0
  %2103 = vmatpush1.msra.mxu0 %v48
  %2104 = vmatprep.subr.mxu0 0.0
  %2105 = vmatpush1.msra.mxu0 %v49
  %2106 = vmatprep.subr.mxu0 0.0
  %2107 = vmatpush1.msra.mxu0 %v50
  %2108 = vmatprep.subr.mxu0 0.0
  %2109 = vmatpush1.msra.mxu0 %v51
  %2110 = vmatprep.subr.mxu0 0.0
  %2111 = vmatpush1.msra.mxu0 %v52
  %2112 = vmatprep.subr.mxu0 0.0
  %2113 = vmatpush1.msra.mxu0 %v53
  %2114 = vmatprep.subr.mxu0 0.0
  %2115 = vmatpush1.msra.mxu0 %v54
  %2116 = vmatprep.subr.mxu0 0.0
  %2117 = vmatpush1.msra.mxu0 %v55
  %2118 = vmatprep.subr.mxu0 0.0
  %2119 = vmatpush1.msra.mxu0 %v56
  %2120 = vmatprep.subr.mxu0 0.0
  %2121 = vmatpush1.msra.mxu0 %v57
  %2122 = vmatprep.subr.mxu0 0.0
  %2123 = vmatpush1.msra.mxu0 %v58
  %2124 = vmatprep.subr.mxu0 0.0
  %2125 = vmatpush1.msra.mxu0 %v59
  %2126 = vmatprep.subr.mxu0 0.0
  %2127 = vmatpush1.msra.mxu0 %v60
  %2128 = vmatprep.subr.mxu0 0.0
  %2129 = vmatpush1.msra.mxu0 %v61
  %2130 = vmatprep.subr.mxu0 0.0
  %2131 = vmatpush1.msra.mxu0 %v62
  %2132 = vmatprep.subr.mxu0 0.0
  %2133 = vmatpush1.msra.mxu0 %v63
  %2134 = vmatprep.subr.mxu0 0.0
  %2135 = vmatpush1.msra.mxu0 %v64
  %2136 = vmatprep.subr.mxu0 0.0
  %2137 = vmatpush1.msra.mxu0 %v65
  %2138 = vmatprep.subr.mxu0 0.0
  %2139 = vmatpush1.msra.mxu0 %v66
  %2140 = vmatprep.subr.mxu0 0.0
  %2141 = vmatpush1.msra.mxu0 %v67
  %2142 = vmatprep.subr.mxu0 0.0
  %2143 = vmatpush1.msra.mxu0 %v68
  %2144 = vmatprep.subr.mxu0 0.0
  %2145 = vmatpush1.msra.mxu0 %v69
  %2146 = vmatprep.subr.mxu0 0.0
  %2147 = vmatpush1.msra.mxu0 %v70
  %2148 = vmatprep.subr.mxu0 0.0
  %2149 = vmatpush1.msra.mxu0 %v71
  %2150 = vmatprep.subr.mxu0 0.0
  %2151 = vmatpush1.msra.mxu0 %v72
  %2152 = vmatprep.mubr.f32.mxu0 %v2008
  %2153 = vmatmul.mubr.f32.gmra.mrb[0].mxu0 %v1936
  %v2154 = vpop.f32.mrb[0].mxu0
  %v2155 = vadd.f32 %v2036, %v2154
  %v2156 = vpop.f32.mrb[0].mxu0
  %2157 = vmatprep.mubr.f32.mxu0 %v2009
  %2158 = vmatmul.mubr.f32.gmra.mrb[0].mxu0 %v1937
  %v2159 = vpop.f32.mrb[0].mxu0
  %v2160 = vadd.f32 %v2036, %v2159
  %v2161 = vpop.f32.mrb[0].mxu0
  %2162 = vmatprep.mubr.f32.mxu0 %v2010
  %2163 = vmatmul.mubr.f32.gmra.mrb[0].mxu0 %v1938
  %v2164 = vpop.f32.mrb[0].mxu0
  %v2165 = vadd.f32 %v2036, %v2164
  %v2166 = vpop.f32.mrb[0].mxu0
  %2167 = vmatprep.mubr.f32.mxu0 %v2011
  %2168 = vmatmul.mubr.f32.gmra.mrb[0].mxu0 %v1939
  %v2169 = vpop.f32.mrb[0].mxu0
  %v2170 = vadd.f32 %v2036, %v2169
  %v2171 = vpop.f32.mrb[0].mxu0
  %2172 = vmatprep.mubr.f32.mxu0 %v2012
  %2173 = vmatmul.mubr.f32.gmra.mrb[0].mxu0 %v1940
  %v2174 = vpop.f32.mrb[0].mxu0
  %v2175 = vadd.f32 %v2036, %v2174
  %v2176 = vpop.f32.mrb[0].mxu0
  %2177 = vmatprep.mubr.f32.mxu0 %v2013
  %2178 = vmatmul.mubr.f32.gmra.mrb[0].mxu0 %v1941
  %v2179 = vpop.f32.mrb[0].mxu0
  %v2180 = vadd.f32 %v2036, %v2179
  %v2181 = vpop.f32.mrb[0].mxu0
  %2182 = vmatprep.mubr.f32.mxu0 %v2014
  %2183 = vmatmul.mubr.f32.gmra.mrb[0].mxu0 %v1942
  %v2184 = vpop.f32.mrb[0].mxu0
  %v2185 = vadd.f32 %v2036, %v2184
  %v2186 = vpop.f32.mrb[0].mxu0
  %2187 = vmatprep.mubr.f32.mxu0 %v2015
  %2188 = vmatmul.mubr.f32.gmra.mrb[0].mxu0 %v1943
  %v2189 = vpop.f32.mrb[0].mxu0
  %v2190 = vadd.f32 %v2036, %v2189
  %v2191 = vpop.f32.mrb[0].mxu0
  %2192 = vmatprep.mubr.f32.mxu0 %v2016
  %2193 = vmatmul.mubr.f32.gmra.mrb[0].mxu0 %v1944
  %v2194 = vpop.f32.mrb[0].mxu0
  %v2195 = vadd.f32 %v2036, %v2194
  %v2196 = vpop.f32.mrb[0].mxu0
  %2197 = vmatprep.mubr.f32.mxu0 %v2017
  %2198 = vmatmul.mubr.f32.gmra.mrb[0].mxu0 %v1945
  %v2199 = vpop.f32.mrb[0].mxu0
  %v2200 = vadd.f32 %v2036, %v2199
  %v2201 = vpop.f32.mrb[0].mxu0
  %2202 = vmatprep.mubr.f32.mxu0 %v2018
  %2203 = vmatmul.mubr.f32.gmra.mrb[0].mxu0 %v1946
  %v2204 = vpop.f32.mrb[0].mxu0
  %v2205 = vadd.f32 %v2036, %v2204
  %v2206 = vpop.f32.mrb[0].mxu0
  %2207 = vmatprep.mubr.f32.mxu0 %v2019
  %2208 = vmatmul.mubr.f32.gmra.mrb[0].mxu0 %v1947
  %v2209 = vpop.f32.mrb[0].mxu0
  %v2210 = vadd.f32 %v2036, %v2209
  %v2211 = vpop.f32.mrb[0].mxu0
  %2212 = vmatprep.mubr.f32.mxu0 %v2020
  %2213 = vmatmul.mubr.f32.gmra.mrb[0].mxu0 %v1948
  %v2214 = vpop.f32.mrb[0].mxu0
  %v2215 = vadd.f32 %v2036, %v2214
  %v2216 = vpop.f32.mrb[0].mxu0
  %2217 = vmatprep.mubr.f32.mxu0 %v2021
  %2218 = vmatmul.mubr.f32.gmra.mrb[0].mxu0 %v1949
  %v2219 = vpop.f32.mrb[0].mxu0
  %v2220 = vadd.f32 %v2036, %v2219
  %v2221 = vpop.f32.mrb[0].mxu0
  %2222 = vmatprep.mubr.f32.mxu0 %v2022
  %2223 = vmatmul.mubr.f32.gmra.mrb[0].mxu0 %v1950
  %v2224 = vpop.f32.mrb[0].mxu0
  %v2225 = vadd.f32 %v2036, %v2224
  %v2226 = vpop.f32.mrb[0].mxu0
  %2227 = vmatprep.mubr.f32.mxu0 %v2023
  %2228 = vmatmul.mubr.f32.gmra.mrb[0].mxu0 %v1951
  %v2229 = vpop.f32.mrb[0].mxu0
  %v2230 = vadd.f32 %v2036, %v2229
  %v2231 = vpop.f32.mrb[0].mxu0
  %2232 = vmatprep.mubr.f32.mxu0 %v2024
  %2233 = vmatmul.mubr.f32.gmra.mrb[0].mxu0 %v1952
  %v2234 = vpop.f32.mrb[0].mxu0
  %v2235 = vadd.f32 %v2036, %v2234
  %v2236 = vpop.f32.mrb[0].mxu0
  %2237 = vmatprep.mubr.f32.mxu0 %v2025
  %2238 = vmatmul.mubr.f32.gmra.mrb[0].mxu0 %v1953
  %v2239 = vpop.f32.mrb[0].mxu0
  %v2240 = vadd.f32 %v2036, %v2239
  %v2241 = vpop.f32.mrb[0].mxu0
  %2242 = vmatprep.mubr.f32.mxu0 %v2026
  %2243 = vmatmul.mubr.f32.gmra.mrb[0].mxu0 %v1954
  %v2244 = vpop.f32.mrb[0].mxu0
  %v2245 = vadd.f32 %v2036, %v2244
  %v2246 = vpop.f32.mrb[0].mxu0
  %2247 = vmatprep.mubr.f32.mxu0 %v2027
  %2248 = vmatmul.mubr.f32.gmra.mrb[0].mxu0 %v1955
  %v2249 = vpop.f32.mrb[0].mxu0
  %v2250 = vadd.f32 %v2036, %v2249
  %v2251 = vpop.f32.mrb[0].mxu0
  %2252 = vmatprep.mubr.f32.mxu0 %v2028
  %2253 = vmatmul.mubr.f32.gmra.mrb[0].mxu0 %v1956
  %v2254 = vpop.f32.mrb[0].mxu0
  %v2255 = vadd.f32 %v2036, %v2254
  %v2256 = vpop.f32.mrb[0].mxu0
  %2257 = vmatprep.mubr.f32.mxu0 %v2029
  %2258 = vmatmul.mubr.f32.gmra.mrb[0].mxu0 %v1957
  %v2259 = vpop.f32.mrb[0].mxu0
  %v2260 = vadd.f32 %v2036, %v2259
  %v2261 = vpop.f32.mrb[0].mxu0
  %2262 = vmatprep.mubr.f32.mxu0 %v2030
  %2263 = vmatmul.mubr.f32.gmra.mrb[0].mxu0 %v1958
  %v2264 = vpop.f32.mrb[0].mxu0
  %v2265 = vadd.f32 %v2036, %v2264
  %v2266 = vpop.f32.mrb[0].mxu0
  %2267 = vmatprep.mubr.f32.mxu0 %v2031
  %2268 = vmatmul.mubr.f32.gmra.mrb[0].mxu0 %v1959
  %v2269 = vpop.f32.mrb[0].mxu0
  %v2270 = vadd.f32 %v2036, %v2269
  %v2271 = vpop.f32.mrb[0].mxu0
  %2272 = vdwg.mxu0
  %2273 = vmatprep.subr.mxu0 0.0
  %2274 = vmatpush1.msra.mxu0 %v73
  %2275 = vmatprep.subr.mxu0 0.0
  %2276 = vmatpush1.msra.mxu0 %v74
  %2277 = vmatprep.subr.mxu0 0.0
  %2278 = vmatpush1.msra.mxu0 %v75
  %2279 = vmatprep.subr.mxu0 0.0
  %2280 = vmatpush1.msra.mxu0 %v76
  %2281 = vmatprep.subr.mxu0 0.0
  %2282 = vmatpush1.msra.mxu0 0.0
  %2283 = vmatprep.subr.mxu0 0.0
  %2284 = vmatpush1.msra.mxu0 0.0
  %2285 = vmatprep.subr.mxu0 0.0
  %2286 = vmatpush1.msra.mxu0 0.0
  %2287 = vmatprep.subr.mxu0 0.0
  %2288 = vmatpush1.msra.mxu0 0.0
  %2289 = vmatprep.subr.mxu0 0.0
  %2290 = vmatpush1.msra.mxu0 0.0
  %2291 = vmatprep.subr.mxu0 0.0
  %2292 = vmatpush1.msra.mxu0 0.0
  %2293 = vmatprep.subr.mxu0 0.0
  %2294 = vmatpush1.msra.mxu0 0.0
  %2295 = vmatprep.subr.mxu0 0.0
  %2296 = vmatpush1.msra.mxu0 0.0
  %2297 = vmatprep.subr.mxu0 0.0
  %2298 = vmatpush1.msra.mxu0 0.0
  %2299 = vmatprep.subr.mxu0 0.0
  %2300 = vmatpush1.msra.mxu0 0.0
  %2301 = vmatprep.subr.mxu0 0.0
  %2302 = vmatpush1.msra.mxu0 0.0
  %2303 = vmatprep.subr.mxu0 0.0
  %2304 = vmatpush1.msra.mxu0 0.0
  %2305 = vmatprep.subr.mxu0 0.0
  %2306 = vmatpush1.msra.mxu0 0.0
  %2307 = vmatprep.subr.mxu0 0.0
  %2308 = vmatpush1.msra.mxu0 0.0
  %2309 = vmatprep.subr.mxu0 0.0
  %2310 = vmatpush1.msra.mxu0 0.0
  %2311 = vmatprep.subr.mxu0 0.0
  %2312 = vmatpush1.msra.mxu0 0.0
  %2313 = vmatprep.subr.mxu0 0.0
  %2314 = vmatpush1.msra.mxu0 0.0
  %2315 = vmatprep.subr.mxu0 0.0
  %2316 = vmatpush1.msra.mxu0 0.0
  %2317 = vmatprep.subr.mxu0 0.0
  %2318 = vmatpush1.msra.mxu0 0.0
  %2319 = vmatprep.subr.mxu0 0.0
  %2320 = vmatpush1.msra.mxu0 0.0
  %2321 = vmatprep.subr.mxu0 0.0
  %2322 = vmatpush1.msra.mxu0 0.0
  %2323 = vmatprep.subr.mxu0 0.0
  %2324 = vmatpush1.msra.mxu0 0.0
  %2325 = vmatprep.subr.mxu0 0.0
  %2326 = vmatpush1.msra.mxu0 0.0
  %2327 = vmatprep.subr.mxu0 0.0
  %2328 = vmatpush1.msra.mxu0 0.0
  %2329 = vmatprep.subr.mxu0 0.0
  %2330 = vmatpush1.msra.mxu0 0.0
  %2331 = vmatprep.subr.mxu0 0.0
  %2332 = vmatpush1.msra.mxu0 0.0
  %2333 = vmatprep.subr.mxu0 0.0
  %2334 = vmatpush1.msra.mxu0 0.0
  %2335 = vmatprep.subr.mxu0 0.0
  %2336 = vmatpush1.msra.mxu0 0.0
  %2337 = vmatprep.mubr.f32.mxu0 0.0
  %2338 = vmatmul.mubr.f32.gmra.mrb[0].mxu0 %v2038
  %v2339 = vpop.f32.mrb[0].mxu0
  %v2340 = vadd.f32 %v2155, %v2339
  %v2341 = vpop.f32.mrb[0].mxu0
  %2342 = vmatprep.mubr.f32.mxu0 0.0
  %2343 = vmatmul.mubr.f32.gmra.mrb[0].mxu0 %v2040
  %v2344 = vpop.f32.mrb[0].mxu0
  %v2345 = vadd.f32 %v2160, %v2344
  %v2346 = vpop.f32.mrb[0].mxu0
  %2347 = vmatprep.mubr.f32.mxu0 0.0
  %2348 = vmatmul.mubr.f32.gmra.mrb[0].mxu0 %v2042
  %v2349 = vpop.f32.mrb[0].mxu0
  %v2350 = vadd.f32 %v2165, %v2349
  %v2351 = vpop.f32.mrb[0].mxu0
  %2352 = vmatprep.mubr.f32.mxu0 0.0
  %2353 = vmatmul.mubr.f32.gmra.mrb[0].mxu0 %v2044
  %v2354 = vpop.f32.mrb[0].mxu0
  %v2355 = vadd.f32 %v2170, %v2354
  %v2356 = vpop.f32.mrb[0].mxu0
  %2357 = vmatprep.mubr.f32.mxu0 0.0
  %2358 = vmatmul.mubr.f32.gmra.mrb[0].mxu0 %v2046
  %v2359 = vpop.f32.mrb[0].mxu0
  %v2360 = vadd.f32 %v2175, %v2359
  %v2361 = vpop.f32.mrb[0].mxu0
  %2362 = vmatprep.mubr.f32.mxu0 0.0
  %2363 = vmatmul.mubr.f32.gmra.mrb[0].mxu0 %v2048
  %v2364 = vpop.f32.mrb[0].mxu0
  %v2365 = vadd.f32 %v2180, %v2364
  %v2366 = vpop.f32.mrb[0].mxu0
  %2367 = vmatprep.mubr.f32.mxu0 0.0
  %2368 = vmatmul.mubr.f32.gmra.mrb[0].mxu0 %v2050
  %v2369 = vpop.f32.mrb[0].mxu0
  %v2370 = vadd.f32 %v2185, %v2369
  %v2371 = vpop.f32.mrb[0].mxu0
  %2372 = vmatprep.mubr.f32.mxu0 0.0
  %2373 = vmatmul.mubr.f32.gmra.mrb[0].mxu0 %v2052
  %v2374 = vpop.f32.mrb[0].mxu0
  %v2375 = vadd.f32 %v2190, %v2374
  %v2376 = vpop.f32.mrb[0].mxu0
  %2377 = vmatprep.mubr.f32.mxu0 0.0
  %2378 = vmatmul.mubr.f32.gmra.mrb[0].mxu0 %v2054
  %v2379 = vpop.f32.mrb[0].mxu0
  %v2380 = vadd.f32 %v2195, %v2379
  %v2381 = vpop.f32.mrb[0].mxu0
  %2382 = vmatprep.mubr.f32.mxu0 0.0
  %2383 = vmatmul.mubr.f32.gmra.mrb[0].mxu0 %v2056
  %v2384 = vpop.f32.mrb[0].mxu0
  %v2385 = vadd.f32 %v2200, %v2384
  %v2386 = vpop.f32.mrb[0].mxu0
  %2387 = vmatprep.mubr.f32.mxu0 0.0
  %2388 = vmatmul.mubr.f32.gmra.mrb[0].mxu0 %v2058
  %v2389 = vpop.f32.mrb[0].mxu0
  %v2390 = vadd.f32 %v2205, %v2389
  %v2391 = vpop.f32.mrb[0].mxu0
  %2392 = vmatprep.mubr.f32.mxu0 0.0
  %2393 = vmatmul.mubr.f32.gmra.mrb[0].mxu0 %v2060
  %v2394 = vpop.f32.mrb[0].mxu0
  %v2395 = vadd.f32 %v2210, %v2394
  %v2396 = vpop.f32.mrb[0].mxu0
  %2397 = vmatprep.mubr.f32.mxu0 0.0
  %2398 = vmatmul.mubr.f32.gmra.mrb[0].mxu0 %v2062
  %v2399 = vpop.f32.mrb[0].mxu0
  %v2400 = vadd.f32 %v2215, %v2399
  %v2401 = vpop.f32.mrb[0].mxu0
  %2402 = vmatprep.mubr.f32.mxu0 0.0
  %2403 = vmatmul.mubr.f32.gmra.mrb[0].mxu0 %v2064
  %v2404 = vpop.f32.mrb[0].mxu0
  %v2405 = vadd.f32 %v2220, %v2404
  %v2406 = vpop.f32.mrb[0].mxu0
  %2407 = vmatprep.mubr.f32.mxu0 0.0
  %2408 = vmatmul.mubr.f32.gmra.mrb[0].mxu0 %v2066
  %v2409 = vpop.f32.mrb[0].mxu0
  %v2410 = vadd.f32 %v2225, %v2409
  %v2411 = vpop.f32.mrb[0].mxu0
  %2412 = vmatprep.mubr.f32.mxu0 0.0
  %2413 = vmatmul.mubr.f32.gmra.mrb[0].mxu0 %v2068
  %v2414 = vpop.f32.mrb[0].mxu0
  %v2415 = vadd.f32 %v2230, %v2414
  %v2416 = vpop.f32.mrb[0].mxu0
  %2417 = vmatprep.mubr.f32.mxu0 0.0
  %2418 = vmatmul.mubr.f32.gmra.mrb[0].mxu0 %v2070
  %v2419 = vpop.f32.mrb[0].mxu0
  %v2420 = vadd.f32 %v2235, %v2419
  %v2421 = vpop.f32.mrb[0].mxu0
  %2422 = vmatprep.mubr.f32.mxu0 0.0
  %2423 = vmatmul.mubr.f32.gmra.mrb[0].mxu0 %v2072
  %v2424 = vpop.f32.mrb[0].mxu0
  %v2425 = vadd.f32 %v2240, %v2424
  %v2426 = vpop.f32.mrb[0].mxu0
  %2427 = vmatprep.mubr.f32.mxu0 0.0
  %2428 = vmatmul.mubr.f32.gmra.mrb[0].mxu0 %v2074
  %v2429 = vpop.f32.mrb[0].mxu0
  %v2430 = vadd.f32 %v2245, %v2429
  %v2431 = vpop.f32.mrb[0].mxu0
  %2432 = vmatprep.mubr.f32.mxu0 0.0
  %2433 = vmatmul.mubr.f32.gmra.mrb[0].mxu0 %v2076
  %v2434 = vpop.f32.mrb[0].mxu0
  %v2435 = vadd.f32 %v2250, %v2434
  %v2436 = vpop.f32.mrb[0].mxu0
  %2437 = vmatprep.mubr.f32.mxu0 0.0
  %2438 = vmatmul.mubr.f32.gmra.mrb[0].mxu0 %v2078
  %v2439 = vpop.f32.mrb[0].mxu0
  %v2440 = vadd.f32 %v2255, %v2439
  %v2441 = vpop.f32.mrb[0].mxu0
  %2442 = vmatprep.mubr.f32.mxu0 0.0
  %2443 = vmatmul.mubr.f32.gmra.mrb[0].mxu0 %v2080
  %v2444 = vpop.f32.mrb[0].mxu0
  %v2445 = vadd.f32 %v2260, %v2444
  %v2446 = vpop.f32.mrb[0].mxu0
  %2447 = vmatprep.mubr.f32.mxu0 0.0
  %2448 = vmatmul.mubr.f32.gmra.mrb[0].mxu0 %v2083
  %v2449 = vpop.f32.mrb[0].mxu0
  %v2450 = vadd.f32 %v2265, %v2449
  %v2451 = vpop.f32.mrb[0].mxu0
  %2452 = vmatprep.mubr.f32.mxu0 0.0
  %2453 = vmatmul.mubr.f32.gmra.mrb[0].mxu0 %v2086
  %v2454 = vpop.f32.mrb[0].mxu0
  %v2455 = vadd.f32 %v2270, %v2454
  %v2456 = vpop.f32.mrb[0].mxu0
  %2457 = vdwg.mxu0
  %2458 = vst.msk [vmem:[%s7] sm:$0xff] %vm26, %v2340
  %2459 = vst.msk [vmem:[%s7 + $0x8] sm:$0xff] %vm26, %v2345
  %2460 = vst.msk [vmem:[%s7 + $0x10] sm:$0xff] %vm26, %v2350
  %2461 = vst.msk [vmem:[%s7 + $0x18] sm:$0xff] %vm26, %v2355
  %2462 = vst.msk [vmem:[%s7 + $0x20] sm:$0xff] %vm26, %v2360
  %2463 = vst.msk [vmem:[%s7 + $0x28] sm:$0xff] %vm26, %v2365
  %2464 = vst.msk [vmem:[%s7 + $0x30] sm:$0xff] %vm26, %v2370
  %2465 = vst.msk [vmem:[%s7 + $0x38] sm:$0xff] %vm26, %v2375
  %2466 = vst.msk [vmem:[%s7 + $0x40] sm:$0xff] %vm26, %v2380
  %2467 = vst.msk [vmem:[%s7 + $0x48] sm:$0xff] %vm26, %v2385
  %2468 = vst.msk [vmem:[%s7 + $0x50] sm:$0xff] %vm26, %v2390
  %2469 = vst.msk [vmem:[%s7 + $0x58] sm:$0xff] %vm26, %v2395
  %2470 = vst.msk [vmem:[%s7 + $0x60] sm:$0xff] %vm26, %v2400
  %2471 = vst.msk [vmem:[%s7 + $0x68] sm:$0xff] %vm26, %v2405
  %2472 = vst.msk [vmem:[%s7 + $0x70] sm:$0xff] %vm26, %v2410
  %2473 = vst.msk [vmem:[%s7 + $0x78] sm:$0xff] %vm26, %v2415
  %2474 = vst.msk [vmem:[%s7 + $0x80] sm:$0xff] %vm26, %v2420
  %2475 = vst.msk [vmem:[%s7 + $0x88] sm:$0xff] %vm26, %v2425
  %2476 = vst.msk [vmem:[%s7 + $0x90] sm:$0xff] %vm26, %v2430
  %2477 = vst.msk [vmem:[%s7 + $0x98] sm:$0xff] %vm26, %v2435
  %2478 = vst.msk [vmem:[%s7 + $0xa0] sm:$0xff] %vm26, %v2440
  %2479 = vst.msk [vmem:[%s7 + $0xa8] sm:$0xff] %vm26, %v2445
  %2480 = vst.msk [vmem:[%s7 + $0xb0] sm:$0xff] %vm26, %v2450
  %2481 = vst.msk [vmem:[%s7 + $0xb8] sm:$0xff] %vm26, %v2455
  %s2482 = scalar_lea.vmem %s0, 240
  %v2483 = vld [vmem:[%s2482] sm:$0xff]
  %v2484 = vld [vmem:[%s2482 + $0x8] sm:$0xff]
  %v2485 = vld [vmem:[%s2482 + $0x10] sm:$0xff]
  %v2486 = vld [vmem:[%s2482 + $0x18] sm:$0xff]
  %v2487 = vld [vmem:[%s2482 + $0x20] sm:$0xff]
  %v2488 = vld [vmem:[%s2482 + $0x28] sm:$0xff]
  %v2489 = vld [vmem:[%s2482 + $0x30] sm:$0xff]
  %v2490 = vld [vmem:[%s2482 + $0x38] sm:$0xff]
  %v2491 = vld [vmem:[%s2482 + $0x40] sm:$0xff]
  %v2492 = vld [vmem:[%s2482 + $0x48] sm:$0xff]
  %v2493 = vld [vmem:[%s2482 + $0x50] sm:$0xff]
  %v2494 = vld [vmem:[%s2482 + $0x58] sm:$0xff]
  %v2495 = vld [vmem:[%s2482 + $0x60] sm:$0xff]
  %v2496 = vld [vmem:[%s2482 + $0x68] sm:$0xff]
  %v2497 = vld [vmem:[%s2482 + $0x70] sm:$0xff]
  %v2498 = vld [vmem:[%s2482 + $0x78] sm:$0xff]
  %v2499 = vld [vmem:[%s2482 + $0x80] sm:$0xff]
  %v2500 = vld [vmem:[%s2482 + $0x88] sm:$0xff]
  %v2501 = vld [vmem:[%s2482 + $0x90] sm:$0xff]
  %v2502 = vld [vmem:[%s2482 + $0x98] sm:$0xff]
  %v2503 = vld [vmem:[%s2482 + $0xa0] sm:$0xff]
  %v2504 = vld [vmem:[%s2482 + $0xa8] sm:$0xff]
  %v2505 = vld [vmem:[%s2482 + $0xb0] sm:$0xff]
  %v2506 = vld [vmem:[%s2482 + $0xb8] sm:$0xff]
  %v2507 = vld [vmem:[%s2482 + $0xc0] sm:$0xff]
  %v2508 = vld [vmem:[%s2482 + $0xc8] sm:$0xff]
  %v2509 = vld [vmem:[%s2482 + $0xd0] sm:$0xff]
  %v2510 = vld [vmem:[%s2482 + $0xd8] sm:$0xff]
  %v2511 = vld [vmem:[%s2482 + $0xe0] sm:$0xff]
  %v2512 = vld [vmem:[%s2482 + $0xe8] sm:$0xff]
  %v2514 = vsel %vm114, %v2483, 0
  %v2517 = vsel %vm114, %v2484, 0
  %v2520 = vsel %vm114, %v2485, 0
  %v2523 = vsel %vm114, %v2486, 0
  %v2526 = vsel %vm114, %v2487, 0
  %v2529 = vsel %vm114, %v2488, 0
  %v2532 = vsel %vm114, %v2489, 0
  %v2535 = vsel %vm114, %v2490, 0
  %v2538 = vsel %vm114, %v2491, 0
  %v2541 = vsel %vm114, %v2492, 0
  %v2544 = vsel %vm114, %v2493, 0
  %v2547 = vsel %vm114, %v2494, 0
  %v2550 = vsel %vm114, %v2495, 0
  %v2553 = vsel %vm114, %v2496, 0
  %v2556 = vsel %vm114, %v2497, 0
  %v2559 = vsel %vm114, %v2498, 0
  %v2562 = vsel %vm114, %v2499, 0
  %v2565 = vsel %vm114, %v2500, 0
  %v2568 = vsel %vm114, %v2501, 0
  %v2571 = vsel %vm114, %v2502, 0
  %v2574 = vsel %vm114, %v2503, 0
  %v2577 = vsel %vm114, %v2504, 0
  %v2580 = vsel %vm114, %v2505, 0
  %v2583 = vsel %vm114, %v2506, 0
  %v2586 = vsel %vm114, %v2507, 0
  %v2589 = vsel %vm114, %v2508, 0
  %v2592 = vsel %vm114, %v2509, 0
  %v2595 = vsel %vm114, %v2510, 0
  %v2598 = vsel %vm114, %v2511, 0
  %v2601 = vsel %vm114, %v2512, 0
  %2603 = vmatprep.subr.mxu0 0.0
  %2604 = vmatpush1.msra.mxu0 %v207
  %2605 = vmatprep.subr.mxu0 0.0
  %2606 = vmatpush1.msra.mxu0 0.0
  %2607 = vmatprep.subr.mxu0 0.0
  %2608 = vmatpush1.msra.mxu0 0.0
  %2609 = vmatprep.subr.mxu0 0.0
  %2610 = vmatpush1.msra.mxu0 0.0
  %2611 = vmatprep.subr.mxu0 0.0
  %2612 = vmatpush1.msra.mxu0 0.0
  %2613 = vmatprep.subr.mxu0 0.0
  %2614 = vmatpush1.msra.mxu0 0.0
  %2615 = vmatprep.subr.mxu0 0.0
  %2616 = vmatpush1.msra.mxu0 0.0
  %2617 = vmatprep.subr.mxu0 0.0
  %2618 = vmatpush1.msra.mxu0 0.0
  %2619 = vmatprep.subr.mxu0 0.0
  %2620 = vmatpush1.msra.mxu0 0.0
  %2621 = vmatprep.subr.mxu0 0.0
  %2622 = vmatpush1.msra.mxu0 0.0
  %2623 = vmatprep.subr.mxu0 0.0
  %2624 = vmatpush1.msra.mxu0 0.0
  %2625 = vmatprep.subr.mxu0 0.0
  %2626 = vmatpush1.msra.mxu0 0.0
  %2627 = vmatprep.subr.mxu0 0.0
  %2628 = vmatpush1.msra.mxu0 0.0
  %2629 = vmatprep.subr.mxu0 0.0
  %2630 = vmatpush1.msra.mxu0 0.0
  %2631 = vmatprep.subr.mxu0 0.0
  %2632 = vmatpush1.msra.mxu0 0.0
  %2633 = vmatprep.subr.mxu0 0.0
  %2634 = vmatpush1.msra.mxu0 0.0
  %2635 = vmatprep.subr.mxu0 0.0
  %2636 = vmatpush1.msra.mxu0 0.0
  %2637 = vmatprep.subr.mxu0 0.0
  %2638 = vmatpush1.msra.mxu0 0.0
  %2639 = vmatprep.subr.mxu0 0.0
  %2640 = vmatpush1.msra.mxu0 0.0
  %2641 = vmatprep.subr.mxu0 0.0
  %2642 = vmatpush1.msra.mxu0 0.0
  %2643 = vmatprep.subr.mxu0 0.0
  %2644 = vmatpush1.msra.mxu0 0.0
  %2645 = vmatprep.subr.mxu0 0.0
  %2646 = vmatpush1.msra.mxu0 0.0
  %2647 = vmatprep.subr.mxu0 0.0
  %2648 = vmatpush1.msra.mxu0 0.0
  %2649 = vmatprep.subr.mxu0 0.0
  %2650 = vmatpush1.msra.mxu0 0.0
  %2651 = vmatprep.subr.mxu0 0.0
  %2652 = vmatpush1.msra.mxu0 0.0
  %2653 = vmatprep.subr.mxu0 0.0
  %2654 = vmatpush1.msra.mxu0 0.0
  %2655 = vmatprep.subr.mxu0 0.0
  %2656 = vmatpush1.msra.mxu0 0.0
  %2657 = vmatprep.subr.mxu0 0.0
  %2658 = vmatpush1.msra.mxu0 0.0
  %2659 = vmatprep.subr.mxu0 0.0
  %2660 = vmatpush1.msra.mxu0 0.0
  %2661 = vmatprep.subr.mxu0 0.0
  %2662 = vmatpush1.msra.mxu0 0.0
  %2663 = vmatprep.subr.mxu0 0.0
  %2664 = vmatpush1.msra.mxu0 0.0
  %2665 = vmatprep.subr.mxu0 0.0
  %2666 = vmatpush1.msra.mxu0 0.0
  %2667 = vmatprep.mubr.f32.mxu0 0.0
  %2668 = vmatmul.mubr.f32.gmra.mrb[0].mxu0 %v2514
  %v2669 = vpop.f32.mrb[0].mxu0
  %v2670 = vadd.f32 %v112, %v2669
  %v2671 = vpop.f32.mrb[0].mxu0
  %2672 = vmatprep.mubr.f32.mxu0 0.0
  %2673 = vmatmul.mubr.f32.gmra.mrb[0].mxu0 %v2517
  %v2674 = vpop.f32.mrb[0].mxu0
  %v2675 = vadd.f32 %v112, %v2674
  %v2676 = vpop.f32.mrb[0].mxu0
  %2677 = vmatprep.mubr.f32.mxu0 0.0
  %2678 = vmatmul.mubr.f32.gmra.mrb[0].mxu0 %v2520
  %v2679 = vpop.f32.mrb[0].mxu0
  %v2680 = vadd.f32 %v112, %v2679
  %v2681 = vpop.f32.mrb[0].mxu0
  %2682 = vmatprep.mubr.f32.mxu0 0.0
  %2683 = vmatmul.mubr.f32.gmra.mrb[0].mxu0 %v2523
  %v2684 = vpop.f32.mrb[0].mxu0
  %v2685 = vadd.f32 %v112, %v2684
  %v2686 = vpop.f32.mrb[0].mxu0
  %2687 = vmatprep.mubr.f32.mxu0 0.0
  %2688 = vmatmul.mubr.f32.gmra.mrb[0].mxu0 %v2526
  %v2689 = vpop.f32.mrb[0].mxu0
  %v2690 = vadd.f32 %v112, %v2689
  %v2691 = vpop.f32.mrb[0].mxu0
  %2692 = vmatprep.mubr.f32.mxu0 0.0
  %2693 = vmatmul.mubr.f32.gmra.mrb[0].mxu0 %v2529
  %v2694 = vpop.f32.mrb[0].mxu0
  %v2695 = vadd.f32 %v112, %v2694
  %v2696 = vpop.f32.mrb[0].mxu0
  %2697 = vmatprep.mubr.f32.mxu0 0.0
  %2698 = vmatmul.mubr.f32.gmra.mrb[0].mxu0 %v2532
  %v2699 = vpop.f32.mrb[0].mxu0
  %v2700 = vadd.f32 %v112, %v2699
  %v2701 = vpop.f32.mrb[0].mxu0
  %2702 = vmatprep.mubr.f32.mxu0 0.0
  %2703 = vmatmul.mubr.f32.gmra.mrb[0].mxu0 %v2535
  %v2704 = vpop.f32.mrb[0].mxu0
  %v2705 = vadd.f32 %v112, %v2704
  %v2706 = vpop.f32.mrb[0].mxu0
  %2707 = vmatprep.mubr.f32.mxu0 0.0
  %2708 = vmatmul.mubr.f32.gmra.mrb[0].mxu0 %v2538
  %v2709 = vpop.f32.mrb[0].mxu0
  %v2710 = vadd.f32 %v112, %v2709
  %v2711 = vpop.f32.mrb[0].mxu0
  %2712 = vmatprep.mubr.f32.mxu0 0.0
  %2713 = vmatmul.mubr.f32.gmra.mrb[0].mxu0 %v2541
  %v2714 = vpop.f32.mrb[0].mxu0
  %v2715 = vadd.f32 %v112, %v2714
  %v2716 = vpop.f32.mrb[0].mxu0
  %2717 = vmatprep.mubr.f32.mxu0 0.0
  %2718 = vmatmul.mubr.f32.gmra.mrb[0].mxu0 %v2544
  %v2719 = vpop.f32.mrb[0].mxu0
  %v2720 = vadd.f32 %v112, %v2719
  %v2721 = vpop.f32.mrb[0].mxu0
  %2722 = vmatprep.mubr.f32.mxu0 0.0
  %2723 = vmatmul.mubr.f32.gmra.mrb[0].mxu0 %v2547
  %v2724 = vpop.f32.mrb[0].mxu0
  %v2725 = vadd.f32 %v112, %v2724
  %v2726 = vpop.f32.mrb[0].mxu0
  %2727 = vmatprep.mubr.f32.mxu0 0.0
  %2728 = vmatmul.mubr.f32.gmra.mrb[0].mxu0 %v2550
  %v2729 = vpop.f32.mrb[0].mxu0
  %v2730 = vadd.f32 %v112, %v2729
  %v2731 = vpop.f32.mrb[0].mxu0
  %2732 = vmatprep.mubr.f32.mxu0 0.0
  %2733 = vmatmul.mubr.f32.gmra.mrb[0].mxu0 %v2553
  %v2734 = vpop.f32.mrb[0].mxu0
  %v2735 = vadd.f32 %v112, %v2734
  %v2736 = vpop.f32.mrb[0].mxu0
  %2737 = vmatprep.mubr.f32.mxu0 0.0
  %2738 = vmatmul.mubr.f32.gmra.mrb[0].mxu0 %v2556
  %v2739 = vpop.f32.mrb[0].mxu0
  %v2740 = vadd.f32 %v112, %v2739
  %v2741 = vpop.f32.mrb[0].mxu0
  %2742 = vmatprep.mubr.f32.mxu0 0.0
  %2743 = vmatmul.mubr.f32.gmra.mrb[0].mxu0 %v2559
  %v2744 = vpop.f32.mrb[0].mxu0
  %v2745 = vadd.f32 %v112, %v2744
  %v2746 = vpop.f32.mrb[0].mxu0
  %2747 = vmatprep.mubr.f32.mxu0 0.0
  %2748 = vmatmul.mubr.f32.gmra.mrb[0].mxu0 %v2562
  %v2749 = vpop.f32.mrb[0].mxu0
  %v2750 = vadd.f32 %v112, %v2749
  %v2751 = vpop.f32.mrb[0].mxu0
  %2752 = vmatprep.mubr.f32.mxu0 0.0
  %2753 = vmatmul.mubr.f32.gmra.mrb[0].mxu0 %v2565
  %v2754 = vpop.f32.mrb[0].mxu0
  %v2755 = vadd.f32 %v112, %v2754
  %v2756 = vpop.f32.mrb[0].mxu0
  %2757 = vmatprep.mubr.f32.mxu0 0.0
  %2758 = vmatmul.mubr.f32.gmra.mrb[0].mxu0 %v2568
  %v2759 = vpop.f32.mrb[0].mxu0
  %v2760 = vadd.f32 %v112, %v2759
  %v2761 = vpop.f32.mrb[0].mxu0
  %2762 = vmatprep.mubr.f32.mxu0 0.0
  %2763 = vmatmul.mubr.f32.gmra.mrb[0].mxu0 %v2571
  %v2764 = vpop.f32.mrb[0].mxu0
  %v2765 = vadd.f32 %v112, %v2764
  %v2766 = vpop.f32.mrb[0].mxu0
  %2767 = vmatprep.mubr.f32.mxu0 0.0
  %2768 = vmatmul.mubr.f32.gmra.mrb[0].mxu0 %v2574
  %v2769 = vpop.f32.mrb[0].mxu0
  %v2770 = vadd.f32 %v112, %v2769
  %v2771 = vpop.f32.mrb[0].mxu0
  %2772 = vmatprep.mubr.f32.mxu0 0.0
  %2773 = vmatmul.mubr.f32.gmra.mrb[0].mxu0 %v2577
  %v2774 = vpop.f32.mrb[0].mxu0
  %v2775 = vadd.f32 %v112, %v2774
  %v2776 = vpop.f32.mrb[0].mxu0
  %2777 = vmatprep.mubr.f32.mxu0 0.0
  %2778 = vmatmul.mubr.f32.gmra.mrb[0].mxu0 %v2580
  %v2779 = vpop.f32.mrb[0].mxu0
  %v2780 = vadd.f32 %v112, %v2779
  %v2781 = vpop.f32.mrb[0].mxu0
  %2782 = vmatprep.mubr.f32.mxu0 0.0
  %2783 = vmatmul.mubr.f32.gmra.mrb[0].mxu0 %v2583
  %v2784 = vpop.f32.mrb[0].mxu0
  %v2785 = vadd.f32 %v112, %v2784
  %v2786 = vpop.f32.mrb[0].mxu0
  %2787 = vmatprep.mubr.f32.mxu0 0.0
  %2788 = vmatmul.mubr.f32.gmra.mrb[0].mxu0 %v2586
  %v2789 = vpop.f32.mrb[0].mxu0
  %v2790 = vadd.f32 %v112, %v2789
  %v2791 = vpop.f32.mrb[0].mxu0
  %2792 = vmatprep.mubr.f32.mxu0 0.0
  %2793 = vmatmul.mubr.f32.gmra.mrb[0].mxu0 %v2589
  %v2794 = vpop.f32.mrb[0].mxu0
  %v2795 = vadd.f32 %v112, %v2794
  %v2796 = vpop.f32.mrb[0].mxu0
  %2797 = vmatprep.mubr.f32.mxu0 0.0
  %2798 = vmatmul.mubr.f32.gmra.mrb[0].mxu0 %v2592
  %v2799 = vpop.f32.mrb[0].mxu0
  %v2800 = vadd.f32 %v112, %v2799
  %v2801 = vpop.f32.mrb[0].mxu0
  %2802 = vmatprep.mubr.f32.mxu0 0.0
  %2803 = vmatmul.mubr.f32.gmra.mrb[0].mxu0 %v2595
  %v2804 = vpop.f32.mrb[0].mxu0
  %v2805 = vadd.f32 %v112, %v2804
  %v2806 = vpop.f32.mrb[0].mxu0
  %2807 = vmatprep.mubr.f32.mxu0 0.0
  %2808 = vmatmul.mubr.f32.gmra.mrb[0].mxu0 %v2598
  %v2809 = vpop.f32.mrb[0].mxu0
  %v2810 = vadd.f32 %v112, %v2809
  %v2811 = vpop.f32.mrb[0].mxu0
  %2812 = vmatprep.mubr.f32.mxu0 0.0
  %2813 = vmatmul.mubr.f32.gmra.mrb[0].mxu0 %v2601
  %v2814 = vpop.f32.mrb[0].mxu0
  %v2815 = vadd.f32 %v112, %v2814
  %v2816 = vpop.f32.mrb[0].mxu0
  %2817 = vdwg.mxu0
  %v2818 = vmax.f32 %v2670, 0.0
  %v2819 = vmax.f32 %v2675, 0.0
  %v2820 = vmax.f32 %v2680, 0.0
  %v2821 = vmax.f32 %v2685, 0.0
  %v2822 = vmax.f32 %v2690, 0.0
  %v2823 = vmax.f32 %v2695, 0.0
  %v2824 = vmax.f32 %v2700, 0.0
  %v2825 = vmax.f32 %v2705, 0.0
  %v2826 = vmax.f32 %v2710, 0.0
  %v2827 = vmax.f32 %v2715, 0.0
  %v2828 = vmax.f32 %v2720, 0.0
  %v2829 = vmax.f32 %v2725, 0.0
  %v2830 = vmax.f32 %v2730, 0.0
  %v2831 = vmax.f32 %v2735, 0.0
  %v2832 = vmax.f32 %v2740, 0.0
  %v2833 = vmax.f32 %v2745, 0.0
  %v2834 = vmax.f32 %v2750, 0.0
  %v2835 = vmax.f32 %v2755, 0.0
  %v2836 = vmax.f32 %v2760, 0.0
  %v2837 = vmax.f32 %v2765, 0.0
  %v2838 = vmax.f32 %v2770, 0.0
  %v2839 = vmax.f32 %v2775, 0.0
  %v2840 = vmax.f32 %v2780, 0.0
  %v2841 = vmax.f32 %v2785, 0.0
  %v2842 = vmax.f32 %v2790, 0.0
  %v2843 = vmax.f32 %v2795, 0.0
  %v2844 = vmax.f32 %v2800, 0.0
  %v2845 = vmax.f32 %v2805, 0.0
  %v2846 = vmax.f32 %v2810, 0.0
  %v2847 = vmax.f32 %v2815, 0.0
  %2848 = vst.msk [vmem:[#allocation2] sm:$0xff] %vm26, %v2818
  %2849 = vst.msk [vmem:[#allocation2 + $0x8] sm:$0xff] %vm26, %v2819
  %2850 = vst.msk [vmem:[#allocation2 + $0x10] sm:$0xff] %vm26, %v2820
  %2851 = vst.msk [vmem:[#allocation2 + $0x18] sm:$0xff] %vm26, %v2821
  %2852 = vst.msk [vmem:[#allocation2 + $0x20] sm:$0xff] %vm26, %v2822
  %2853 = vst.msk [vmem:[#allocation2 + $0x28] sm:$0xff] %vm26, %v2823
  %2854 = vst.msk [vmem:[#allocation2 + $0x30] sm:$0xff] %vm26, %v2824
  %2855 = vst.msk [vmem:[#allocation2 + $0x38] sm:$0xff] %vm26, %v2825
  %2856 = vst.msk [vmem:[#allocation2 + $0x40] sm:$0xff] %vm26, %v2826
  %2857 = vst.msk [vmem:[#allocation2 + $0x48] sm:$0xff] %vm26, %v2827
  %2858 = vst.msk [vmem:[#allocation2 + $0x50] sm:$0xff] %vm26, %v2828
  %2859 = vst.msk [vmem:[#allocation2 + $0x58] sm:$0xff] %vm26, %v2829
  %2860 = vst.msk [vmem:[#allocation2 + $0x60] sm:$0xff] %vm26, %v2830
  %2861 = vst.msk [vmem:[#allocation2 + $0x68] sm:$0xff] %vm26, %v2831
  %2862 = vst.msk [vmem:[#allocation2 + $0x70] sm:$0xff] %vm26, %v2832
  %2863 = vst.msk [vmem:[#allocation2 + $0x78] sm:$0xff] %vm26, %v2833
  %2864 = vst.msk [vmem:[#allocation2 + $0x80] sm:$0xff] %vm26, %v2834
  %2865 = vst.msk [vmem:[#allocation2 + $0x88] sm:$0xff] %vm26, %v2835
  %2866 = vst.msk [vmem:[#allocation2 + $0x90] sm:$0xff] %vm26, %v2836
  %2867 = vst.msk [vmem:[#allocation2 + $0x98] sm:$0xff] %vm26, %v2837
  %2868 = vst.msk [vmem:[#allocation2 + $0xa0] sm:$0xff] %vm26, %v2838
  %2869 = vst.msk [vmem:[#allocation2 + $0xa8] sm:$0xff] %vm26, %v2839
  %2870 = vst.msk [vmem:[#allocation2 + $0xb0] sm:$0xff] %vm26, %v2840
  %2871 = vst.msk [vmem:[#allocation2 + $0xb8] sm:$0xff] %vm26, %v2841
  %2872 = vst.msk [vmem:[#allocation2 + $0xc0] sm:$0xff] %vm26, %v2842
  %2873 = vst.msk [vmem:[#allocation2 + $0xc8] sm:$0xff] %vm26, %v2843
  %2874 = vst.msk [vmem:[#allocation2 + $0xd0] sm:$0xff] %vm26, %v2844
  %2875 = vst.msk [vmem:[#allocation2 + $0xd8] sm:$0xff] %vm26, %v2845
  %2876 = vst.msk [vmem:[#allocation2 + $0xe0] sm:$0xff] %vm26, %v2846
  %2877 = vst.msk [vmem:[#allocation2 + $0xe8] sm:$0xff] %vm26, %v2847
  %v2878 = vld [vmem:[#allocation2] sm:$0xff]
  %v2879 = vld [vmem:[#allocation2 + $0x8] sm:$0xff]
  %v2880 = vld [vmem:[#allocation2 + $0x10] sm:$0xff]
  %v2881 = vld [vmem:[#allocation2 + $0x18] sm:$0xff]
  %v2882 = vld [vmem:[#allocation2 + $0x20] sm:$0xff]
  %v2883 = vld [vmem:[#allocation2 + $0x28] sm:$0xff]
  %v2884 = vld [vmem:[#allocation2 + $0x30] sm:$0xff]
  %v2885 = vld [vmem:[#allocation2 + $0x38] sm:$0xff]
  %v2886 = vld [vmem:[#allocation2 + $0x40] sm:$0xff]
  %v2887 = vld [vmem:[#allocation2 + $0x48] sm:$0xff]
  %v2888 = vld [vmem:[#allocation2 + $0x50] sm:$0xff]
  %v2889 = vld [vmem:[#allocation2 + $0x58] sm:$0xff]
  %v2890 = vld [vmem:[#allocation2 + $0x60] sm:$0xff]
  %v2891 = vld [vmem:[#allocation2 + $0x68] sm:$0xff]
  %v2892 = vld [vmem:[#allocation2 + $0x70] sm:$0xff]
  %v2893 = vld [vmem:[#allocation2 + $0x78] sm:$0xff]
  %v2894 = vld [vmem:[#allocation2 + $0x80] sm:$0xff]
  %v2895 = vld [vmem:[#allocation2 + $0x88] sm:$0xff]
  %v2896 = vld [vmem:[#allocation2 + $0x90] sm:$0xff]
  %v2897 = vld [vmem:[#allocation2 + $0x98] sm:$0xff]
  %v2898 = vld [vmem:[#allocation2 + $0xa0] sm:$0xff]
  %v2899 = vld [vmem:[#allocation2 + $0xa8] sm:$0xff]
  %v2900 = vld [vmem:[#allocation2 + $0xb0] sm:$0xff]
  %v2901 = vld [vmem:[#allocation2 + $0xb8] sm:$0xff]
  %v2902 = vld [vmem:[#allocation2 + $0xc0] sm:$0xff]
  %v2903 = vld [vmem:[#allocation2 + $0xc8] sm:$0xff]
  %v2904 = vld [vmem:[#allocation2 + $0xd0] sm:$0xff]
  %v2905 = vld [vmem:[#allocation2 + $0xd8] sm:$0xff]
  %v2906 = vld [vmem:[#allocation2 + $0x1] sm:$0xff]
  %v2907 = vld [vmem:[#allocation2 + $0x9] sm:$0xff]
  %v2908 = vld [vmem:[#allocation2 + $0x11] sm:$0xff]
  %v2909 = vld [vmem:[#allocation2 + $0x19] sm:$0xff]
  %v2910 = vld [vmem:[#allocation2 + $0x21] sm:$0xff]
  %v2911 = vld [vmem:[#allocation2 + $0x29] sm:$0xff]
  %v2912 = vld [vmem:[#allocation2 + $0x31] sm:$0xff]
  %v2913 = vld [vmem:[#allocation2 + $0x39] sm:$0xff]
  %v2914 = vld [vmem:[#allocation2 + $0x41] sm:$0xff]
  %v2915 = vld [vmem:[#allocation2 + $0x49] sm:$0xff]
  %v2916 = vld [vmem:[#allocation2 + $0x51] sm:$0xff]
  %v2917 = vld [vmem:[#allocation2 + $0x59] sm:$0xff]
  %v2918 = vld [vmem:[#allocation2 + $0x61] sm:$0xff]
  %v2919 = vld [vmem:[#allocation2 + $0x69] sm:$0xff]
  %v2920 = vld [vmem:[#allocation2 + $0x71] sm:$0xff]
  %v2921 = vld [vmem:[#allocation2 + $0x79] sm:$0xff]
  %v2922 = vld [vmem:[#allocation2 + $0x81] sm:$0xff]
  %v2923 = vld [vmem:[#allocation2 + $0x89] sm:$0xff]
  %v2924 = vld [vmem:[#allocation2 + $0x91] sm:$0xff]
  %v2925 = vld [vmem:[#allocation2 + $0x99] sm:$0xff]
  %v2926 = vld [vmem:[#allocation2 + $0xa1] sm:$0xff]
  %v2927 = vld [vmem:[#allocation2 + $0xa9] sm:$0xff]
  %v2928 = vld [vmem:[#allocation2 + $0xb1] sm:$0xff]
  %v2929 = vld [vmem:[#allocation2 + $0xb9] sm:$0xff]
  %v2930 = vld [vmem:[#allocation2 + $0xc1] sm:$0xff]
  %v2931 = vld [vmem:[#allocation2 + $0xc9] sm:$0xff]
  %v2932 = vld [vmem:[#allocation2 + $0xd1] sm:$0xff]
  %v2933 = vld [vmem:[#allocation2 + $0xd9] sm:$0xff]
  %v2934 = vld [vmem:[#allocation2 + $0xe0] sm:$0xff]
  %v2935 = vld [vmem:[#allocation2 + $0xe8] sm:$0xff]
  %v2936 = vld [vmem:[#allocation2 + $0xe1] sm:$0xff]
  %v2937 = vld [vmem:[#allocation2 + $0xe9] sm:$0xff]
  %2966 = vrot.lane.b32.xlu0 %v2906, 16
  %v2967 = vpop.permute.xlu0 %2966
  %2968 = vrot.lane.b32.xlu0 %v2907, 16
  %v2969 = vpop.permute.xlu0 %2968
  %2970 = vrot.lane.b32.xlu0 %v2908, 16
  %v2971 = vpop.permute.xlu0 %2970
  %2972 = vrot.lane.b32.xlu0 %v2909, 16
  %v2973 = vpop.permute.xlu0 %2972
  %2974 = vrot.lane.b32.xlu0 %v2910, 16
  %v2975 = vpop.permute.xlu0 %2974
  %2976 = vrot.lane.b32.xlu0 %v2911, 16
  %v2977 = vpop.permute.xlu0 %2976
  %2978 = vrot.lane.b32.xlu0 %v2912, 16
  %v2979 = vpop.permute.xlu0 %2978
  %2980 = vrot.lane.b32.xlu0 %v2913, 16
  %v2981 = vpop.permute.xlu0 %2980
  %2982 = vrot.lane.b32.xlu0 %v2914, 16
  %v2983 = vpop.permute.xlu0 %2982
  %2984 = vrot.lane.b32.xlu0 %v2915, 16
  %v2985 = vpop.permute.xlu0 %2984
  %2986 = vrot.lane.b32.xlu0 %v2916, 16
  %v2987 = vpop.permute.xlu0 %2986
  %2988 = vrot.lane.b32.xlu0 %v2917, 16
  %v2989 = vpop.permute.xlu0 %2988
  %2990 = vrot.lane.b32.xlu0 %v2918, 16
  %v2991 = vpop.permute.xlu0 %2990
  %2992 = vrot.lane.b32.xlu0 %v2919, 16
  %v2993 = vpop.permute.xlu0 %2992
  %2994 = vrot.lane.b32.xlu0 %v2920, 16
  %v2995 = vpop.permute.xlu0 %2994
  %2996 = vrot.lane.b32.xlu0 %v2921, 16
  %v2997 = vpop.permute.xlu0 %2996
  %2998 = vrot.lane.b32.xlu0 %v2922, 16
  %v2999 = vpop.permute.xlu0 %2998
  %3000 = vrot.lane.b32.xlu0 %v2923, 16
  %v3001 = vpop.permute.xlu0 %3000
  %3002 = vrot.lane.b32.xlu0 %v2924, 16
  %v3003 = vpop.permute.xlu0 %3002
  %3004 = vrot.lane.b32.xlu0 %v2925, 16
  %v3005 = vpop.permute.xlu0 %3004
  %3006 = vrot.lane.b32.xlu0 %v2926, 16
  %v3007 = vpop.permute.xlu0 %3006
  %3008 = vrot.lane.b32.xlu0 %v2927, 16
  %v3009 = vpop.permute.xlu0 %3008
  %3010 = vrot.lane.b32.xlu0 %v2928, 16
  %v3011 = vpop.permute.xlu0 %3010
  %3012 = vrot.lane.b32.xlu0 %v2929, 16
  %v3013 = vpop.permute.xlu0 %3012
  %3014 = vrot.lane.b32.xlu0 %v2930, 16
  %v3015 = vpop.permute.xlu0 %3014
  %3016 = vrot.lane.b32.xlu0 %v2931, 16
  %v3017 = vpop.permute.xlu0 %3016
  %3018 = vrot.lane.b32.xlu0 %v2932, 16
  %v3019 = vpop.permute.xlu0 %3018
  %3020 = vrot.lane.b32.xlu0 %v2933, 16
  %v3021 = vpop.permute.xlu0 %3020
  %3078 = vrot.lane.b32.xlu0 %v2880, 32
  %v3079 = vpop.permute.xlu0 %3078
  %3080 = vrot.lane.b32.xlu0 %v2881, 32
  %v3081 = vpop.permute.xlu0 %3080
  %3082 = vrot.lane.b32.xlu0 %v2882, 32
  %v3083 = vpop.permute.xlu0 %3082
  %3084 = vrot.lane.b32.xlu0 %v2883, 32
  %v3085 = vpop.permute.xlu0 %3084
  %3086 = vrot.lane.b32.xlu0 %v2884, 32
  %v3087 = vpop.permute.xlu0 %3086
  %3088 = vrot.lane.b32.xlu0 %v2885, 32
  %v3089 = vpop.permute.xlu0 %3088
  %3090 = vrot.lane.b32.xlu0 %v2886, 32
  %v3091 = vpop.permute.xlu0 %3090
  %3092 = vrot.lane.b32.xlu0 %v2887, 32
  %v3093 = vpop.permute.xlu0 %3092
  %3094 = vrot.lane.b32.xlu0 %v2888, 32
  %v3095 = vpop.permute.xlu0 %3094
  %3096 = vrot.lane.b32.xlu0 %v2889, 32
  %v3097 = vpop.permute.xlu0 %3096
  %3098 = vrot.lane.b32.xlu0 %v2890, 32
  %v3099 = vpop.permute.xlu0 %3098
  %3100 = vrot.lane.b32.xlu0 %v2891, 32
  %v3101 = vpop.permute.xlu0 %3100
  %3102 = vrot.lane.b32.xlu0 %v2892, 32
  %v3103 = vpop.permute.xlu0 %3102
  %3104 = vrot.lane.b32.xlu0 %v2893, 32
  %v3105 = vpop.permute.xlu0 %3104
  %3106 = vrot.lane.b32.xlu0 %v2894, 32
  %v3107 = vpop.permute.xlu0 %3106
  %3108 = vrot.lane.b32.xlu0 %v2895, 32
  %v3109 = vpop.permute.xlu0 %3108
  %3110 = vrot.lane.b32.xlu0 %v2896, 32
  %v3111 = vpop.permute.xlu0 %3110
  %3112 = vrot.lane.b32.xlu0 %v2897, 32
  %v3113 = vpop.permute.xlu0 %3112
  %3114 = vrot.lane.b32.xlu0 %v2898, 32
  %v3115 = vpop.permute.xlu0 %3114
  %3116 = vrot.lane.b32.xlu0 %v2899, 32
  %v3117 = vpop.permute.xlu0 %3116
  %3118 = vrot.lane.b32.xlu0 %v2900, 32
  %v3119 = vpop.permute.xlu0 %3118
  %3120 = vrot.lane.b32.xlu0 %v2901, 32
  %v3121 = vpop.permute.xlu0 %3120
  %3122 = vrot.lane.b32.xlu0 %v2902, 32
  %v3123 = vpop.permute.xlu0 %3122
  %3124 = vrot.lane.b32.xlu0 %v2903, 32
  %v3125 = vpop.permute.xlu0 %3124
  %3126 = vrot.lane.b32.xlu0 %v2904, 32
  %v3127 = vpop.permute.xlu0 %3126
  %3128 = vrot.lane.b32.xlu0 %v2905, 32
  %v3129 = vpop.permute.xlu0 %3128
  %3130 = vrot.lane.b32.xlu0 %v2934, 32
  %v3131 = vpop.permute.xlu0 %3130
  %3132 = vrot.lane.b32.xlu0 %v2935, 32
  %v3133 = vpop.permute.xlu0 %3132
  %3164 = vrot.lane.b32.xlu0 %v2908, 48
  %v3165 = vpop.permute.xlu0 %3164
  %3166 = vrot.lane.b32.xlu0 %v2909, 48
  %v3167 = vpop.permute.xlu0 %3166
  %3168 = vrot.lane.b32.xlu0 %v2910, 48
  %v3169 = vpop.permute.xlu0 %3168
  %3170 = vrot.lane.b32.xlu0 %v2911, 48
  %v3171 = vpop.permute.xlu0 %3170
  %3172 = vrot.lane.b32.xlu0 %v2912, 48
  %v3173 = vpop.permute.xlu0 %3172
  %3174 = vrot.lane.b32.xlu0 %v2913, 48
  %v3175 = vpop.permute.xlu0 %3174
  %3176 = vrot.lane.b32.xlu0 %v2914, 48
  %v3177 = vpop.permute.xlu0 %3176
  %3178 = vrot.lane.b32.xlu0 %v2915, 48
  %v3179 = vpop.permute.xlu0 %3178
  %3180 = vrot.lane.b32.xlu0 %v2916, 48
  %v3181 = vpop.permute.xlu0 %3180
  %3182 = vrot.lane.b32.xlu0 %v2917, 48
  %v3183 = vpop.permute.xlu0 %3182
  %3184 = vrot.lane.b32.xlu0 %v2918, 48
  %v3185 = vpop.permute.xlu0 %3184
  %3186 = vrot.lane.b32.xlu0 %v2919, 48
  %v3187 = vpop.permute.xlu0 %3186
  %3188 = vrot.lane.b32.xlu0 %v2920, 48
  %v3189 = vpop.permute.xlu0 %3188
  %3190 = vrot.lane.b32.xlu0 %v2921, 48
  %v3191 = vpop.permute.xlu0 %3190
  %3192 = vrot.lane.b32.xlu0 %v2922, 48
  %v3193 = vpop.permute.xlu0 %3192
  %3194 = vrot.lane.b32.xlu0 %v2923, 48
  %v3195 = vpop.permute.xlu0 %3194
  %3196 = vrot.lane.b32.xlu0 %v2924, 48
  %v3197 = vpop.permute.xlu0 %3196
  %3198 = vrot.lane.b32.xlu0 %v2925, 48
  %v3199 = vpop.permute.xlu0 %3198
  %3200 = vrot.lane.b32.xlu0 %v2926, 48
  %v3201 = vpop.permute.xlu0 %3200
  %3202 = vrot.lane.b32.xlu0 %v2927, 48
  %v3203 = vpop.permute.xlu0 %3202
  %3204 = vrot.lane.b32.xlu0 %v2928, 48
  %v3205 = vpop.permute.xlu0 %3204
  %3206 = vrot.lane.b32.xlu0 %v2929, 48
  %v3207 = vpop.permute.xlu0 %3206
  %3208 = vrot.lane.b32.xlu0 %v2930, 48
  %v3209 = vpop.permute.xlu0 %3208
  %3210 = vrot.lane.b32.xlu0 %v2931, 48
  %v3211 = vpop.permute.xlu0 %3210
  %3212 = vrot.lane.b32.xlu0 %v2932, 48
  %v3213 = vpop.permute.xlu0 %3212
  %3214 = vrot.lane.b32.xlu0 %v2933, 48
  %v3215 = vpop.permute.xlu0 %3214
  %3216 = vrot.lane.b32.xlu0 %v2936, 48
  %v3217 = vpop.permute.xlu0 %3216
  %3218 = vrot.lane.b32.xlu0 %v2937, 48
  %v3219 = vpop.permute.xlu0 %3218
  %v3248 = vsel %vm26, %v2878, %v2967
  %v3249 = vsel %vm26, %v2879, %v2969
  %v3250 = vsel %vm26, %v2880, %v2971
  %v3251 = vsel %vm26, %v2881, %v2973
  %v3252 = vsel %vm26, %v2882, %v2975
  %v3253 = vsel %vm26, %v2883, %v2977
  %v3254 = vsel %vm26, %v2884, %v2979
  %v3255 = vsel %vm26, %v2885, %v2981
  %v3256 = vsel %vm26, %v2886, %v2983
  %v3257 = vsel %vm26, %v2887, %v2985
  %v3258 = vsel %vm26, %v2888, %v2987
  %v3259 = vsel %vm26, %v2889, %v2989
  %v3260 = vsel %vm26, %v2890, %v2991
  %v3261 = vsel %vm26, %v2891, %v2993
  %v3262 = vsel %vm26, %v2892, %v2995
  %v3263 = vsel %vm26, %v2893, %v2997
  %v3264 = vsel %vm26, %v2894, %v2999
  %v3265 = vsel %vm26, %v2895, %v3001
  %v3266 = vsel %vm26, %v2896, %v3003
  %v3267 = vsel %vm26, %v2897, %v3005
  %v3268 = vsel %vm26, %v2898, %v3007
  %v3269 = vsel %vm26, %v2899, %v3009
  %v3270 = vsel %vm26, %v2900, %v3011
  %v3271 = vsel %vm26, %v2901, %v3013
  %v3272 = vsel %vm26, %v2902, %v3015
  %v3273 = vsel %vm26, %v2903, %v3017
  %v3274 = vsel %vm26, %v2904, %v3019
  %v3275 = vsel %vm26, %v2905, %v3021
  %v3276 = vsel %vm28, %v3248, %v3079
  %v3277 = vsel %vm28, %v3249, %v3081
  %v3278 = vsel %vm28, %v3250, %v3083
  %v3279 = vsel %vm28, %v3251, %v3085
  %v3280 = vsel %vm28, %v3252, %v3087
  %v3281 = vsel %vm28, %v3253, %v3089
  %v3282 = vsel %vm28, %v3254, %v3091
  %v3283 = vsel %vm28, %v3255, %v3093
  %v3284 = vsel %vm28, %v3256, %v3095
  %v3285 = vsel %vm28, %v3257, %v3097
  %v3286 = vsel %vm28, %v3258, %v3099
  %v3287 = vsel %vm28, %v3259, %v3101
  %v3288 = vsel %vm28, %v3260, %v3103
  %v3289 = vsel %vm28, %v3261, %v3105
  %v3290 = vsel %vm28, %v3262, %v3107
  %v3291 = vsel %vm28, %v3263, %v3109
  %v3292 = vsel %vm28, %v3264, %v3111
  %v3293 = vsel %vm28, %v3265, %v3113
  %v3294 = vsel %vm28, %v3266, %v3115
  %v3295 = vsel %vm28, %v3267, %v3117
  %v3296 = vsel %vm28, %v3268, %v3119
  %v3297 = vsel %vm28, %v3269, %v3121
  %v3298 = vsel %vm28, %v3270, %v3123
  %v3299 = vsel %vm28, %v3271, %v3125
  %v3300 = vsel %vm28, %v3272, %v3127
  %v3301 = vsel %vm28, %v3273, %v3129
  %v3302 = vsel %vm28, %v3274, %v3131
  %v3303 = vsel %vm28, %v3275, %v3133
  %v3304 = vsel %vm910, %v3276, %v3165
  %v3305 = vsel %vm910, %v3277, %v3167
  %v3306 = vsel %vm910, %v3278, %v3169
  %v3307 = vsel %vm910, %v3279, %v3171
  %v3308 = vsel %vm910, %v3280, %v3173
  %v3309 = vsel %vm910, %v3281, %v3175
  %v3310 = vsel %vm910, %v3282, %v3177
  %v3311 = vsel %vm910, %v3283, %v3179
  %v3312 = vsel %vm910, %v3284, %v3181
  %v3313 = vsel %vm910, %v3285, %v3183
  %v3314 = vsel %vm910, %v3286, %v3185
  %v3315 = vsel %vm910, %v3287, %v3187
  %v3316 = vsel %vm910, %v3288, %v3189
  %v3317 = vsel %vm910, %v3289, %v3191
  %v3318 = vsel %vm910, %v3290, %v3193
  %v3319 = vsel %vm910, %v3291, %v3195
  %v3320 = vsel %vm910, %v3292, %v3197
  %v3321 = vsel %vm910, %v3293, %v3199
  %v3322 = vsel %vm910, %v3294, %v3201
  %v3323 = vsel %vm910, %v3295, %v3203
  %v3324 = vsel %vm910, %v3296, %v3205
  %v3325 = vsel %vm910, %v3297, %v3207
  %v3326 = vsel %vm910, %v3298, %v3209
  %v3327 = vsel %vm910, %v3299, %v3211
  %v3328 = vsel %vm910, %v3300, %v3213
  %v3329 = vsel %vm910, %v3301, %v3215
  %v3330 = vsel %vm910, %v3302, %v3217
  %v3331 = vsel %vm910, %v3303, %v3219
  %v3333 = vsel %vm945, %v3304, 0
  %v3336 = vsel %vm945, %v3305, 0
  %v3339 = vsel %vm945, %v3306, 0
  %v3342 = vsel %vm945, %v3307, 0
  %v3345 = vsel %vm945, %v3308, 0
  %v3348 = vsel %vm945, %v3309, 0
  %v3351 = vsel %vm945, %v3310, 0
  %v3354 = vsel %vm945, %v3311, 0
  %v3357 = vsel %vm945, %v3312, 0
  %v3360 = vsel %vm945, %v3313, 0
  %v3363 = vsel %vm945, %v3314, 0
  %v3366 = vsel %vm945, %v3315, 0
  %v3369 = vsel %vm945, %v3316, 0
  %v3372 = vsel %vm945, %v3317, 0
  %v3375 = vsel %vm945, %v3318, 0
  %v3378 = vsel %vm945, %v3319, 0
  %v3381 = vsel %vm945, %v3320, 0
  %v3384 = vsel %vm945, %v3321, 0
  %v3387 = vsel %vm945, %v3322, 0
  %v3390 = vsel %vm945, %v3323, 0
  %v3393 = vsel %vm945, %v3324, 0
  %v3396 = vsel %vm945, %v3325, 0
  %v3399 = vsel %vm945, %v3326, 0
  %v3402 = vsel %vm945, %v3327, 0
  %v3405 = vsel %vm945, %v3328, 0
  %v3408 = vsel %vm945, %v3329, 0
  %v3411 = vsel %vm945, %v3330, 0
  %v3414 = vsel %vm945, %v3331, 0
  %3416 = vmatprep.subr.mxu0 0.0
  %3417 = vmatpush1.msra.mxu0 %v32
  %3418 = vmatprep.subr.mxu0 0.0
  %3419 = vmatpush1.msra.mxu0 %v33
  %3420 = vmatprep.subr.mxu0 0.0
  %3421 = vmatpush1.msra.mxu0 %v34
  %3422 = vmatprep.subr.mxu0 0.0
  %3423 = vmatpush1.msra.mxu0 %v35
  %3424 = vmatprep.subr.mxu0 0.0
  %3425 = vmatpush1.msra.mxu0 %v36
  %3426 = vmatprep.subr.mxu0 0.0
  %3427 = vmatpush1.msra.mxu0 %v37
  %3428 = vmatprep.subr.mxu0 0.0
  %3429 = vmatpush1.msra.mxu0 %v38
  %3430 = vmatprep.subr.mxu0 0.0
  %3431 = vmatpush1.msra.mxu0 %v39
  %3432 = vmatprep.subr.mxu0 0.0
  %3433 = vmatpush1.msra.mxu0 0.0
  %3434 = vmatprep.subr.mxu0 0.0
  %3435 = vmatpush1.msra.mxu0 0.0
  %3436 = vmatprep.subr.mxu0 0.0
  %3437 = vmatpush1.msra.mxu0 0.0
  %3438 = vmatprep.subr.mxu0 0.0
  %3439 = vmatpush1.msra.mxu0 0.0
  %3440 = vmatprep.subr.mxu0 0.0
  %3441 = vmatpush1.msra.mxu0 0.0
  %3442 = vmatprep.subr.mxu0 0.0
  %3443 = vmatpush1.msra.mxu0 0.0
  %3444 = vmatprep.subr.mxu0 0.0
  %3445 = vmatpush1.msra.mxu0 0.0
  %3446 = vmatprep.subr.mxu0 0.0
  %3447 = vmatpush1.msra.mxu0 0.0
  %3448 = vmatprep.subr.mxu0 0.0
  %3449 = vmatpush1.msra.mxu0 0.0
  %3450 = vmatprep.subr.mxu0 0.0
  %3451 = vmatpush1.msra.mxu0 0.0
  %3452 = vmatprep.subr.mxu0 0.0
  %3453 = vmatpush1.msra.mxu0 0.0
  %3454 = vmatprep.subr.mxu0 0.0
  %3455 = vmatpush1.msra.mxu0 0.0
  %3456 = vmatprep.subr.mxu0 0.0
  %3457 = vmatpush1.msra.mxu0 0.0
  %3458 = vmatprep.subr.mxu0 0.0
  %3459 = vmatpush1.msra.mxu0 0.0
  %3460 = vmatprep.subr.mxu0 0.0
  %3461 = vmatpush1.msra.mxu0 0.0
  %3462 = vmatprep.subr.mxu0 0.0
  %3463 = vmatpush1.msra.mxu0 0.0
  %3464 = vmatprep.subr.mxu0 0.0
  %3465 = vmatpush1.msra.mxu0 0.0
  %3466 = vmatprep.subr.mxu0 0.0
  %3467 = vmatpush1.msra.mxu0 0.0
  %3468 = vmatprep.subr.mxu0 0.0
  %3469 = vmatpush1.msra.mxu0 0.0
  %3470 = vmatprep.subr.mxu0 0.0
  %3471 = vmatpush1.msra.mxu0 0.0
  %3472 = vmatprep.subr.mxu0 0.0
  %3473 = vmatpush1.msra.mxu0 0.0
  %3474 = vmatprep.subr.mxu0 0.0
  %3475 = vmatpush1.msra.mxu0 0.0
  %3476 = vmatprep.subr.mxu0 0.0
  %3477 = vmatpush1.msra.mxu0 0.0
  %3478 = vmatprep.subr.mxu0 0.0
  %3479 = vmatpush1.msra.mxu0 0.0
  %3480 = vmatprep.mubr.f32.mxu0 0.0
  %3481 = vmatmul.mubr.f32.gmra.mrb[0].mxu0 %v3333
  %v3482 = vpop.f32.mrb[0].mxu0
  %v3483 = vadd.f32 %v943, %v3482
  %v3484 = vpop.f32.mrb[0].mxu0
  %3485 = vmatprep.mubr.f32.mxu0 0.0
  %3486 = vmatmul.mubr.f32.gmra.mrb[0].mxu0 %v3336
  %v3487 = vpop.f32.mrb[0].mxu0
  %v3488 = vadd.f32 %v943, %v3487
  %v3489 = vpop.f32.mrb[0].mxu0
  %3490 = vmatprep.mubr.f32.mxu0 0.0
  %3491 = vmatmul.mubr.f32.gmra.mrb[0].mxu0 %v3339
  %v3492 = vpop.f32.mrb[0].mxu0
  %v3493 = vadd.f32 %v943, %v3492
  %v3494 = vpop.f32.mrb[0].mxu0
  %3495 = vmatprep.mubr.f32.mxu0 0.0
  %3496 = vmatmul.mubr.f32.gmra.mrb[0].mxu0 %v3342
  %v3497 = vpop.f32.mrb[0].mxu0
  %v3498 = vadd.f32 %v943, %v3497
  %v3499 = vpop.f32.mrb[0].mxu0
  %3500 = vmatprep.mubr.f32.mxu0 0.0
  %3501 = vmatmul.mubr.f32.gmra.mrb[0].mxu0 %v3345
  %v3502 = vpop.f32.mrb[0].mxu0
  %v3503 = vadd.f32 %v943, %v3502
  %v3504 = vpop.f32.mrb[0].mxu0
  %3505 = vmatprep.mubr.f32.mxu0 0.0
  %3506 = vmatmul.mubr.f32.gmra.mrb[0].mxu0 %v3348
  %v3507 = vpop.f32.mrb[0].mxu0
  %v3508 = vadd.f32 %v943, %v3507
  %v3509 = vpop.f32.mrb[0].mxu0
  %3510 = vmatprep.mubr.f32.mxu0 0.0
  %3511 = vmatmul.mubr.f32.gmra.mrb[0].mxu0 %v3351
  %v3512 = vpop.f32.mrb[0].mxu0
  %v3513 = vadd.f32 %v943, %v3512
  %v3514 = vpop.f32.mrb[0].mxu0
  %3515 = vmatprep.mubr.f32.mxu0 0.0
  %3516 = vmatmul.mubr.f32.gmra.mrb[0].mxu0 %v3354
  %v3517 = vpop.f32.mrb[0].mxu0
  %v3518 = vadd.f32 %v943, %v3517
  %v3519 = vpop.f32.mrb[0].mxu0
  %3520 = vmatprep.mubr.f32.mxu0 0.0
  %3521 = vmatmul.mubr.f32.gmra.mrb[0].mxu0 %v3357
  %v3522 = vpop.f32.mrb[0].mxu0
  %v3523 = vadd.f32 %v943, %v3522
  %v3524 = vpop.f32.mrb[0].mxu0
  %3525 = vmatprep.mubr.f32.mxu0 0.0
  %3526 = vmatmul.mubr.f32.gmra.mrb[0].mxu0 %v3360
  %v3527 = vpop.f32.mrb[0].mxu0
  %v3528 = vadd.f32 %v943, %v3527
  %v3529 = vpop.f32.mrb[0].mxu0
  %3530 = vmatprep.mubr.f32.mxu0 0.0
  %3531 = vmatmul.mubr.f32.gmra.mrb[0].mxu0 %v3363
  %v3532 = vpop.f32.mrb[0].mxu0
  %v3533 = vadd.f32 %v943, %v3532
  %v3534 = vpop.f32.mrb[0].mxu0
  %3535 = vmatprep.mubr.f32.mxu0 0.0
  %3536 = vmatmul.mubr.f32.gmra.mrb[0].mxu0 %v3366
  %v3537 = vpop.f32.mrb[0].mxu0
  %v3538 = vadd.f32 %v943, %v3537
  %v3539 = vpop.f32.mrb[0].mxu0
  %3540 = vmatprep.mubr.f32.mxu0 0.0
  %3541 = vmatmul.mubr.f32.gmra.mrb[0].mxu0 %v3369
  %v3542 = vpop.f32.mrb[0].mxu0
  %v3543 = vadd.f32 %v943, %v3542
  %v3544 = vpop.f32.mrb[0].mxu0
  %3545 = vmatprep.mubr.f32.mxu0 0.0
  %3546 = vmatmul.mubr.f32.gmra.mrb[0].mxu0 %v3372
  %v3547 = vpop.f32.mrb[0].mxu0
  %v3548 = vadd.f32 %v943, %v3547
  %v3549 = vpop.f32.mrb[0].mxu0
  %3550 = vmatprep.mubr.f32.mxu0 0.0
  %3551 = vmatmul.mubr.f32.gmra.mrb[0].mxu0 %v3375
  %v3552 = vpop.f32.mrb[0].mxu0
  %v3553 = vadd.f32 %v943, %v3552
  %v3554 = vpop.f32.mrb[0].mxu0
  %3555 = vmatprep.mubr.f32.mxu0 0.0
  %3556 = vmatmul.mubr.f32.gmra.mrb[0].mxu0 %v3378
  %v3557 = vpop.f32.mrb[0].mxu0
  %v3558 = vadd.f32 %v943, %v3557
  %v3559 = vpop.f32.mrb[0].mxu0
  %3560 = vmatprep.mubr.f32.mxu0 0.0
  %3561 = vmatmul.mubr.f32.gmra.mrb[0].mxu0 %v3381
  %v3562 = vpop.f32.mrb[0].mxu0
  %v3563 = vadd.f32 %v943, %v3562
  %v3564 = vpop.f32.mrb[0].mxu0
  %3565 = vmatprep.mubr.f32.mxu0 0.0
  %3566 = vmatmul.mubr.f32.gmra.mrb[0].mxu0 %v3384
  %v3567 = vpop.f32.mrb[0].mxu0
  %v3568 = vadd.f32 %v943, %v3567
  %v3569 = vpop.f32.mrb[0].mxu0
  %3570 = vmatprep.mubr.f32.mxu0 0.0
  %3571 = vmatmul.mubr.f32.gmra.mrb[0].mxu0 %v3387
  %v3572 = vpop.f32.mrb[0].mxu0
  %v3573 = vadd.f32 %v943, %v3572
  %v3574 = vpop.f32.mrb[0].mxu0
  %3575 = vmatprep.mubr.f32.mxu0 0.0
  %3576 = vmatmul.mubr.f32.gmra.mrb[0].mxu0 %v3390
  %v3577 = vpop.f32.mrb[0].mxu0
  %v3578 = vadd.f32 %v943, %v3577
  %v3579 = vpop.f32.mrb[0].mxu0
  %3580 = vmatprep.mubr.f32.mxu0 0.0
  %3581 = vmatmul.mubr.f32.gmra.mrb[0].mxu0 %v3393
  %v3582 = vpop.f32.mrb[0].mxu0
  %v3583 = vadd.f32 %v943, %v3582
  %v3584 = vpop.f32.mrb[0].mxu0
  %3585 = vmatprep.mubr.f32.mxu0 0.0
  %3586 = vmatmul.mubr.f32.gmra.mrb[0].mxu0 %v3396
  %v3587 = vpop.f32.mrb[0].mxu0
  %v3588 = vadd.f32 %v943, %v3587
  %v3589 = vpop.f32.mrb[0].mxu0
  %3590 = vmatprep.mubr.f32.mxu0 0.0
  %3591 = vmatmul.mubr.f32.gmra.mrb[0].mxu0 %v3399
  %v3592 = vpop.f32.mrb[0].mxu0
  %v3593 = vadd.f32 %v943, %v3592
  %v3594 = vpop.f32.mrb[0].mxu0
  %3595 = vmatprep.mubr.f32.mxu0 0.0
  %3596 = vmatmul.mubr.f32.gmra.mrb[0].mxu0 %v3402
  %v3597 = vpop.f32.mrb[0].mxu0
  %v3598 = vadd.f32 %v943, %v3597
  %v3599 = vpop.f32.mrb[0].mxu0
  %3600 = vmatprep.mubr.f32.mxu0 0.0
  %3601 = vmatmul.mubr.f32.gmra.mrb[0].mxu0 %v3405
  %v3602 = vpop.f32.mrb[0].mxu0
  %v3603 = vadd.f32 %v943, %v3602
  %v3604 = vpop.f32.mrb[0].mxu0
  %3605 = vmatprep.mubr.f32.mxu0 0.0
  %3606 = vmatmul.mubr.f32.gmra.mrb[0].mxu0 %v3408
  %v3607 = vpop.f32.mrb[0].mxu0
  %v3608 = vadd.f32 %v943, %v3607
  %v3609 = vpop.f32.mrb[0].mxu0
  %3610 = vmatprep.mubr.f32.mxu0 0.0
  %3611 = vmatmul.mubr.f32.gmra.mrb[0].mxu0 %v3411
  %v3612 = vpop.f32.mrb[0].mxu0
  %v3613 = vadd.f32 %v943, %v3612
  %v3614 = vpop.f32.mrb[0].mxu0
  %3615 = vmatprep.mubr.f32.mxu0 0.0
  %3616 = vmatmul.mubr.f32.gmra.mrb[0].mxu0 %v3414
  %v3617 = vpop.f32.mrb[0].mxu0
  %v3618 = vadd.f32 %v943, %v3617
  %v3619 = vpop.f32.mrb[0].mxu0
  %3620 = vdwg.mxu0
  %v3621 = vmax.f32 %v3483, 0.0
  %v3622 = vmax.f32 %v3488, 0.0
  %v3623 = vmax.f32 %v3493, 0.0
  %v3624 = vmax.f32 %v3498, 0.0
  %v3625 = vmax.f32 %v3503, 0.0
  %v3626 = vmax.f32 %v3508, 0.0
  %v3627 = vmax.f32 %v3513, 0.0
  %v3628 = vmax.f32 %v3518, 0.0
  %v3629 = vmax.f32 %v3523, 0.0
  %v3630 = vmax.f32 %v3528, 0.0
  %v3631 = vmax.f32 %v3533, 0.0
  %v3632 = vmax.f32 %v3538, 0.0
  %v3633 = vmax.f32 %v3543, 0.0
  %v3634 = vmax.f32 %v3548, 0.0
  %v3635 = vmax.f32 %v3553, 0.0
  %v3636 = vmax.f32 %v3558, 0.0
  %v3637 = vmax.f32 %v3563, 0.0
  %v3638 = vmax.f32 %v3568, 0.0
  %v3639 = vmax.f32 %v3573, 0.0
  %v3640 = vmax.f32 %v3578, 0.0
  %v3641 = vmax.f32 %v3583, 0.0
  %v3642 = vmax.f32 %v3588, 0.0
  %v3643 = vmax.f32 %v3593, 0.0
  %v3644 = vmax.f32 %v3598, 0.0
  %v3645 = vmax.f32 %v3603, 0.0
  %v3646 = vmax.f32 %v3608, 0.0
  %v3647 = vmax.f32 %v3613, 0.0
  %v3648 = vmax.f32 %v3618, 0.0
  %3649 = vst.msk [vmem:[#allocation3] sm:$0xff] %vm28, %v3621
  %3650 = vst.msk [vmem:[#allocation3 + $0x8] sm:$0xff] %vm28, %v3622
  %3651 = vst.msk [vmem:[#allocation3 + $0x10] sm:$0xff] %vm28, %v3623
  %3652 = vst.msk [vmem:[#allocation3 + $0x18] sm:$0xff] %vm28, %v3624
  %3653 = vst.msk [vmem:[#allocation3 + $0x20] sm:$0xff] %vm28, %v3625
  %3654 = vst.msk [vmem:[#allocation3 + $0x28] sm:$0xff] %vm28, %v3626
  %3655 = vst.msk [vmem:[#allocation3 + $0x30] sm:$0xff] %vm28, %v3627
  %3656 = vst.msk [vmem:[#allocation3 + $0x38] sm:$0xff] %vm28, %v3628
  %3657 = vst.msk [vmem:[#allocation3 + $0x40] sm:$0xff] %vm28, %v3629
  %3658 = vst.msk [vmem:[#allocation3 + $0x48] sm:$0xff] %vm28, %v3630
  %3659 = vst.msk [vmem:[#allocation3 + $0x50] sm:$0xff] %vm28, %v3631
  %3660 = vst.msk [vmem:[#allocation3 + $0x58] sm:$0xff] %vm28, %v3632
  %3661 = vst.msk [vmem:[#allocation3 + $0x60] sm:$0xff] %vm28, %v3633
  %3662 = vst.msk [vmem:[#allocation3 + $0x68] sm:$0xff] %vm28, %v3634
  %3663 = vst.msk [vmem:[#allocation3 + $0x70] sm:$0xff] %vm28, %v3635
  %3664 = vst.msk [vmem:[#allocation3 + $0x78] sm:$0xff] %vm28, %v3636
  %3665 = vst.msk [vmem:[#allocation3 + $0x80] sm:$0xff] %vm28, %v3637
  %3666 = vst.msk [vmem:[#allocation3 + $0x88] sm:$0xff] %vm28, %v3638
  %3667 = vst.msk [vmem:[#allocation3 + $0x90] sm:$0xff] %vm28, %v3639
  %3668 = vst.msk [vmem:[#allocation3 + $0x98] sm:$0xff] %vm28, %v3640
  %3669 = vst.msk [vmem:[#allocation3 + $0xa0] sm:$0xff] %vm28, %v3641
  %3670 = vst.msk [vmem:[#allocation3 + $0xa8] sm:$0xff] %vm28, %v3642
  %3671 = vst.msk [vmem:[#allocation3 + $0xb0] sm:$0xff] %vm28, %v3643
  %3672 = vst.msk [vmem:[#allocation3 + $0xb8] sm:$0xff] %vm28, %v3644
  %3673 = vst.msk [vmem:[#allocation3 + $0xc0] sm:$0xff] %vm28, %v3645
  %3674 = vst.msk [vmem:[#allocation3 + $0xc8] sm:$0xff] %vm28, %v3646
  %3675 = vst.msk [vmem:[#allocation3 + $0xd0] sm:$0xff] %vm28, %v3647
  %3676 = vst.msk [vmem:[#allocation3 + $0xd8] sm:$0xff] %vm28, %v3648
  %v3677 = vld [vmem:[#allocation3] sm:$0xff]
  %v3678 = vld [vmem:[#allocation3 + $0x8] sm:$0xff]
  %v3679 = vld [vmem:[#allocation3 + $0x10] sm:$0xff]
  %v3680 = vld [vmem:[#allocation3 + $0x18] sm:$0xff]
  %v3681 = vld [vmem:[#allocation3 + $0x20] sm:$0xff]
  %v3682 = vld [vmem:[#allocation3 + $0x28] sm:$0xff]
  %v3683 = vld [vmem:[#allocation3 + $0x30] sm:$0xff]
  %v3684 = vld [vmem:[#allocation3 + $0x38] sm:$0xff]
  %v3685 = vld [vmem:[#allocation3 + $0x40] sm:$0xff]
  %v3686 = vld [vmem:[#allocation3 + $0x48] sm:$0xff]
  %v3687 = vld [vmem:[#allocation3 + $0x50] sm:$0xff]
  %v3688 = vld [vmem:[#allocation3 + $0x58] sm:$0xff]
  %v3689 = vld [vmem:[#allocation3 + $0x60] sm:$0xff]
  %v3690 = vld [vmem:[#allocation3 + $0x68] sm:$0xff]
  %v3691 = vld [vmem:[#allocation3 + $0x70] sm:$0xff]
  %v3692 = vld [vmem:[#allocation3 + $0x78] sm:$0xff]
  %v3693 = vld [vmem:[#allocation3 + $0x80] sm:$0xff]
  %v3694 = vld [vmem:[#allocation3 + $0x88] sm:$0xff]
  %v3695 = vld [vmem:[#allocation3 + $0x90] sm:$0xff]
  %v3696 = vld [vmem:[#allocation3 + $0x98] sm:$0xff]
  %v3697 = vld [vmem:[#allocation3 + $0xa0] sm:$0xff]
  %v3698 = vld [vmem:[#allocation3 + $0xa8] sm:$0xff]
  %v3699 = vld [vmem:[#allocation3 + $0xb0] sm:$0xff]
  %v3700 = vld [vmem:[#allocation3 + $0xb8] sm:$0xff]
  %v3701 = vld [vmem:[#allocation3 + $0x1] sm:$0xff]
  %v3702 = vld [vmem:[#allocation3 + $0x9] sm:$0xff]
  %v3703 = vld [vmem:[#allocation3 + $0x11] sm:$0xff]
  %v3704 = vld [vmem:[#allocation3 + $0x19] sm:$0xff]
  %v3705 = vld [vmem:[#allocation3 + $0x21] sm:$0xff]
  %v3706 = vld [vmem:[#allocation3 + $0x29] sm:$0xff]
  %v3707 = vld [vmem:[#allocation3 + $0x31] sm:$0xff]
  %v3708 = vld [vmem:[#allocation3 + $0x39] sm:$0xff]
  %v3709 = vld [vmem:[#allocation3 + $0x41] sm:$0xff]
  %v3710 = vld [vmem:[#allocation3 + $0x49] sm:$0xff]
  %v3711 = vld [vmem:[#allocation3 + $0x51] sm:$0xff]
  %v3712 = vld [vmem:[#allocation3 + $0x59] sm:$0xff]
  %v3713 = vld [vmem:[#allocation3 + $0x61] sm:$0xff]
  %v3714 = vld [vmem:[#allocation3 + $0x69] sm:$0xff]
  %v3715 = vld [vmem:[#allocation3 + $0x71] sm:$0xff]
  %v3716 = vld [vmem:[#allocation3 + $0x79] sm:$0xff]
  %v3717 = vld [vmem:[#allocation3 + $0x81] sm:$0xff]
  %v3718 = vld [vmem:[#allocation3 + $0x89] sm:$0xff]
  %v3719 = vld [vmem:[#allocation3 + $0x91] sm:$0xff]
  %v3720 = vld [vmem:[#allocation3 + $0x99] sm:$0xff]
  %v3721 = vld [vmem:[#allocation3 + $0xa1] sm:$0xff]
  %v3722 = vld [vmem:[#allocation3 + $0xa9] sm:$0xff]
  %v3723 = vld [vmem:[#allocation3 + $0xb1] sm:$0xff]
  %v3724 = vld [vmem:[#allocation3 + $0xb9] sm:$0xff]
  %v3725 = vld [vmem:[#allocation3 + $0x2] sm:$0xff]
  %v3726 = vld [vmem:[#allocation3 + $0xa] sm:$0xff]
  %v3727 = vld [vmem:[#allocation3 + $0x12] sm:$0xff]
  %v3728 = vld [vmem:[#allocation3 + $0x1a] sm:$0xff]
  %v3729 = vld [vmem:[#allocation3 + $0x22] sm:$0xff]
  %v3730 = vld [vmem:[#allocation3 + $0x2a] sm:$0xff]
  %v3731 = vld [vmem:[#allocation3 + $0x32] sm:$0xff]
  %v3732 = vld [vmem:[#allocation3 + $0x3a] sm:$0xff]
  %v3733 = vld [vmem:[#allocation3 + $0x42] sm:$0xff]
  %v3734 = vld [vmem:[#allocation3 + $0x4a] sm:$0xff]
  %v3735 = vld [vmem:[#allocation3 + $0x52] sm:$0xff]
  %v3736 = vld [vmem:[#allocation3 + $0x5a] sm:$0xff]
  %v3737 = vld [vmem:[#allocation3 + $0x62] sm:$0xff]
  %v3738 = vld [vmem:[#allocation3 + $0x6a] sm:$0xff]
  %v3739 = vld [vmem:[#allocation3 + $0x72] sm:$0xff]
  %v3740 = vld [vmem:[#allocation3 + $0x7a] sm:$0xff]
  %v3741 = vld [vmem:[#allocation3 + $0x82] sm:$0xff]
  %v3742 = vld [vmem:[#allocation3 + $0x8a] sm:$0xff]
  %v3743 = vld [vmem:[#allocation3 + $0x92] sm:$0xff]
  %v3744 = vld [vmem:[#allocation3 + $0x9a] sm:$0xff]
  %v3745 = vld [vmem:[#allocation3 + $0xa2] sm:$0xff]
  %v3746 = vld [vmem:[#allocation3 + $0xaa] sm:$0xff]
  %v3747 = vld [vmem:[#allocation3 + $0xb2] sm:$0xff]
  %v3748 = vld [vmem:[#allocation3 + $0xba] sm:$0xff]
  %v3749 = vld [vmem:[#allocation3 + $0xc0] sm:$0xff]
  %v3750 = vld [vmem:[#allocation3 + $0xc8] sm:$0xff]
  %v3751 = vld [vmem:[#allocation3 + $0xc1] sm:$0xff]
  %v3752 = vld [vmem:[#allocation3 + $0xc9] sm:$0xff]
  %v3753 = vld [vmem:[#allocation3 + $0xc2] sm:$0xff]
  %v3754 = vld [vmem:[#allocation3 + $0xca] sm:$0xff]
  %v3755 = vld [vmem:[#allocation3 + $0xd0] sm:$0xff]
  %v3756 = vld [vmem:[#allocation3 + $0xd8] sm:$0xff]
  %v3757 = vld [vmem:[#allocation3 + $0xd1] sm:$0xff]
  %v3758 = vld [vmem:[#allocation3 + $0xd9] sm:$0xff]
  %v3759 = vld [vmem:[#allocation3 + $0xd2] sm:$0xff]
  %v3760 = vld [vmem:[#allocation3 + $0xda] sm:$0xff]
  %3785 = vrot.lane.b32.xlu0 %v3701, 32
  %v3786 = vpop.permute.xlu0 %3785
  %3787 = vrot.lane.b32.xlu0 %v3702, 32
  %v3788 = vpop.permute.xlu0 %3787
  %3789 = vrot.lane.b32.xlu0 %v3703, 32
  %v3790 = vpop.permute.xlu0 %3789
  %3791 = vrot.lane.b32.xlu0 %v3704, 32
  %v3792 = vpop.permute.xlu0 %3791
  %3793 = vrot.lane.b32.xlu0 %v3705, 32
  %v3794 = vpop.permute.xlu0 %3793
  %3795 = vrot.lane.b32.xlu0 %v3706, 32
  %v3796 = vpop.permute.xlu0 %3795
  %3797 = vrot.lane.b32.xlu0 %v3707, 32
  %v3798 = vpop.permute.xlu0 %3797
  %3799 = vrot.lane.b32.xlu0 %v3708, 32
  %v3800 = vpop.permute.xlu0 %3799
  %3801 = vrot.lane.b32.xlu0 %v3709, 32
  %v3802 = vpop.permute.xlu0 %3801
  %3803 = vrot.lane.b32.xlu0 %v3710, 32
  %v3804 = vpop.permute.xlu0 %3803
  %3805 = vrot.lane.b32.xlu0 %v3711, 32
  %v3806 = vpop.permute.xlu0 %3805
  %3807 = vrot.lane.b32.xlu0 %v3712, 32
  %v3808 = vpop.permute.xlu0 %3807
  %3809 = vrot.lane.b32.xlu0 %v3713, 32
  %v3810 = vpop.permute.xlu0 %3809
  %3811 = vrot.lane.b32.xlu0 %v3714, 32
  %v3812 = vpop.permute.xlu0 %3811
  %3813 = vrot.lane.b32.xlu0 %v3715, 32
  %v3814 = vpop.permute.xlu0 %3813
  %3815 = vrot.lane.b32.xlu0 %v3716, 32
  %v3816 = vpop.permute.xlu0 %3815
  %3817 = vrot.lane.b32.xlu0 %v3717, 32
  %v3818 = vpop.permute.xlu0 %3817
  %3819 = vrot.lane.b32.xlu0 %v3718, 32
  %v3820 = vpop.permute.xlu0 %3819
  %3821 = vrot.lane.b32.xlu0 %v3719, 32
  %v3822 = vpop.permute.xlu0 %3821
  %3823 = vrot.lane.b32.xlu0 %v3720, 32
  %v3824 = vpop.permute.xlu0 %3823
  %3825 = vrot.lane.b32.xlu0 %v3721, 32
  %v3826 = vpop.permute.xlu0 %3825
  %3827 = vrot.lane.b32.xlu0 %v3722, 32
  %v3828 = vpop.permute.xlu0 %3827
  %3829 = vrot.lane.b32.xlu0 %v3723, 32
  %v3830 = vpop.permute.xlu0 %3829
  %3831 = vrot.lane.b32.xlu0 %v3724, 32
  %v3832 = vpop.permute.xlu0 %3831
  %3881 = vrot.lane.b32.xlu0 %v3725, 64
  %v3882 = vpop.permute.xlu0 %3881
  %3883 = vrot.lane.b32.xlu0 %v3726, 64
  %v3884 = vpop.permute.xlu0 %3883
  %3885 = vrot.lane.b32.xlu0 %v3727, 64
  %v3886 = vpop.permute.xlu0 %3885
  %3887 = vrot.lane.b32.xlu0 %v3728, 64
  %v3888 = vpop.permute.xlu0 %3887
  %3889 = vrot.lane.b32.xlu0 %v3729, 64
  %v3890 = vpop.permute.xlu0 %3889
  %3891 = vrot.lane.b32.xlu0 %v3730, 64
  %v3892 = vpop.permute.xlu0 %3891
  %3893 = vrot.lane.b32.xlu0 %v3731, 64
  %v3894 = vpop.permute.xlu0 %3893
  %3895 = vrot.lane.b32.xlu0 %v3732, 64
  %v3896 = vpop.permute.xlu0 %3895
  %3897 = vrot.lane.b32.xlu0 %v3733, 64
  %v3898 = vpop.permute.xlu0 %3897
  %3899 = vrot.lane.b32.xlu0 %v3734, 64
  %v3900 = vpop.permute.xlu0 %3899
  %3901 = vrot.lane.b32.xlu0 %v3735, 64
  %v3902 = vpop.permute.xlu0 %3901
  %3903 = vrot.lane.b32.xlu0 %v3736, 64
  %v3904 = vpop.permute.xlu0 %3903
  %3905 = vrot.lane.b32.xlu0 %v3737, 64
  %v3906 = vpop.permute.xlu0 %3905
  %3907 = vrot.lane.b32.xlu0 %v3738, 64
  %v3908 = vpop.permute.xlu0 %3907
  %3909 = vrot.lane.b32.xlu0 %v3739, 64
  %v3910 = vpop.permute.xlu0 %3909
  %3911 = vrot.lane.b32.xlu0 %v3740, 64
  %v3912 = vpop.permute.xlu0 %3911
  %3913 = vrot.lane.b32.xlu0 %v3741, 64
  %v3914 = vpop.permute.xlu0 %3913
  %3915 = vrot.lane.b32.xlu0 %v3742, 64
  %v3916 = vpop.permute.xlu0 %3915
  %3917 = vrot.lane.b32.xlu0 %v3743, 64
  %v3918 = vpop.permute.xlu0 %3917
  %3919 = vrot.lane.b32.xlu0 %v3744, 64
  %v3920 = vpop.permute.xlu0 %3919
  %3921 = vrot.lane.b32.xlu0 %v3745, 64
  %v3922 = vpop.permute.xlu0 %3921
  %3923 = vrot.lane.b32.xlu0 %v3746, 64
  %v3924 = vpop.permute.xlu0 %3923
  %3925 = vrot.lane.b32.xlu0 %v3747, 64
  %v3926 = vpop.permute.xlu0 %3925
  %3927 = vrot.lane.b32.xlu0 %v3748, 64
  %v3928 = vpop.permute.xlu0 %3927
  %3977 = vrot.lane.b32.xlu0 %v3679, 96
  %v3978 = vpop.permute.xlu0 %3977
  %3979 = vrot.lane.b32.xlu0 %v3680, 96
  %v3980 = vpop.permute.xlu0 %3979
  %3981 = vrot.lane.b32.xlu0 %v3681, 96
  %v3982 = vpop.permute.xlu0 %3981
  %3983 = vrot.lane.b32.xlu0 %v3682, 96
  %v3984 = vpop.permute.xlu0 %3983
  %3985 = vrot.lane.b32.xlu0 %v3683, 96
  %v3986 = vpop.permute.xlu0 %3985
  %3987 = vrot.lane.b32.xlu0 %v3684, 96
  %v3988 = vpop.permute.xlu0 %3987
  %3989 = vrot.lane.b32.xlu0 %v3685, 96
  %v3990 = vpop.permute.xlu0 %3989
  %3991 = vrot.lane.b32.xlu0 %v3686, 96
  %v3992 = vpop.permute.xlu0 %3991
  %3993 = vrot.lane.b32.xlu0 %v3687, 96
  %v3994 = vpop.permute.xlu0 %3993
  %3995 = vrot.lane.b32.xlu0 %v3688, 96
  %v3996 = vpop.permute.xlu0 %3995
  %3997 = vrot.lane.b32.xlu0 %v3689, 96
  %v3998 = vpop.permute.xlu0 %3997
  %3999 = vrot.lane.b32.xlu0 %v3690, 96
  %v4000 = vpop.permute.xlu0 %3999
  %4001 = vrot.lane.b32.xlu0 %v3691, 96
  %v4002 = vpop.permute.xlu0 %4001
  %4003 = vrot.lane.b32.xlu0 %v3692, 96
  %v4004 = vpop.permute.xlu0 %4003
  %4005 = vrot.lane.b32.xlu0 %v3693, 96
  %v4006 = vpop.permute.xlu0 %4005
  %4007 = vrot.lane.b32.xlu0 %v3694, 96
  %v4008 = vpop.permute.xlu0 %4007
  %4009 = vrot.lane.b32.xlu0 %v3695, 96
  %v4010 = vpop.permute.xlu0 %4009
  %4011 = vrot.lane.b32.xlu0 %v3696, 96
  %v4012 = vpop.permute.xlu0 %4011
  %4013 = vrot.lane.b32.xlu0 %v3697, 96
  %v4014 = vpop.permute.xlu0 %4013
  %4015 = vrot.lane.b32.xlu0 %v3698, 96
  %v4016 = vpop.permute.xlu0 %4015
  %4017 = vrot.lane.b32.xlu0 %v3699, 96
  %v4018 = vpop.permute.xlu0 %4017
  %4019 = vrot.lane.b32.xlu0 %v3700, 96
  %v4020 = vpop.permute.xlu0 %4019
  %4021 = vrot.lane.b32.xlu0 %v3749, 96
  %v4022 = vpop.permute.xlu0 %4021
  %4023 = vrot.lane.b32.xlu0 %v3750, 96
  %v4024 = vpop.permute.xlu0 %4023
  %4051 = vrot.lane.b32.xlu0 %v3727, 32
  %v4052 = vpop.permute.xlu0 %4051
  %4053 = vrot.lane.b32.xlu0 %v3728, 32
  %v4054 = vpop.permute.xlu0 %4053
  %4055 = vrot.lane.b32.xlu0 %v3729, 32
  %v4056 = vpop.permute.xlu0 %4055
  %4057 = vrot.lane.b32.xlu0 %v3730, 32
  %v4058 = vpop.permute.xlu0 %4057
  %4059 = vrot.lane.b32.xlu0 %v3731, 32
  %v4060 = vpop.permute.xlu0 %4059
  %4061 = vrot.lane.b32.xlu0 %v3732, 32
  %v4062 = vpop.permute.xlu0 %4061
  %4063 = vrot.lane.b32.xlu0 %v3733, 32
  %v4064 = vpop.permute.xlu0 %4063
  %4065 = vrot.lane.b32.xlu0 %v3734, 32
  %v4066 = vpop.permute.xlu0 %4065
  %4067 = vrot.lane.b32.xlu0 %v3735, 32
  %v4068 = vpop.permute.xlu0 %4067
  %4069 = vrot.lane.b32.xlu0 %v3736, 32
  %v4070 = vpop.permute.xlu0 %4069
  %4071 = vrot.lane.b32.xlu0 %v3737, 32
  %v4072 = vpop.permute.xlu0 %4071
  %4073 = vrot.lane.b32.xlu0 %v3738, 32
  %v4074 = vpop.permute.xlu0 %4073
  %4075 = vrot.lane.b32.xlu0 %v3739, 32
  %v4076 = vpop.permute.xlu0 %4075
  %4077 = vrot.lane.b32.xlu0 %v3740, 32
  %v4078 = vpop.permute.xlu0 %4077
  %4079 = vrot.lane.b32.xlu0 %v3741, 32
  %v4080 = vpop.permute.xlu0 %4079
  %4081 = vrot.lane.b32.xlu0 %v3742, 32
  %v4082 = vpop.permute.xlu0 %4081
  %4083 = vrot.lane.b32.xlu0 %v3743, 32
  %v4084 = vpop.permute.xlu0 %4083
  %4085 = vrot.lane.b32.xlu0 %v3744, 32
  %v4086 = vpop.permute.xlu0 %4085
  %4087 = vrot.lane.b32.xlu0 %v3745, 32
  %v4088 = vpop.permute.xlu0 %4087
  %4089 = vrot.lane.b32.xlu0 %v3746, 32
  %v4090 = vpop.permute.xlu0 %4089
  %4091 = vrot.lane.b32.xlu0 %v3747, 32
  %v4092 = vpop.permute.xlu0 %4091
  %4093 = vrot.lane.b32.xlu0 %v3748, 32
  %v4094 = vpop.permute.xlu0 %4093
  %4095 = vrot.lane.b32.xlu0 %v3753, 32
  %v4096 = vpop.permute.xlu0 %4095
  %4097 = vrot.lane.b32.xlu0 %v3754, 32
  %v4098 = vpop.permute.xlu0 %4097
  %4125 = vrot.lane.b32.xlu0 %v3681, 64
  %v4126 = vpop.permute.xlu0 %4125
  %4127 = vrot.lane.b32.xlu0 %v3682, 64
  %v4128 = vpop.permute.xlu0 %4127
  %4129 = vrot.lane.b32.xlu0 %v3683, 64
  %v4130 = vpop.permute.xlu0 %4129
  %4131 = vrot.lane.b32.xlu0 %v3684, 64
  %v4132 = vpop.permute.xlu0 %4131
  %4133 = vrot.lane.b32.xlu0 %v3685, 64
  %v4134 = vpop.permute.xlu0 %4133
  %4135 = vrot.lane.b32.xlu0 %v3686, 64
  %v4136 = vpop.permute.xlu0 %4135
  %4137 = vrot.lane.b32.xlu0 %v3687, 64
  %v4138 = vpop.permute.xlu0 %4137
  %4139 = vrot.lane.b32.xlu0 %v3688, 64
  %v4140 = vpop.permute.xlu0 %4139
  %4141 = vrot.lane.b32.xlu0 %v3689, 64
  %v4142 = vpop.permute.xlu0 %4141
  %4143 = vrot.lane.b32.xlu0 %v3690, 64
  %v4144 = vpop.permute.xlu0 %4143
  %4145 = vrot.lane.b32.xlu0 %v3691, 64
  %v4146 = vpop.permute.xlu0 %4145
  %4147 = vrot.lane.b32.xlu0 %v3692, 64
  %v4148 = vpop.permute.xlu0 %4147
  %4149 = vrot.lane.b32.xlu0 %v3693, 64
  %v4150 = vpop.permute.xlu0 %4149
  %4151 = vrot.lane.b32.xlu0 %v3694, 64
  %v4152 = vpop.permute.xlu0 %4151
  %4153 = vrot.lane.b32.xlu0 %v3695, 64
  %v4154 = vpop.permute.xlu0 %4153
  %4155 = vrot.lane.b32.xlu0 %v3696, 64
  %v4156 = vpop.permute.xlu0 %4155
  %4157 = vrot.lane.b32.xlu0 %v3697, 64
  %v4158 = vpop.permute.xlu0 %4157
  %4159 = vrot.lane.b32.xlu0 %v3698, 64
  %v4160 = vpop.permute.xlu0 %4159
  %4161 = vrot.lane.b32.xlu0 %v3699, 64
  %v4162 = vpop.permute.xlu0 %4161
  %4163 = vrot.lane.b32.xlu0 %v3700, 64
  %v4164 = vpop.permute.xlu0 %4163
  %4165 = vrot.lane.b32.xlu0 %v3749, 64
  %v4166 = vpop.permute.xlu0 %4165
  %4167 = vrot.lane.b32.xlu0 %v3750, 64
  %v4168 = vpop.permute.xlu0 %4167
  %4169 = vrot.lane.b32.xlu0 %v3755, 64
  %v4170 = vpop.permute.xlu0 %4169
  %4171 = vrot.lane.b32.xlu0 %v3756, 64
  %v4172 = vpop.permute.xlu0 %4171
  %4201 = vrot.lane.b32.xlu0 %v3705, 96
  %v4202 = vpop.permute.xlu0 %4201
  %4203 = vrot.lane.b32.xlu0 %v3706, 96
  %v4204 = vpop.permute.xlu0 %4203
  %4205 = vrot.lane.b32.xlu0 %v3707, 96
  %v4206 = vpop.permute.xlu0 %4205
  %4207 = vrot.lane.b32.xlu0 %v3708, 96
  %v4208 = vpop.permute.xlu0 %4207
  %4209 = vrot.lane.b32.xlu0 %v3709, 96
  %v4210 = vpop.permute.xlu0 %4209
  %4211 = vrot.lane.b32.xlu0 %v3710, 96
  %v4212 = vpop.permute.xlu0 %4211
  %4213 = vrot.lane.b32.xlu0 %v3711, 96
  %v4214 = vpop.permute.xlu0 %4213
  %4215 = vrot.lane.b32.xlu0 %v3712, 96
  %v4216 = vpop.permute.xlu0 %4215
  %4217 = vrot.lane.b32.xlu0 %v3713, 96
  %v4218 = vpop.permute.xlu0 %4217
  %4219 = vrot.lane.b32.xlu0 %v3714, 96
  %v4220 = vpop.permute.xlu0 %4219
  %4221 = vrot.lane.b32.xlu0 %v3715, 96
  %v4222 = vpop.permute.xlu0 %4221
  %4223 = vrot.lane.b32.xlu0 %v3716, 96
  %v4224 = vpop.permute.xlu0 %4223
  %4225 = vrot.lane.b32.xlu0 %v3717, 96
  %v4226 = vpop.permute.xlu0 %4225
  %4227 = vrot.lane.b32.xlu0 %v3718, 96
  %v4228 = vpop.permute.xlu0 %4227
  %4229 = vrot.lane.b32.xlu0 %v3719, 96
  %v4230 = vpop.permute.xlu0 %4229
  %4231 = vrot.lane.b32.xlu0 %v3720, 96
  %v4232 = vpop.permute.xlu0 %4231
  %4233 = vrot.lane.b32.xlu0 %v3721, 96
  %v4234 = vpop.permute.xlu0 %4233
  %4235 = vrot.lane.b32.xlu0 %v3722, 96
  %v4236 = vpop.permute.xlu0 %4235
  %4237 = vrot.lane.b32.xlu0 %v3723, 96
  %v4238 = vpop.permute.xlu0 %4237
  %4239 = vrot.lane.b32.xlu0 %v3724, 96
  %v4240 = vpop.permute.xlu0 %4239
  %4241 = vrot.lane.b32.xlu0 %v3751, 96
  %v4242 = vpop.permute.xlu0 %4241
  %4243 = vrot.lane.b32.xlu0 %v3752, 96
  %v4244 = vpop.permute.xlu0 %4243
  %4245 = vrot.lane.b32.xlu0 %v3757, 96
  %v4246 = vpop.permute.xlu0 %4245
  %4247 = vrot.lane.b32.xlu0 %v3758, 96
  %v4248 = vpop.permute.xlu0 %4247
  %v4273 = vsel %vm28, %v3677, %v3786
  %v4274 = vsel %vm28, %v3678, %v3788
  %v4275 = vsel %vm28, %v3679, %v3790
  %v4276 = vsel %vm28, %v3680, %v3792
  %v4277 = vsel %vm28, %v3681, %v3794
  %v4278 = vsel %vm28, %v3682, %v3796
  %v4279 = vsel %vm28, %v3683, %v3798
  %v4280 = vsel %vm28, %v3684, %v3800
  %v4281 = vsel %vm28, %v3685, %v3802
  %v4282 = vsel %vm28, %v3686, %v3804
  %v4283 = vsel %vm28, %v3687, %v3806
  %v4284 = vsel %vm28, %v3688, %v3808
  %v4285 = vsel %vm28, %v3689, %v3810
  %v4286 = vsel %vm28, %v3690, %v3812
  %v4287 = vsel %vm28, %v3691, %v3814
  %v4288 = vsel %vm28, %v3692, %v3816
  %v4289 = vsel %vm28, %v3693, %v3818
  %v4290 = vsel %vm28, %v3694, %v3820
  %v4291 = vsel %vm28, %v3695, %v3822
  %v4292 = vsel %vm28, %v3696, %v3824
  %v4293 = vsel %vm28, %v3697, %v3826
  %v4294 = vsel %vm28, %v3698, %v3828
  %v4295 = vsel %vm28, %v3699, %v3830
  %v4296 = vsel %vm28, %v3700, %v3832
  %v4297 = vsel %vm945, %v4273, %v3882
  %v4298 = vsel %vm945, %v4274, %v3884
  %v4299 = vsel %vm945, %v4275, %v3886
  %v4300 = vsel %vm945, %v4276, %v3888
  %v4301 = vsel %vm945, %v4277, %v3890
  %v4302 = vsel %vm945, %v4278, %v3892
  %v4303 = vsel %vm945, %v4279, %v3894
  %v4304 = vsel %vm945, %v4280, %v3896
  %v4305 = vsel %vm945, %v4281, %v3898
  %v4306 = vsel %vm945, %v4282, %v3900
  %v4307 = vsel %vm945, %v4283, %v3902
  %v4308 = vsel %vm945, %v4284, %v3904
  %v4309 = vsel %vm945, %v4285, %v3906
  %v4310 = vsel %vm945, %v4286, %v3908
  %v4311 = vsel %vm945, %v4287, %v3910
  %v4312 = vsel %vm945, %v4288, %v3912
  %v4313 = vsel %vm945, %v4289, %v3914
  %v4314 = vsel %vm945, %v4290, %v3916
  %v4315 = vsel %vm945, %v4291, %v3918
  %v4316 = vsel %vm945, %v4292, %v3920
  %v4317 = vsel %vm945, %v4293, %v3922
  %v4318 = vsel %vm945, %v4294, %v3924
  %v4319 = vsel %vm945, %v4295, %v3926
  %v4320 = vsel %vm945, %v4296, %v3928
  %v4321 = vsel %vm1935, %v4297, %v3978
  %v4322 = vsel %vm1935, %v4298, %v3980
  %v4323 = vsel %vm1935, %v4299, %v3982
  %v4324 = vsel %vm1935, %v4300, %v3984
  %v4325 = vsel %vm1935, %v4301, %v3986
  %v4326 = vsel %vm1935, %v4302, %v3988
  %v4327 = vsel %vm1935, %v4303, %v3990
  %v4328 = vsel %vm1935, %v4304, %v3992
  %v4329 = vsel %vm1935, %v4305, %v3994
  %v4330 = vsel %vm1935, %v4306, %v3996
  %v4331 = vsel %vm1935, %v4307, %v3998
  %v4332 = vsel %vm1935, %v4308, %v4000
  %v4333 = vsel %vm1935, %v4309, %v4002
  %v4334 = vsel %vm1935, %v4310, %v4004
  %v4335 = vsel %vm1935, %v4311, %v4006
  %v4336 = vsel %vm1935, %v4312, %v4008
  %v4337 = vsel %vm1935, %v4313, %v4010
  %v4338 = vsel %vm1935, %v4314, %v4012
  %v4339 = vsel %vm1935, %v4315, %v4014
  %v4340 = vsel %vm1935, %v4316, %v4016
  %v4341 = vsel %vm1935, %v4317, %v4018
  %v4342 = vsel %vm1935, %v4318, %v4020
  %v4343 = vsel %vm1935, %v4319, %v4022
  %v4344 = vsel %vm1935, %v4320, %v4024
  %v4345 = vsel %vm28, %v3703, %v4052
  %v4346 = vsel %vm28, %v3704, %v4054
  %v4347 = vsel %vm28, %v3705, %v4056
  %v4348 = vsel %vm28, %v3706, %v4058
  %v4349 = vsel %vm28, %v3707, %v4060
  %v4350 = vsel %vm28, %v3708, %v4062
  %v4351 = vsel %vm28, %v3709, %v4064
  %v4352 = vsel %vm28, %v3710, %v4066
  %v4353 = vsel %vm28, %v3711, %v4068
  %v4354 = vsel %vm28, %v3712, %v4070
  %v4355 = vsel %vm28, %v3713, %v4072
  %v4356 = vsel %vm28, %v3714, %v4074
  %v4357 = vsel %vm28, %v3715, %v4076
  %v4358 = vsel %vm28, %v3716, %v4078
  %v4359 = vsel %vm28, %v3717, %v4080
  %v4360 = vsel %vm28, %v3718, %v4082
  %v4361 = vsel %vm28, %v3719, %v4084
  %v4362 = vsel %vm28, %v3720, %v4086
  %v4363 = vsel %vm28, %v3721, %v4088
  %v4364 = vsel %vm28, %v3722, %v4090
  %v4365 = vsel %vm28, %v3723, %v4092
  %v4366 = vsel %vm28, %v3724, %v4094
  %v4367 = vsel %vm28, %v3751, %v4096
  %v4368 = vsel %vm28, %v3752, %v4098
  %v4369 = vsel %vm945, %v4345, %v4126
  %v4370 = vsel %vm945, %v4346, %v4128
  %v4371 = vsel %vm945, %v4347, %v4130
  %v4372 = vsel %vm945, %v4348, %v4132
  %v4373 = vsel %vm945, %v4349, %v4134
  %v4374 = vsel %vm945, %v4350, %v4136
  %v4375 = vsel %vm945, %v4351, %v4138
  %v4376 = vsel %vm945, %v4352, %v4140
  %v4377 = vsel %vm945, %v4353, %v4142
  %v4378 = vsel %vm945, %v4354, %v4144
  %v4379 = vsel %vm945, %v4355, %v4146
  %v4380 = vsel %vm945, %v4356, %v4148
  %v4381 = vsel %vm945, %v4357, %v4150
  %v4382 = vsel %vm945, %v4358, %v4152
  %v4383 = vsel %vm945, %v4359, %v4154
  %v4384 = vsel %vm945, %v4360, %v4156
  %v4385 = vsel %vm945, %v4361, %v4158
  %v4386 = vsel %vm945, %v4362, %v4160
  %v4387 = vsel %vm945, %v4363, %v4162
  %v4388 = vsel %vm945, %v4364, %v4164
  %v4389 = vsel %vm945, %v4365, %v4166
  %v4390 = vsel %vm945, %v4366, %v4168
  %v4391 = vsel %vm945, %v4367, %v4170
  %v4392 = vsel %vm945, %v4368, %v4172
  %v4393 = vsel %vm1935, %v4369, %v4202
  %v4394 = vsel %vm1935, %v4370, %v4204
  %v4395 = vsel %vm1935, %v4371, %v4206
  %v4396 = vsel %vm1935, %v4372, %v4208
  %v4397 = vsel %vm1935, %v4373, %v4210
  %v4398 = vsel %vm1935, %v4374, %v4212
  %v4399 = vsel %vm1935, %v4375, %v4214
  %v4400 = vsel %vm1935, %v4376, %v4216
  %v4401 = vsel %vm1935, %v4377, %v4218
  %v4402 = vsel %vm1935, %v4378, %v4220
  %v4403 = vsel %vm1935, %v4379, %v4222
  %v4404 = vsel %vm1935, %v4380, %v4224
  %v4405 = vsel %vm1935, %v4381, %v4226
  %v4406 = vsel %vm1935, %v4382, %v4228
  %v4407 = vsel %vm1935, %v4383, %v4230
  %v4408 = vsel %vm1935, %v4384, %v4232
  %v4409 = vsel %vm1935, %v4385, %v4234
  %v4410 = vsel %vm1935, %v4386, %v4236
  %v4411 = vsel %vm1935, %v4387, %v4238
  %v4412 = vsel %vm1935, %v4388, %v4240
  %v4413 = vsel %vm1935, %v4389, %v4242
  %v4414 = vsel %vm1935, %v4390, %v4244
  %v4415 = vsel %vm1935, %v4391, %v4246
  %v4416 = vsel %vm1935, %v4392, %v4248
  %v4417 = vsel %vm28, %v3729, 0
  %v4419 = vsel %vm28, %v3730, 0
  %v4421 = vsel %vm28, %v3731, 0
  %v4423 = vsel %vm28, %v3732, 0
  %v4425 = vsel %vm28, %v3733, 0
  %v4427 = vsel %vm28, %v3734, 0
  %v4429 = vsel %vm28, %v3735, 0
  %v4431 = vsel %vm28, %v3736, 0
  %v4433 = vsel %vm28, %v3737, 0
  %v4435 = vsel %vm28, %v3738, 0
  %v4437 = vsel %vm28, %v3739, 0
  %v4439 = vsel %vm28, %v3740, 0
  %v4441 = vsel %vm28, %v3741, 0
  %v4443 = vsel %vm28, %v3742, 0
  %v4445 = vsel %vm28, %v3743, 0
  %v4447 = vsel %vm28, %v3744, 0
  %v4449 = vsel %vm28, %v3745, 0
  %v4451 = vsel %vm28, %v3746, 0
  %v4453 = vsel %vm28, %v3747, 0
  %v4455 = vsel %vm28, %v3748, 0
  %v4457 = vsel %vm28, %v3753, 0
  %v4459 = vsel %vm28, %v3754, 0
  %v4462 = vsel %vm28, %v3759, 0
  %v4465 = vsel %vm28, %v3760, 0
  %4467 = vmatprep.subr.mxu0 0.0
  %4468 = vmatpush1.msra.mxu0 %v41
  %4469 = vmatprep.subr.mxu0 0.0
  %4470 = vmatpush1.msra.mxu0 %v42
  %4471 = vmatprep.subr.mxu0 0.0
  %4472 = vmatpush1.msra.mxu0 %v43
  %4473 = vmatprep.subr.mxu0 0.0
  %4474 = vmatpush1.msra.mxu0 %v44
  %4475 = vmatprep.subr.mxu0 0.0
  %4476 = vmatpush1.msra.mxu0 %v45
  %4477 = vmatprep.subr.mxu0 0.0
  %4478 = vmatpush1.msra.mxu0 %v46
  %4479 = vmatprep.subr.mxu0 0.0
  %4480 = vmatpush1.msra.mxu0 %v47
  %4481 = vmatprep.subr.mxu0 0.0
  %4482 = vmatpush1.msra.mxu0 %v48
  %4483 = vmatprep.subr.mxu0 0.0
  %4484 = vmatpush1.msra.mxu0 %v49
  %4485 = vmatprep.subr.mxu0 0.0
  %4486 = vmatpush1.msra.mxu0 %v50
  %4487 = vmatprep.subr.mxu0 0.0
  %4488 = vmatpush1.msra.mxu0 %v51
  %4489 = vmatprep.subr.mxu0 0.0
  %4490 = vmatpush1.msra.mxu0 %v52
  %4491 = vmatprep.subr.mxu0 0.0
  %4492 = vmatpush1.msra.mxu0 %v53
  %4493 = vmatprep.subr.mxu0 0.0
  %4494 = vmatpush1.msra.mxu0 %v54
  %4495 = vmatprep.subr.mxu0 0.0
  %4496 = vmatpush1.msra.mxu0 %v55
  %4497 = vmatprep.subr.mxu0 0.0
  %4498 = vmatpush1.msra.mxu0 %v56
  %4499 = vmatprep.subr.mxu0 0.0
  %4500 = vmatpush1.msra.mxu0 %v57
  %4501 = vmatprep.subr.mxu0 0.0
  %4502 = vmatpush1.msra.mxu0 %v58
  %4503 = vmatprep.subr.mxu0 0.0
  %4504 = vmatpush1.msra.mxu0 %v59
  %4505 = vmatprep.subr.mxu0 0.0
  %4506 = vmatpush1.msra.mxu0 %v60
  %4507 = vmatprep.subr.mxu0 0.0
  %4508 = vmatpush1.msra.mxu0 %v61
  %4509 = vmatprep.subr.mxu0 0.0
  %4510 = vmatpush1.msra.mxu0 %v62
  %4511 = vmatprep.subr.mxu0 0.0
  %4512 = vmatpush1.msra.mxu0 %v63
  %4513 = vmatprep.subr.mxu0 0.0
  %4514 = vmatpush1.msra.mxu0 %v64
  %4515 = vmatprep.subr.mxu0 0.0
  %4516 = vmatpush1.msra.mxu0 %v65
  %4517 = vmatprep.subr.mxu0 0.0
  %4518 = vmatpush1.msra.mxu0 %v66
  %4519 = vmatprep.subr.mxu0 0.0
  %4520 = vmatpush1.msra.mxu0 %v67
  %4521 = vmatprep.subr.mxu0 0.0
  %4522 = vmatpush1.msra.mxu0 %v68
  %4523 = vmatprep.subr.mxu0 0.0
  %4524 = vmatpush1.msra.mxu0 %v69
  %4525 = vmatprep.subr.mxu0 0.0
  %4526 = vmatpush1.msra.mxu0 %v70
  %4527 = vmatprep.subr.mxu0 0.0
  %4528 = vmatpush1.msra.mxu0 %v71
  %4529 = vmatprep.subr.mxu0 0.0
  %4530 = vmatpush1.msra.mxu0 %v72
  %4531 = vmatprep.mubr.f32.mxu0 %v4393
  %4532 = vmatmul.mubr.f32.gmra.mrb[0].mxu0 %v4321
  %v4533 = vpop.f32.mrb[0].mxu0
  %v4534 = vadd.f32 %v2036, %v4533
  %v4535 = vpop.f32.mrb[0].mxu0
  %4536 = vmatprep.mubr.f32.mxu0 %v4394
  %4537 = vmatmul.mubr.f32.gmra.mrb[0].mxu0 %v4322
  %v4538 = vpop.f32.mrb[0].mxu0
  %v4539 = vadd.f32 %v2036, %v4538
  %v4540 = vpop.f32.mrb[0].mxu0
  %4541 = vmatprep.mubr.f32.mxu0 %v4395
  %4542 = vmatmul.mubr.f32.gmra.mrb[0].mxu0 %v4323
  %v4543 = vpop.f32.mrb[0].mxu0
  %v4544 = vadd.f32 %v2036, %v4543
  %v4545 = vpop.f32.mrb[0].mxu0
  %4546 = vmatprep.mubr.f32.mxu0 %v4396
  %4547 = vmatmul.mubr.f32.gmra.mrb[0].mxu0 %v4324
  %v4548 = vpop.f32.mrb[0].mxu0
  %v4549 = vadd.f32 %v2036, %v4548
  %v4550 = vpop.f32.mrb[0].mxu0
  %4551 = vmatprep.mubr.f32.mxu0 %v4397
  %4552 = vmatmul.mubr.f32.gmra.mrb[0].mxu0 %v4325
  %v4553 = vpop.f32.mrb[0].mxu0
  %v4554 = vadd.f32 %v2036, %v4553
  %v4555 = vpop.f32.mrb[0].mxu0
  %4556 = vmatprep.mubr.f32.mxu0 %v4398
  %4557 = vmatmul.mubr.f32.gmra.mrb[0].mxu0 %v4326
  %v4558 = vpop.f32.mrb[0].mxu0
  %v4559 = vadd.f32 %v2036, %v4558
  %v4560 = vpop.f32.mrb[0].mxu0
  %4561 = vmatprep.mubr.f32.mxu0 %v4399
  %4562 = vmatmul.mubr.f32.gmra.mrb[0].mxu0 %v4327
  %v4563 = vpop.f32.mrb[0].mxu0
  %v4564 = vadd.f32 %v2036, %v4563
  %v4565 = vpop.f32.mrb[0].mxu0
  %4566 = vmatprep.mubr.f32.mxu0 %v4400
  %4567 = vmatmul.mubr.f32.gmra.mrb[0].mxu0 %v4328
  %v4568 = vpop.f32.mrb[0].mxu0
  %v4569 = vadd.f32 %v2036, %v4568
  %v4570 = vpop.f32.mrb[0].mxu0
  %4571 = vmatprep.mubr.f32.mxu0 %v4401
  %4572 = vmatmul.mubr.f32.gmra.mrb[0].mxu0 %v4329
  %v4573 = vpop.f32.mrb[0].mxu0
  %v4574 = vadd.f32 %v2036, %v4573
  %v4575 = vpop.f32.mrb[0].mxu0
  %4576 = vmatprep.mubr.f32.mxu0 %v4402
  %4577 = vmatmul.mubr.f32.gmra.mrb[0].mxu0 %v4330
  %v4578 = vpop.f32.mrb[0].mxu0
  %v4579 = vadd.f32 %v2036, %v4578
  %v4580 = vpop.f32.mrb[0].mxu0
  %4581 = vmatprep.mubr.f32.mxu0 %v4403
  %4582 = vmatmul.mubr.f32.gmra.mrb[0].mxu0 %v4331
  %v4583 = vpop.f32.mrb[0].mxu0
  %v4584 = vadd.f32 %v2036, %v4583
  %v4585 = vpop.f32.mrb[0].mxu0
  %4586 = vmatprep.mubr.f32.mxu0 %v4404
  %4587 = vmatmul.mubr.f32.gmra.mrb[0].mxu0 %v4332
  %v4588 = vpop.f32.mrb[0].mxu0
  %v4589 = vadd.f32 %v2036, %v4588
  %v4590 = vpop.f32.mrb[0].mxu0
  %4591 = vmatprep.mubr.f32.mxu0 %v4405
  %4592 = vmatmul.mubr.f32.gmra.mrb[0].mxu0 %v4333
  %v4593 = vpop.f32.mrb[0].mxu0
  %v4594 = vadd.f32 %v2036, %v4593
  %v4595 = vpop.f32.mrb[0].mxu0
  %4596 = vmatprep.mubr.f32.mxu0 %v4406
  %4597 = vmatmul.mubr.f32.gmra.mrb[0].mxu0 %v4334
  %v4598 = vpop.f32.mrb[0].mxu0
  %v4599 = vadd.f32 %v2036, %v4598
  %v4600 = vpop.f32.mrb[0].mxu0
  %4601 = vmatprep.mubr.f32.mxu0 %v4407
  %4602 = vmatmul.mubr.f32.gmra.mrb[0].mxu0 %v4335
  %v4603 = vpop.f32.mrb[0].mxu0
  %v4604 = vadd.f32 %v2036, %v4603
  %v4605 = vpop.f32.mrb[0].mxu0
  %4606 = vmatprep.mubr.f32.mxu0 %v4408
  %4607 = vmatmul.mubr.f32.gmra.mrb[0].mxu0 %v4336
  %v4608 = vpop.f32.mrb[0].mxu0
  %v4609 = vadd.f32 %v2036, %v4608
  %v4610 = vpop.f32.mrb[0].mxu0
  %4611 = vmatprep.mubr.f32.mxu0 %v4409
  %4612 = vmatmul.mubr.f32.gmra.mrb[0].mxu0 %v4337
  %v4613 = vpop.f32.mrb[0].mxu0
  %v4614 = vadd.f32 %v2036, %v4613
  %v4615 = vpop.f32.mrb[0].mxu0
  %4616 = vmatprep.mubr.f32.mxu0 %v4410
  %4617 = vmatmul.mubr.f32.gmra.mrb[0].mxu0 %v4338
  %v4618 = vpop.f32.mrb[0].mxu0
  %v4619 = vadd.f32 %v2036, %v4618
  %v4620 = vpop.f32.mrb[0].mxu0
  %4621 = vmatprep.mubr.f32.mxu0 %v4411
  %4622 = vmatmul.mubr.f32.gmra.mrb[0].mxu0 %v4339
  %v4623 = vpop.f32.mrb[0].mxu0
  %v4624 = vadd.f32 %v2036, %v4623
  %v4625 = vpop.f32.mrb[0].mxu0
  %4626 = vmatprep.mubr.f32.mxu0 %v4412
  %4627 = vmatmul.mubr.f32.gmra.mrb[0].mxu0 %v4340
  %v4628 = vpop.f32.mrb[0].mxu0
  %v4629 = vadd.f32 %v2036, %v4628
  %v4630 = vpop.f32.mrb[0].mxu0
  %4631 = vmatprep.mubr.f32.mxu0 %v4413
  %4632 = vmatmul.mubr.f32.gmra.mrb[0].mxu0 %v4341
  %v4633 = vpop.f32.mrb[0].mxu0
  %v4634 = vadd.f32 %v2036, %v4633
  %v4635 = vpop.f32.mrb[0].mxu0
  %4636 = vmatprep.mubr.f32.mxu0 %v4414
  %4637 = vmatmul.mubr.f32.gmra.mrb[0].mxu0 %v4342
  %v4638 = vpop.f32.mrb[0].mxu0
  %v4639 = vadd.f32 %v2036, %v4638
  %v4640 = vpop.f32.mrb[0].mxu0
  %4641 = vmatprep.mubr.f32.mxu0 %v4415
  %4642 = vmatmul.mubr.f32.gmra.mrb[0].mxu0 %v4343
  %v4643 = vpop.f32.mrb[0].mxu0
  %v4644 = vadd.f32 %v2036, %v4643
  %v4645 = vpop.f32.mrb[0].mxu0
  %4646 = vmatprep.mubr.f32.mxu0 %v4416
  %4647 = vmatmul.mubr.f32.gmra.mrb[0].mxu0 %v4344
  %v4648 = vpop.f32.mrb[0].mxu0
  %v4649 = vadd.f32 %v2036, %v4648
  %v4650 = vpop.f32.mrb[0].mxu0
  %4651 = vdwg.mxu0
  %4652 = vmatprep.subr.mxu0 0.0
  %4653 = vmatpush1.msra.mxu0 %v73
  %4654 = vmatprep.subr.mxu0 0.0
  %4655 = vmatpush1.msra.mxu0 %v74
  %4656 = vmatprep.subr.mxu0 0.0
  %4657 = vmatpush1.msra.mxu0 %v75
  %4658 = vmatprep.subr.mxu0 0.0
  %4659 = vmatpush1.msra.mxu0 %v76
  %4660 = vmatprep.subr.mxu0 0.0
  %4661 = vmatpush1.msra.mxu0 0.0
  %4662 = vmatprep.subr.mxu0 0.0
  %4663 = vmatpush1.msra.mxu0 0.0
  %4664 = vmatprep.subr.mxu0 0.0
  %4665 = vmatpush1.msra.mxu0 0.0
  %4666 = vmatprep.subr.mxu0 0.0
  %4667 = vmatpush1.msra.mxu0 0.0
  %4668 = vmatprep.subr.mxu0 0.0
  %4669 = vmatpush1.msra.mxu0 0.0
  %4670 = vmatprep.subr.mxu0 0.0
  %4671 = vmatpush1.msra.mxu0 0.0
  %4672 = vmatprep.subr.mxu0 0.0
  %4673 = vmatpush1.msra.mxu0 0.0
  %4674 = vmatprep.subr.mxu0 0.0
  %4675 = vmatpush1.msra.mxu0 0.0
  %4676 = vmatprep.subr.mxu0 0.0
  %4677 = vmatpush1.msra.mxu0 0.0
  %4678 = vmatprep.subr.mxu0 0.0
  %4679 = vmatpush1.msra.mxu0 0.0
  %4680 = vmatprep.subr.mxu0 0.0
  %4681 = vmatpush1.msra.mxu0 0.0
  %4682 = vmatprep.subr.mxu0 0.0
  %4683 = vmatpush1.msra.mxu0 0.0
  %4684 = vmatprep.subr.mxu0 0.0
  %4685 = vmatpush1.msra.mxu0 0.0
  %4686 = vmatprep.subr.mxu0 0.0
  %4687 = vmatpush1.msra.mxu0 0.0
  %4688 = vmatprep.subr.mxu0 0.0
  %4689 = vmatpush1.msra.mxu0 0.0
  %4690 = vmatprep.subr.mxu0 0.0
  %4691 = vmatpush1.msra.mxu0 0.0
  %4692 = vmatprep.subr.mxu0 0.0
  %4693 = vmatpush1.msra.mxu0 0.0
  %4694 = vmatprep.subr.mxu0 0.0
  %4695 = vmatpush1.msra.mxu0 0.0
  %4696 = vmatprep.subr.mxu0 0.0
  %4697 = vmatpush1.msra.mxu0 0.0
  %4698 = vmatprep.subr.mxu0 0.0
  %4699 = vmatpush1.msra.mxu0 0.0
  %4700 = vmatprep.subr.mxu0 0.0
  %4701 = vmatpush1.msra.mxu0 0.0
  %4702 = vmatprep.subr.mxu0 0.0
  %4703 = vmatpush1.msra.mxu0 0.0
  %4704 = vmatprep.subr.mxu0 0.0
  %4705 = vmatpush1.msra.mxu0 0.0
  %4706 = vmatprep.subr.mxu0 0.0
  %4707 = vmatpush1.msra.mxu0 0.0
  %4708 = vmatprep.subr.mxu0 0.0
  %4709 = vmatpush1.msra.mxu0 0.0
  %4710 = vmatprep.subr.mxu0 0.0
  %4711 = vmatpush1.msra.mxu0 0.0
  %4712 = vmatprep.subr.mxu0 0.0
  %4713 = vmatpush1.msra.mxu0 0.0
  %4714 = vmatprep.subr.mxu0 0.0
  %4715 = vmatpush1.msra.mxu0 0.0
  %4716 = vmatprep.mubr.f32.mxu0 0.0
  %4717 = vmatmul.mubr.f32.gmra.mrb[0].mxu0 %v4417
  %v4718 = vpop.f32.mrb[0].mxu0
  %v4719 = vadd.f32 %v4534, %v4718
  %v4720 = vpop.f32.mrb[0].mxu0
  %4721 = vmatprep.mubr.f32.mxu0 0.0
  %4722 = vmatmul.mubr.f32.gmra.mrb[0].mxu0 %v4419
  %v4723 = vpop.f32.mrb[0].mxu0
  %v4724 = vadd.f32 %v4539, %v4723
  %v4725 = vpop.f32.mrb[0].mxu0
  %4726 = vmatprep.mubr.f32.mxu0 0.0
  %4727 = vmatmul.mubr.f32.gmra.mrb[0].mxu0 %v4421
  %v4728 = vpop.f32.mrb[0].mxu0
  %v4729 = vadd.f32 %v4544, %v4728
  %v4730 = vpop.f32.mrb[0].mxu0
  %4731 = vmatprep.mubr.f32.mxu0 0.0
  %4732 = vmatmul.mubr.f32.gmra.mrb[0].mxu0 %v4423
  %v4733 = vpop.f32.mrb[0].mxu0
  %v4734 = vadd.f32 %v4549, %v4733
  %v4735 = vpop.f32.mrb[0].mxu0
  %4736 = vmatprep.mubr.f32.mxu0 0.0
  %4737 = vmatmul.mubr.f32.gmra.mrb[0].mxu0 %v4425
  %v4738 = vpop.f32.mrb[0].mxu0
  %v4739 = vadd.f32 %v4554, %v4738
  %v4740 = vpop.f32.mrb[0].mxu0
  %4741 = vmatprep.mubr.f32.mxu0 0.0
  %4742 = vmatmul.mubr.f32.gmra.mrb[0].mxu0 %v4427
  %v4743 = vpop.f32.mrb[0].mxu0
  %v4744 = vadd.f32 %v4559, %v4743
  %v4745 = vpop.f32.mrb[0].mxu0
  %4746 = vmatprep.mubr.f32.mxu0 0.0
  %4747 = vmatmul.mubr.f32.gmra.mrb[0].mxu0 %v4429
  %v4748 = vpop.f32.mrb[0].mxu0
  %v4749 = vadd.f32 %v4564, %v4748
  %v4750 = vpop.f32.mrb[0].mxu0
  %4751 = vmatprep.mubr.f32.mxu0 0.0
  %4752 = vmatmul.mubr.f32.gmra.mrb[0].mxu0 %v4431
  %v4753 = vpop.f32.mrb[0].mxu0
  %v4754 = vadd.f32 %v4569, %v4753
  %v4755 = vpop.f32.mrb[0].mxu0
  %4756 = vmatprep.mubr.f32.mxu0 0.0
  %4757 = vmatmul.mubr.f32.gmra.mrb[0].mxu0 %v4433
  %v4758 = vpop.f32.mrb[0].mxu0
  %v4759 = vadd.f32 %v4574, %v4758
  %v4760 = vpop.f32.mrb[0].mxu0
  %4761 = vmatprep.mubr.f32.mxu0 0.0
  %4762 = vmatmul.mubr.f32.gmra.mrb[0].mxu0 %v4435
  %v4763 = vpop.f32.mrb[0].mxu0
  %v4764 = vadd.f32 %v4579, %v4763
  %v4765 = vpop.f32.mrb[0].mxu0
  %4766 = vmatprep.mubr.f32.mxu0 0.0
  %4767 = vmatmul.mubr.f32.gmra.mrb[0].mxu0 %v4437
  %v4768 = vpop.f32.mrb[0].mxu0
  %v4769 = vadd.f32 %v4584, %v4768
  %v4770 = vpop.f32.mrb[0].mxu0
  %4771 = vmatprep.mubr.f32.mxu0 0.0
  %4772 = vmatmul.mubr.f32.gmra.mrb[0].mxu0 %v4439
  %v4773 = vpop.f32.mrb[0].mxu0
  %v4774 = vadd.f32 %v4589, %v4773
  %v4775 = vpop.f32.mrb[0].mxu0
  %4776 = vmatprep.mubr.f32.mxu0 0.0
  %4777 = vmatmul.mubr.f32.gmra.mrb[0].mxu0 %v4441
  %v4778 = vpop.f32.mrb[0].mxu0
  %v4779 = vadd.f32 %v4594, %v4778
  %v4780 = vpop.f32.mrb[0].mxu0
  %4781 = vmatprep.mubr.f32.mxu0 0.0
  %4782 = vmatmul.mubr.f32.gmra.mrb[0].mxu0 %v4443
  %v4783 = vpop.f32.mrb[0].mxu0
  %v4784 = vadd.f32 %v4599, %v4783
  %v4785 = vpop.f32.mrb[0].mxu0
  %4786 = vmatprep.mubr.f32.mxu0 0.0
  %4787 = vmatmul.mubr.f32.gmra.mrb[0].mxu0 %v4445
  %v4788 = vpop.f32.mrb[0].mxu0
  %v4789 = vadd.f32 %v4604, %v4788
  %v4790 = vpop.f32.mrb[0].mxu0
  %4791 = vmatprep.mubr.f32.mxu0 0.0
  %4792 = vmatmul.mubr.f32.gmra.mrb[0].mxu0 %v4447
  %v4793 = vpop.f32.mrb[0].mxu0
  %v4794 = vadd.f32 %v4609, %v4793
  %v4795 = vpop.f32.mrb[0].mxu0
  %4796 = vmatprep.mubr.f32.mxu0 0.0
  %4797 = vmatmul.mubr.f32.gmra.mrb[0].mxu0 %v4449
  %v4798 = vpop.f32.mrb[0].mxu0
  %v4799 = vadd.f32 %v4614, %v4798
  %v4800 = vpop.f32.mrb[0].mxu0
  %4801 = vmatprep.mubr.f32.mxu0 0.0
  %4802 = vmatmul.mubr.f32.gmra.mrb[0].mxu0 %v4451
  %v4803 = vpop.f32.mrb[0].mxu0
  %v4804 = vadd.f32 %v4619, %v4803
  %v4805 = vpop.f32.mrb[0].mxu0
  %4806 = vmatprep.mubr.f32.mxu0 0.0
  %4807 = vmatmul.mubr.f32.gmra.mrb[0].mxu0 %v4453
  %v4808 = vpop.f32.mrb[0].mxu0
  %v4809 = vadd.f32 %v4624, %v4808
  %v4810 = vpop.f32.mrb[0].mxu0
  %4811 = vmatprep.mubr.f32.mxu0 0.0
  %4812 = vmatmul.mubr.f32.gmra.mrb[0].mxu0 %v4455
  %v4813 = vpop.f32.mrb[0].mxu0
  %v4814 = vadd.f32 %v4629, %v4813
  %v4815 = vpop.f32.mrb[0].mxu0
  %4816 = vmatprep.mubr.f32.mxu0 0.0
  %4817 = vmatmul.mubr.f32.gmra.mrb[0].mxu0 %v4457
  %v4818 = vpop.f32.mrb[0].mxu0
  %v4819 = vadd.f32 %v4634, %v4818
  %v4820 = vpop.f32.mrb[0].mxu0
  %4821 = vmatprep.mubr.f32.mxu0 0.0
  %4822 = vmatmul.mubr.f32.gmra.mrb[0].mxu0 %v4459
  %v4823 = vpop.f32.mrb[0].mxu0
  %v4824 = vadd.f32 %v4639, %v4823
  %v4825 = vpop.f32.mrb[0].mxu0
  %4826 = vmatprep.mubr.f32.mxu0 0.0
  %4827 = vmatmul.mubr.f32.gmra.mrb[0].mxu0 %v4462
  %v4828 = vpop.f32.mrb[0].mxu0
  %v4829 = vadd.f32 %v4644, %v4828
  %v4830 = vpop.f32.mrb[0].mxu0
  %4831 = vmatprep.mubr.f32.mxu0 0.0
  %4832 = vmatmul.mubr.f32.gmra.mrb[0].mxu0 %v4465
  %v4833 = vpop.f32.mrb[0].mxu0
  %v4834 = vadd.f32 %v4649, %v4833
  %v4835 = vpop.f32.mrb[0].mxu0
  %4836 = vdwg.mxu0
  %s4837 = scalar_lea.vmem %s7, 192
  %4838 = vst.msk [vmem:[%s4837] sm:$0xff] %vm26, %v4719
  %4839 = vst.msk [vmem:[%s4837 + $0x8] sm:$0xff] %vm26, %v4724
  %4840 = vst.msk [vmem:[%s4837 + $0x10] sm:$0xff] %vm26, %v4729
  %4841 = vst.msk [vmem:[%s4837 + $0x18] sm:$0xff] %vm26, %v4734
  %4842 = vst.msk [vmem:[%s4837 + $0x20] sm:$0xff] %vm26, %v4739
  %4843 = vst.msk [vmem:[%s4837 + $0x28] sm:$0xff] %vm26, %v4744
  %4844 = vst.msk [vmem:[%s4837 + $0x30] sm:$0xff] %vm26, %v4749
  %4845 = vst.msk [vmem:[%s4837 + $0x38] sm:$0xff] %vm26, %v4754
  %4846 = vst.msk [vmem:[%s4837 + $0x40] sm:$0xff] %vm26, %v4759
  %4847 = vst.msk [vmem:[%s4837 + $0x48] sm:$0xff] %vm26, %v4764
  %4848 = vst.msk [vmem:[%s4837 + $0x50] sm:$0xff] %vm26, %v4769
  %4849 = vst.msk [vmem:[%s4837 + $0x58] sm:$0xff] %vm26, %v4774
  %4850 = vst.msk [vmem:[%s4837 + $0x60] sm:$0xff] %vm26, %v4779
  %4851 = vst.msk [vmem:[%s4837 + $0x68] sm:$0xff] %vm26, %v4784
  %4852 = vst.msk [vmem:[%s4837 + $0x70] sm:$0xff] %vm26, %v4789
  %4853 = vst.msk [vmem:[%s4837 + $0x78] sm:$0xff] %vm26, %v4794
  %4854 = vst.msk [vmem:[%s4837 + $0x80] sm:$0xff] %vm26, %v4799
  %4855 = vst.msk [vmem:[%s4837 + $0x88] sm:$0xff] %vm26, %v4804
  %4856 = vst.msk [vmem:[%s4837 + $0x90] sm:$0xff] %vm26, %v4809
  %4857 = vst.msk [vmem:[%s4837 + $0x98] sm:$0xff] %vm26, %v4814
  %4858 = vst.msk [vmem:[%s4837 + $0xa0] sm:$0xff] %vm26, %v4819
  %4859 = vst.msk [vmem:[%s4837 + $0xa8] sm:$0xff] %vm26, %v4824
  %4860 = vst.msk [vmem:[%s4837 + $0xb0] sm:$0xff] %vm26, %v4829
  %4861 = vst.msk [vmem:[%s4837 + $0xb8] sm:$0xff] %vm26, %v4834
  // Predicated region
  $region30: #{forward.1} parent=0 // pred_check
    _
  $region31: #{forward.1} parent=0 // pred_check_branch
    %4863 = sbr.rel (0) target = $region33
  $region32: #{forward.1} parent=0 // pred_region
    _
  $region33: #{forward.1} parent=0 // pred_fallthru
    _
  // Predicated region
  $region34: #{forward.1} parent=0 // pred_check
    _
  $region35: #{forward.1} parent=0 // pred_check_branch
    %4865 = sbr.rel (0) target = $region37
  $region36: #{forward.1} parent=0 // pred_region
    _
  $region37: #{forward.1} parent=0 // pred_fallthru
    _

</llo_original>
